<compile_context>
chip_gen: v6e
topology: v6e:2x2x1
jax: 0.10.0
libtpu: 0.0.40
codegen_flags: <defaults>
</compile_context>

<pallas_src>
import functools

import jax
import jax.numpy as jnp
import numpy as np
from jax.experimental import pallas as pl
from jax.experimental.pallas import tpu as pltpu

# ----------------------------- config ---------------------------------------
VOCAB = 100
MAX_POS = 16
HIDDEN = 32
N_HEADS = 4
HEAD_DIM = HIDDEN // N_HEADS
FFN = 64
N_LAYERS = 2
LN_EPS = 1e-12


# ------------------------- kernel helpers -----------------------------------
def _layernorm(x, g, b, eps=LN_EPS):
    mu = jnp.mean(x, axis=-1, keepdims=True)
    var = jnp.mean((x - mu) ** 2, axis=-1, keepdims=True)
    return (x - mu) * jax.lax.rsqrt(var + eps) * g + b


# Packed H-wide vector slab layout (vecs_ref):
#   [0] emb_ln_g   [1] emb_ln_b
#   per layer l, base = 2 + 6*l:
#   [+0] bo  [+1] ln1_g  [+2] ln1_b  [+3] b2  [+4] ln2_g  [+5] ln2_b
def _fused_encoder_kernel(x_ref, m_ref, wqkv_ref, bqkv_ref, wo_ref,
                          w1_ref, w2_ref, b1_ref, vecs_ref, o_ref,
                          *, n_layers, n_heads, head_dim, batch, seq):
    hidden = n_heads * head_dim
    rows = batch * seq
    scale = float(1.0 / np.sqrt(head_dim))

    # embeddings -> (B*S, H); embedding LayerNorm
    x = _layernorm(x_ref[0].reshape(rows, hidden), vecs_ref[0, 0], vecs_ref[0, 1])
    mask_add = m_ref[0]                                    # (B, 1, S) additive

    for l in range(n_layers):
        vbase = 2 + 6 * l

        # ---- attention: ONE fused QKV dot (N = 3H lanes) + ONE Wo dot ----
        qkv = jnp.dot(x, wqkv_ref[0, l],
                      preferred_element_type=jnp.float32) + bqkv_ref[0, l]
        qkv3 = qkv.reshape(batch, seq, 3 * hidden)         # single reshape
        head_outs = []
        for h in range(n_heads):
            off = h * head_dim                              # static lane slices
            q_h = qkv3[:, :, off:off + head_dim]
            k_h = qkv3[:, :, hidden + off:hidden + off + head_dim]
            v_h = qkv3[:, :, 2 * hidden + off:2 * hidden + off + head_dim]
            s = jnp.einsum("bqd,bkd->bqk", q_h, k_h,
                           preferred_element_type=jnp.float32) * scale
            s = s + mask_add
            p = jnp.exp(s - jnp.max(s, axis=-1, keepdims=True))
            p = p * pl.reciprocal(jnp.sum(p, axis=-1, keepdims=True), approx=True)
            head_outs.append(jnp.einsum("bqk,bkd->bqd", p, v_h,
                                        preferred_element_type=jnp.float32))
        attn = jnp.concatenate(head_outs, axis=-1).reshape(rows, hidden)
        attn = jnp.dot(attn, wo_ref[0, l],
                       preferred_element_type=jnp.float32) + vecs_ref[0, vbase + 0]
        h1 = _layernorm(x + attn, vecs_ref[0, vbase + 1], vecs_ref[0, vbase + 2])

        # ---- FFN ----
        ff = jnp.dot(h1, w1_ref[0, l],
                     preferred_element_type=jnp.float32) + b1_ref[0, l]
        ff = jax.nn.gelu(ff, approximate=True)
        ff = jnp.dot(ff, w2_ref[0, l],
                     preferred_element_type=jnp.float32) + vecs_ref[0, vbase + 3]
        x = _layernorm(h1 + ff, vecs_ref[0, vbase + 4], vecs_ref[0, vbase + 5])

    # [CLS] pooling inside the kernel: only (B, H) leaves the kernel.
    o_ref[0] = x.reshape(batch, seq, hidden)[:, 0, :]


# ------------------------- pallas wrapper ------------------------------------
def _grid_semantics():
    """CORE_PARALLEL on v7x (2 TCs) so the two encoders use both cores;
    plain "parallel" elsewhere (v5e/v6e have a single TensorCore)."""
    kind = ""
    try:
        kind = jax.devices()[0].device_kind.lower()
    except Exception:
        pass
    if "v7" in kind:
        return (pltpu.CORE_PARALLEL,)
    return ("parallel",)


def _cost_estimate(args, out_shape, *, n_layers, n_heads, head_dim,
                   batch, seq, hidden, ffn):
    rows = batch * seq
    per_layer = (2 * rows * hidden * 3 * hidden                      # fused QKV
                 + 2 * 2 * batch * n_heads * seq * seq * head_dim    # scores + PV
                 + 2 * rows * hidden * hidden                        # Wo
                 + 2 * 2 * rows * hidden * ffn)                      # FFN up+down
    flops = 2 * n_layers * per_layer                                 # two encoders
    transcendentals = 2 * n_layers * (batch * n_heads * seq * seq + rows * ffn)
    bytes_accessed = sum(int(np.prod(a.shape)) * np.dtype(a.dtype).itemsize
                         for a in args)
    bytes_accessed += int(np.prod(out_shape.shape)) * np.dtype(out_shape.dtype).itemsize
    return pl.CostEstimate(flops=int(flops), transcendentals=int(transcendentals),
                           bytes_accessed=int(bytes_accessed))


def fused_dual_encoder(emb, mask_add, packed, *, n_layers, n_heads, batch, seq):
    hidden = emb.shape[-1]
    head_dim = hidden // n_heads
    ffn = packed["w1"].shape[-1]

    def full(a):
        nd = a.ndim
        return pl.BlockSpec((1,) + a.shape[1:], lambda e, nd=nd: (e,) + (0,) * (nd - 1))

    args = (emb, mask_add, packed["wqkv"], packed["bqkv"], packed["wo"],
            packed["w1"], packed["w2"], packed["b1"], packed["vecs_h"])
    out_shape = jax.ShapeDtypeStruct((2, batch, hidden), jnp.float32)
    kernel = functools.partial(_fused_encoder_kernel, n_layers=n_layers,
                               n_heads=n_heads, head_dim=head_dim,
                               batch=batch, seq=seq)
    return pl.pallas_call(
        kernel,
        out_shape=out_shape,
        grid=(2,),                                   # one step per encoder
        in_specs=[full(a) for a in args],
        out_specs=pl.BlockSpec((1, batch, hidden), lambda e: (e, 0, 0)),
        compiler_params=pltpu.CompilerParams(dimension_semantics=_grid_semantics()),
        cost_estimate=_cost_estimate(args, out_shape, n_layers=n_layers,
                                     n_heads=n_heads, head_dim=head_dim,
                                     batch=batch, seq=seq, hidden=hidden, ffn=ffn),
    )(*args)


# ----------------------- parameter construction -----------------------------
def init_encoder_params(key, vocab, max_pos, hidden, ffn, n_layers):
    keys = jax.random.split(key, 3 + n_layers)
    scale = 0.02
    params = {
        "tok_emb": scale * jax.random.normal(keys[0], (vocab, hidden), jnp.float32),
        "pos_emb": scale * jax.random.normal(keys[1], (max_pos, hidden), jnp.float32),
        "type_emb": scale * jax.random.normal(keys[2], (2, hidden), jnp.float32),
        "emb_ln_g": jnp.ones((1, hidden), jnp.float32),
        "emb_ln_b": jnp.zeros((1, hidden), jnp.float32),
        "layers": [],
    }
    for l in range(n_layers):
        lk = jax.random.split(keys[3 + l], 6)
        layer = {
            "wq": scale * jax.random.normal(lk[0], (hidden, hidden), jnp.float32),
            "bq": jnp.zeros((1, hidden), jnp.float32),
            "wk": scale * jax.random.normal(lk[1], (hidden, hidden), jnp.float32),
            "bk": jnp.zeros((1, hidden), jnp.float32),
            "wv": scale * jax.random.normal(lk[2], (hidden, hidden), jnp.float32),
            "bv": jnp.zeros((1, hidden), jnp.float32),
            "wo": scale * jax.random.normal(lk[3], (hidden, hidden), jnp.float32),
            "bo": jnp.zeros((1, hidden), jnp.float32),
            "ln1_g": jnp.ones((1, hidden), jnp.float32),
            "ln1_b": jnp.zeros((1, hidden), jnp.float32),
            "w1": scale * jax.random.normal(lk[4], (hidden, ffn), jnp.float32),
            "b1": jnp.zeros((1, ffn), jnp.float32),
            "w2": scale * jax.random.normal(lk[5], (ffn, hidden), jnp.float32),
            "b2": jnp.zeros((1, hidden), jnp.float32),
            "ln2_g": jnp.ones((1, hidden), jnp.float32),
            "ln2_b": jnp.zeros((1, hidden), jnp.float32),
        }
        params["layers"].append(layer)
    return params


def pack_encoder_params(params, n_heads=N_HEADS):
    """Fuse QKV weights/biases per layer and pack all small vectors into slabs.
    Runs ONCE at init time (hoisted out of the jitted forward path)."""
    H = params["layers"][0]["wq"].shape[0]
    ffn = params["layers"][0]["w1"].shape[1]
    wqkv, bqkv, wo, w1, w2, b1 = [], [], [], [], [], []
    vecs_h = [params["emb_ln_g"].reshape(1, H), params["emb_ln_b"].reshape(1, H)]
    for lp in params["layers"]:
        wqkv.append(jnp.concatenate([lp["wq"], lp["wk"], lp["wv"]], axis=1))   # (H, 3H)
        bqkv.append(jnp.concatenate([lp["bq"].reshape(1, H),
                                     lp["bk"].reshape(1, H),
                                     lp["bv"].reshape(1, H)], axis=1))         # (1, 3H)
        wo.append(lp["wo"])                                                    # (H, H)
        w1.append(lp["w1"])                                                    # (H, FFN)
        w2.append(lp["w2"])                                                    # (FFN, H)
        b1.append(lp["b1"].reshape(1, ffn))                                    # (1, FFN)
        vecs_h += [lp["bo"].reshape(1, H), lp["ln1_g"].reshape(1, H),
                   lp["ln1_b"].reshape(1, H), lp["b2"].reshape(1, H),
                   lp["ln2_g"].reshape(1, H), lp["ln2_b"].reshape(1, H)]
    # TODO(synk): cast weight slabs to bf16 (keep f32 accumulation) before scaling up.
    return {
        "wqkv": jnp.stack(wqkv),      # (L, H, 3H)
        "bqkv": jnp.stack(bqkv),      # (L, 1, 3H)
        "wo": jnp.stack(wo),          # (L, H, H)
        "w1": jnp.stack(w1),          # (L, H, FFN)
        "w2": jnp.stack(w2),          # (L, FFN, H)
        "b1": jnp.stack(b1),          # (L, 1, FFN)
        "vecs_h": jnp.stack(vecs_h),  # (2+6L, 1, H)
    }


def pack_dual_params(q_params, c_params, n_heads=N_HEADS):
    qp = pack_encoder_params(q_params, n_heads)
    cp = pack_encoder_params(c_params, n_heads)
    return jax.tree_util.tree_map(lambda a, b: jnp.stack([a, b]), qp, cp)


def prepare_dual_encoder(q_params, c_params, n_heads=N_HEADS):
    """One-time packing + embedding-table bundling (call outside jit)."""
    return {
        "packed": pack_dual_params(q_params, c_params, n_heads),
        "q_emb": {"tok": q_params["tok_emb"], "pos": q_params["pos_emb"],
                  "typ": q_params["type_emb"]},
        "c_emb": {"tok": c_params["tok_emb"], "pos": c_params["pos_emb"],
                  "typ": c_params["type_emb"]},
    }


# --------------------------- model forward ------------------------------------
def _embeddings(tables, input_ids, seq_pad):
    # Token / position / type embedding gather stays in plain JAX (glue).
    B, S = input_ids.shape
    emb = (tables["tok"][input_ids]
           + tables["pos"][:S][None, :, :]
           + tables["typ"][0][None, None, :])
    if S < seq_pad:
        emb = jnp.pad(emb, ((0, 0), (0, seq_pad - S), (0, 0)))
    return emb


def dpr_combined_forward(prepared,
                         question_input_ids, question_attention_mask,
                         context_input_ids, context_attention_mask):
    B, QS = question_input_ids.shape
    _, CS = context_input_ids.shape
    S = ((max(QS, CS) + 7) // 8) * 8                 # keep sublane-aligned seq

    q_emb = _embeddings(prepared["q_emb"], question_input_ids, S)
    c_emb = _embeddings(prepared["c_emb"], context_input_ids, S)
    emb = jnp.stack([q_emb, c_emb]).astype(jnp.float32)          # (2, B, S, H)

    qm = jnp.pad(question_attention_mask.astype(jnp.float32), ((0, 0), (0, S - QS)))
    cm = jnp.pad(context_attention_mask.astype(jnp.float32), ((0, 0), (0, S - CS)))
    mask_add = ((1.0 - jnp.stack([qm, cm])) * -1e9).reshape(2, B, 1, S)

    out = fused_dual_encoder(emb, mask_add, prepared["packed"],
                             n_layers=N_LAYERS, n_heads=N_HEADS, batch=B, seq=S)
    # DPR pooler_output = hidden state of the [CLS] (first) token
    return out[0], out[1]


# --------------------------- pure-JAX reference -------------------------------
def _encode_ref(params, input_ids, attention_mask, num_heads=N_HEADS):
    B, S = input_ids.shape
    H = HIDDEN
    dh = H // num_heads
    x = (params["tok_emb"][input_ids]
         + params["pos_emb"][:S][None, :, :]
         + params["type_emb"][0][None, None, :])
    x = _layernorm(x, params["emb_ln_g"], params["emb_ln_b"])
    mask_add = ((1.0 - attention_mask.astype(jnp.float32)) * -1e9)[:, None, None, :]
    for lp in params["layers"]:
        q = x @ lp["wq"] + lp["bq"]
        k = x @ lp["wk"] + lp["bk"]
        v = x @ lp["wv"] + lp["bv"]
        q = q.reshape(B, S, num_heads, dh).transpose(0, 2, 1, 3)
        k = k.reshape(B, S, num_heads, dh).transpose(0, 2, 1, 3)
        v = v.reshape(B, S, num_heads, dh).transpose(0, 2, 1, 3)
        s = jnp.einsum("bhqd,bhkd->bhqk", q, k) / np.sqrt(dh) + mask_add
        p = jax.nn.softmax(s, axis=-1)
        a = jnp.einsum("bhqk,bhkd->bhqd", p, v).transpose(0, 2, 1, 3).reshape(B, S, H)
        a = a @ lp["wo"] + lp["bo"]
        h1 = _layernorm(x + a, lp["ln1_g"], lp["ln1_b"])
        ff = jax.nn.gelu(h1 @ lp["w1"] + lp["b1"], approximate=True) @ lp["w2"] + lp["b2"]
        x = _layernorm(h1 + ff, lp["ln2_g"], lp["ln2_b"])
    return x[:, 0, :]


# ------------------------------- main -----------------------------------------
if __name__ == "__main__":
    key = jax.random.PRNGKey(0)
    k_qp, k_cp, k_qi, k_ci = jax.random.split(key, 4)

    q_params = init_encoder_params(k_qp, VOCAB, MAX_POS, HIDDEN, FFN, N_LAYERS)
    c_params = init_encoder_params(k_cp, VOCAB, MAX_POS, HIDDEN, FFN, N_LAYERS)

    B, QS, CS = 2, 8, 16
    question_input_ids = jax.random.randint(k_qi, (B, QS), 0, VOCAB, dtype=jnp.int32)
    context_input_ids = jax.random.randint(k_ci, (B, CS), 0, VOCAB, dtype=jnp.int32)
    question_attention_mask = jnp.array(
        [[1] * QS, [1] * (QS - 2) + [0] * 2], dtype=jnp.int32)
    context_attention_mask = jnp.array(
        [[1] * CS, [1] * (CS - 5) + [0] * 5], dtype=jnp.int32)

    # One-time parameter packing, hoisted OUT of the jitted forward path.
    prepared = prepare_dual_encoder(q_params, c_params)

    fwd = jax.jit(dpr_combined_forward)
    q_out, c_out = fwd(prepared,
                       question_input_ids, question_attention_mask,
                       context_input_ids, context_attention_mask)
    jax.block_until_ready((q_out, c_out))

    # correctness check vs pure-JAX reference (tolerance loosened slightly for
    # the approximate EUP reciprocal used in the in-kernel softmax)
    q_ref = _encode_ref(q_params, question_input_ids, question_attention_mask)
    c_ref = _encode_ref(c_params, context_input_ids, context_attention_mask)
    np.testing.assert_allclose(np.asarray(q_out), np.asarray(q_ref), rtol=2e-3, atol=2e-3)
    np.testing.assert_allclose(np.asarray(c_out), np.asarray(c_ref), rtol=2e-3, atol=2e-3)

    print("KERNEL_OK")
</pallas_src>

<mosaic_0001>
module attributes {stable_mosaic.version = 11 : i64} {
  func.func @_fused_encoder_kernel(%arg0: i32, %arg1: memref<1x2x16x32xf32, #tpu.memory_space<vmem>>, %arg2: memref<1x2x1x16xf32, #tpu.memory_space<vmem>>, %arg3: memref<1x2x32x96xf32, #tpu.memory_space<vmem>>, %arg4: memref<1x2x1x96xf32, #tpu.memory_space<vmem>>, %arg5: memref<1x2x32x32xf32, #tpu.memory_space<vmem>>, %arg6: memref<1x2x32x64xf32, #tpu.memory_space<vmem>>, %arg7: memref<1x2x64x32xf32, #tpu.memory_space<vmem>>, %arg8: memref<1x2x1x64xf32, #tpu.memory_space<vmem>>, %arg9: memref<1x14x1x32xf32, #tpu.memory_space<vmem>>, %arg10: memref<1x2x32xf32, #tpu.memory_space<vmem>>) attributes {dimension_semantics = [#tpu.dimension_semantics<parallel>], iteration_bounds = array<i64: 2>, scalar_prefetch = 0 : i64, scratch_operands = 0 : i64, tpu.core_type = #tpu.core_type<tc>, window_params = [{transform_indices = @transform_0, window_bounds = array<i64: 1, 2, 16, 32>}, {transform_indices = @transform_1, window_bounds = array<i64: 1, 2, 1, 16>}, {transform_indices = @transform_2, window_bounds = array<i64: 1, 2, 32, 96>}, {transform_indices = @transform_3, window_bounds = array<i64: 1, 2, 1, 96>}, {transform_indices = @transform_4, window_bounds = array<i64: 1, 2, 32, 32>}, {transform_indices = @transform_5, window_bounds = array<i64: 1, 2, 32, 64>}, {transform_indices = @transform_6, window_bounds = array<i64: 1, 2, 64, 32>}, {transform_indices = @transform_7, window_bounds = array<i64: 1, 2, 1, 64>}, {transform_indices = @transform_8, window_bounds = array<i64: 1, 14, 1, 32>}, {transform_indices = @transform_9, window_bounds = array<i64: 1, 2, 32>}]} {
    %c0 = arith.constant 0 : index
    %c0_0 = arith.constant 0 : index
    %c0_1 = arith.constant 0 : index
    %c0_2 = arith.constant 0 : index
    %0 = vector.load %arg1[%c0, %c0_0, %c0_1, %c0_2] : memref<1x2x16x32xf32, #tpu.memory_space<vmem>>, vector<1x2x16x32xf32>
    %1 = vector.shape_cast %0 : vector<1x2x16x32xf32> to vector<2x16x32xf32>
    %2 = vector.shape_cast %1 : vector<2x16x32xf32> to vector<32x32xf32>
    %c0_3 = arith.constant 0 : index
    %c0_4 = arith.constant 0 : index
    %c0_5 = arith.constant 0 : index
    %c0_6 = arith.constant 0 : index
    %3 = vector.load %arg9[%c0_3, %c0_4, %c0_5, %c0_6] : memref<1x14x1x32xf32, #tpu.memory_space<vmem>>, vector<1x1x1x32xf32>
    %4 = vector.shape_cast %3 : vector<1x1x1x32xf32> to vector<1x32xf32>
    %c0_7 = arith.constant 0 : index
    %c1 = arith.constant 1 : index
    %c0_8 = arith.constant 0 : index
    %c0_9 = arith.constant 0 : index
    %5 = vector.load %arg9[%c0_7, %c1, %c0_8, %c0_9] : memref<1x14x1x32xf32, #tpu.memory_space<vmem>>, vector<1x1x1x32xf32>
    %6 = vector.shape_cast %5 : vector<1x1x1x32xf32> to vector<1x32xf32>
    %cst = arith.constant dense<0.000000e+00> : vector<32xf32>
    %7 = vector.multi_reduction <add>, %2, %cst [1] : vector<32x32xf32> to vector<32xf32>
    %8 = vector.shape_cast %7 : vector<32xf32> to vector<32x1xf32>
    %cst_10 = arith.constant 3.200000e+01 : f32
    %9 = vector.broadcast %cst_10 : f32 to vector<32x1xf32>
    %10 = arith.divf %8, %9 : vector<32x1xf32>
    %11 = vector.broadcast %10 : vector<32x1xf32> to vector<32x32xf32>
    %12 = arith.subf %2, %11 : vector<32x32xf32>
    %13 = arith.mulf %12, %12 : vector<32x32xf32>
    %cst_11 = arith.constant dense<0.000000e+00> : vector<32xf32>
    %14 = vector.multi_reduction <add>, %13, %cst_11 [1] : vector<32x32xf32> to vector<32xf32>
    %15 = vector.shape_cast %14 : vector<32xf32> to vector<32x1xf32>
    %cst_12 = arith.constant 3.200000e+01 : f32
    %16 = vector.broadcast %cst_12 : f32 to vector<32x1xf32>
    %17 = arith.divf %15, %16 : vector<32x1xf32>
    %18 = vector.broadcast %10 : vector<32x1xf32> to vector<32x32xf32>
    %19 = arith.subf %2, %18 : vector<32x32xf32>
    %cst_13 = arith.constant 9.99999996E-13 : f32
    %20 = vector.broadcast %cst_13 : f32 to vector<32x1xf32>
    %21 = arith.addf %17, %20 : vector<32x1xf32>
    %22 = math.rsqrt %21 : vector<32x1xf32>
    %23 = vector.broadcast %22 : vector<32x1xf32> to vector<32x32xf32>
    %24 = arith.mulf %19, %23 : vector<32x32xf32>
    %25 = vector.broadcast %4 : vector<1x32xf32> to vector<32x32xf32>
    %26 = arith.mulf %24, %25 : vector<32x32xf32>
    %27 = vector.broadcast %6 : vector<1x32xf32> to vector<32x32xf32>
    %28 = arith.addf %26, %27 : vector<32x32xf32>
    %c0_14 = arith.constant 0 : index
    %c0_15 = arith.constant 0 : index
    %c0_16 = arith.constant 0 : index
    %c0_17 = arith.constant 0 : index
    %29 = vector.load %arg2[%c0_14, %c0_15, %c0_16, %c0_17] : memref<1x2x1x16xf32, #tpu.memory_space<vmem>>, vector<1x2x1x16xf32>
    %30 = vector.shape_cast %29 : vector<1x2x1x16xf32> to vector<2x1x16xf32>
    %c0_18 = arith.constant 0 : index
    %c0_19 = arith.constant 0 : index
    %c0_20 = arith.constant 0 : index
    %c0_21 = arith.constant 0 : index
    %31 = vector.load %arg3[%c0_18, %c0_19, %c0_20, %c0_21] : memref<1x2x32x96xf32, #tpu.memory_space<vmem>>, vector<1x1x32x96xf32>
    %32 = vector.shape_cast %31 : vector<1x1x32x96xf32> to vector<32x96xf32>
    %cst_22 = arith.constant dense<0.000000e+00> : vector<32x96xf32>
    %33 = tpu.matmul %28, %32, %cst_22 {dimension_numbers = #tpu.dot_dimension_numbers<[1], [0], [0], [1], [0, 0, 1, 1], [], []>} : vector<32x32xf32>, vector<32x96xf32>, vector<32x96xf32> -> vector<32x96xf32>
    %c0_23 = arith.constant 0 : index
    %c0_24 = arith.constant 0 : index
    %c0_25 = arith.constant 0 : index
    %c0_26 = arith.constant 0 : index
    %34 = vector.load %arg4[%c0_23, %c0_24, %c0_25, %c0_26] : memref<1x2x1x96xf32, #tpu.memory_space<vmem>>, vector<1x1x1x96xf32>
    %35 = vector.shape_cast %34 : vector<1x1x1x96xf32> to vector<1x96xf32>
    %36 = vector.broadcast %35 : vector<1x96xf32> to vector<32x96xf32>
    %37 = arith.addf %33, %36 : vector<32x96xf32>
    %38 = vector.shape_cast %37 : vector<32x96xf32> to vector<2x16x96xf32>
    %39 = vector.extract_strided_slice %38 {offsets = [0, 0, 0], sizes = [2, 16, 8], strides = [1, 1, 1]} : vector<2x16x96xf32> to vector<2x16x8xf32>
    %40 = vector.extract_strided_slice %38 {offsets = [0, 0, 32], sizes = [2, 16, 8], strides = [1, 1, 1]} : vector<2x16x96xf32> to vector<2x16x8xf32>
    %41 = vector.extract_strided_slice %38 {offsets = [0, 0, 64], sizes = [2, 16, 8], strides = [1, 1, 1]} : vector<2x16x96xf32> to vector<2x16x8xf32>
    "tpu.trace_start"() <{level = 10 : i32, message = "bqd,bkd->bqk"}> : () -> ()
    %cst_27 = arith.constant dense<0.000000e+00> : vector<2x16x16xf32>
    %42 = tpu.matmul %39, %40, %cst_27 {dimension_numbers = #tpu.dot_dimension_numbers<[2], [2], [1], [1], [0, 0, 0, 1, 1, 1], [0], [0]>} : vector<2x16x8xf32>, vector<2x16x8xf32>, vector<2x16x16xf32> -> vector<2x16x16xf32>
    "tpu.trace_stop"() : () -> ()
    %cst_28 = arith.constant 0.353553385 : f32
    %43 = vector.broadcast %cst_28 : f32 to vector<2x16x16xf32>
    %44 = arith.mulf %42, %43 : vector<2x16x16xf32>
    %45 = vector.broadcast %30 : vector<2x1x16xf32> to vector<2x16x16xf32>
    %46 = arith.addf %44, %45 : vector<2x16x16xf32>
    %cst_29 = arith.constant dense<0xFF800000> : vector<2x16xf32>
    %47 = vector.multi_reduction <maximumf>, %46, %cst_29 [2] : vector<2x16x16xf32> to vector<2x16xf32>
    %48 = vector.shape_cast %47 : vector<2x16xf32> to vector<2x16x1xf32>
    %49 = vector.broadcast %48 : vector<2x16x1xf32> to vector<2x16x16xf32>
    %50 = arith.subf %46, %49 : vector<2x16x16xf32>
    %51 = math.exp %50 : vector<2x16x16xf32>
    %cst_30 = arith.constant dense<0.000000e+00> : vector<2x16xf32>
    %52 = vector.multi_reduction <add>, %51, %cst_30 [2] : vector<2x16x16xf32> to vector<2x16xf32>
    %53 = vector.shape_cast %52 : vector<2x16xf32> to vector<2x16x1xf32>
    %54 = tpu.reciprocal %53 {approx = true} : vector<2x16x1xf32> -> vector<2x16x1xf32>
    %55 = vector.broadcast %54 : vector<2x16x1xf32> to vector<2x16x16xf32>
    %56 = arith.mulf %51, %55 : vector<2x16x16xf32>
    "tpu.trace_start"() <{level = 10 : i32, message = "bqk,bkd->bqd"}> : () -> ()
    %cst_31 = arith.constant dense<0.000000e+00> : vector<2x16x8xf32>
    %57 = tpu.matmul %56, %41, %cst_31 {dimension_numbers = #tpu.dot_dimension_numbers<[2], [1], [1], [2], [0, 0, 0, 1, 1, 2], [0], [0]>} : vector<2x16x16xf32>, vector<2x16x8xf32>, vector<2x16x8xf32> -> vector<2x16x8xf32>
    "tpu.trace_stop"() : () -> ()
    %58 = vector.extract_strided_slice %38 {offsets = [0, 0, 8], sizes = [2, 16, 8], strides = [1, 1, 1]} : vector<2x16x96xf32> to vector<2x16x8xf32>
    %59 = vector.extract_strided_slice %38 {offsets = [0, 0, 40], sizes = [2, 16, 8], strides = [1, 1, 1]} : vector<2x16x96xf32> to vector<2x16x8xf32>
    %60 = vector.extract_strided_slice %38 {offsets = [0, 0, 72], sizes = [2, 16, 8], strides = [1, 1, 1]} : vector<2x16x96xf32> to vector<2x16x8xf32>
    "tpu.trace_start"() <{level = 10 : i32, message = "bqd,bkd->bqk"}> : () -> ()
    %cst_32 = arith.constant dense<0.000000e+00> : vector<2x16x16xf32>
    %61 = tpu.matmul %58, %59, %cst_32 {dimension_numbers = #tpu.dot_dimension_numbers<[2], [2], [1], [1], [0, 0, 0, 1, 1, 1], [0], [0]>} : vector<2x16x8xf32>, vector<2x16x8xf32>, vector<2x16x16xf32> -> vector<2x16x16xf32>
    "tpu.trace_stop"() : () -> ()
    %cst_33 = arith.constant 0.353553385 : f32
    %62 = vector.broadcast %cst_33 : f32 to vector<2x16x16xf32>
    %63 = arith.mulf %61, %62 : vector<2x16x16xf32>
    %64 = vector.broadcast %30 : vector<2x1x16xf32> to vector<2x16x16xf32>
    %65 = arith.addf %63, %64 : vector<2x16x16xf32>
    %cst_34 = arith.constant dense<0xFF800000> : vector<2x16xf32>
    %66 = vector.multi_reduction <maximumf>, %65, %cst_34 [2] : vector<2x16x16xf32> to vector<2x16xf32>
    %67 = vector.shape_cast %66 : vector<2x16xf32> to vector<2x16x1xf32>
    %68 = vector.broadcast %67 : vector<2x16x1xf32> to vector<2x16x16xf32>
    %69 = arith.subf %65, %68 : vector<2x16x16xf32>
    %70 = math.exp %69 : vector<2x16x16xf32>
    %cst_35 = arith.constant dense<0.000000e+00> : vector<2x16xf32>
    %71 = vector.multi_reduction <add>, %70, %cst_35 [2] : vector<2x16x16xf32> to vector<2x16xf32>
    %72 = vector.shape_cast %71 : vector<2x16xf32> to vector<2x16x1xf32>
    %73 = tpu.reciprocal %72 {approx = true} : vector<2x16x1xf32> -> vector<2x16x1xf32>
    %74 = vector.broadcast %73 : vector<2x16x1xf32> to vector<2x16x16xf32>
    %75 = arith.mulf %70, %74 : vector<2x16x16xf32>
    "tpu.trace_start"() <{level = 10 : i32, message = "bqk,bkd->bqd"}> : () -> ()
    %cst_36 = arith.constant dense<0.000000e+00> : vector<2x16x8xf32>
    %76 = tpu.matmul %75, %60, %cst_36 {dimension_numbers = #tpu.dot_dimension_numbers<[2], [1], [1], [2], [0, 0, 0, 1, 1, 2], [0], [0]>} : vector<2x16x16xf32>, vector<2x16x8xf32>, vector<2x16x8xf32> -> vector<2x16x8xf32>
    "tpu.trace_stop"() : () -> ()
    %77 = vector.extract_strided_slice %38 {offsets = [0, 0, 16], sizes = [2, 16, 8], strides = [1, 1, 1]} : vector<2x16x96xf32> to vector<2x16x8xf32>
    %78 = vector.extract_strided_slice %38 {offsets = [0, 0, 48], sizes = [2, 16, 8], strides = [1, 1, 1]} : vector<2x16x96xf32> to vector<2x16x8xf32>
    %79 = vector.extract_strided_slice %38 {offsets = [0, 0, 80], sizes = [2, 16, 8], strides = [1, 1, 1]} : vector<2x16x96xf32> to vector<2x16x8xf32>
    "tpu.trace_start"() <{level = 10 : i32, message = "bqd,bkd->bqk"}> : () -> ()
    %cst_37 = arith.constant dense<0.000000e+00> : vector<2x16x16xf32>
    %80 = tpu.matmul %77, %78, %cst_37 {dimension_numbers = #tpu.dot_dimension_numbers<[2], [2], [1], [1], [0, 0, 0, 1, 1, 1], [0], [0]>} : vector<2x16x8xf32>, vector<2x16x8xf32>, vector<2x16x16xf32> -> vector<2x16x16xf32>
    "tpu.trace_stop"() : () -> ()
    %cst_38 = arith.constant 0.353553385 : f32
    %81 = vector.broadcast %cst_38 : f32 to vector<2x16x16xf32>
    %82 = arith.mulf %80, %81 : vector<2x16x16xf32>
    %83 = vector.broadcast %30 : vector<2x1x16xf32> to vector<2x16x16xf32>
    %84 = arith.addf %82, %83 : vector<2x16x16xf32>
    %cst_39 = arith.constant dense<0xFF800000> : vector<2x16xf32>
    %85 = vector.multi_reduction <maximumf>, %84, %cst_39 [2] : vector<2x16x16xf32> to vector<2x16xf32>
    %86 = vector.shape_cast %85 : vector<2x16xf32> to vector<2x16x1xf32>
    %87 = vector.broadcast %86 : vector<2x16x1xf32> to vector<2x16x16xf32>
    %88 = arith.subf %84, %87 : vector<2x16x16xf32>
    %89 = math.exp %88 : vector<2x16x16xf32>
    %cst_40 = arith.constant dense<0.000000e+00> : vector<2x16xf32>
    %90 = vector.multi_reduction <add>, %89, %cst_40 [2] : vector<2x16x16xf32> to vector<2x16xf32>
    %91 = vector.shape_cast %90 : vector<2x16xf32> to vector<2x16x1xf32>
    %92 = tpu.reciprocal %91 {approx = true} : vector<2x16x1xf32> -> vector<2x16x1xf32>
    %93 = vector.broadcast %92 : vector<2x16x1xf32> to vector<2x16x16xf32>
    %94 = arith.mulf %89, %93 : vector<2x16x16xf32>
    "tpu.trace_start"() <{level = 10 : i32, message = "bqk,bkd->bqd"}> : () -> ()
    %cst_41 = arith.constant dense<0.000000e+00> : vector<2x16x8xf32>
    %95 = tpu.matmul %94, %79, %cst_41 {dimension_numbers = #tpu.dot_dimension_numbers<[2], [1], [1], [2], [0, 0, 0, 1, 1, 2], [0], [0]>} : vector<2x16x16xf32>, vector<2x16x8xf32>, vector<2x16x8xf32> -> vector<2x16x8xf32>
    "tpu.trace_stop"() : () -> ()
    %96 = vector.extract_strided_slice %38 {offsets = [0, 0, 24], sizes = [2, 16, 8], strides = [1, 1, 1]} : vector<2x16x96xf32> to vector<2x16x8xf32>
    %97 = vector.extract_strided_slice %38 {offsets = [0, 0, 56], sizes = [2, 16, 8], strides = [1, 1, 1]} : vector<2x16x96xf32> to vector<2x16x8xf32>
    %98 = vector.extract_strided_slice %38 {offsets = [0, 0, 88], sizes = [2, 16, 8], strides = [1, 1, 1]} : vector<2x16x96xf32> to vector<2x16x8xf32>
    "tpu.trace_start"() <{level = 10 : i32, message = "bqd,bkd->bqk"}> : () -> ()
    %cst_42 = arith.constant dense<0.000000e+00> : vector<2x16x16xf32>
    %99 = tpu.matmul %96, %97, %cst_42 {dimension_numbers = #tpu.dot_dimension_numbers<[2], [2], [1], [1], [0, 0, 0, 1, 1, 1], [0], [0]>} : vector<2x16x8xf32>, vector<2x16x8xf32>, vector<2x16x16xf32> -> vector<2x16x16xf32>
    "tpu.trace_stop"() : () -> ()
    %cst_43 = arith.constant 0.353553385 : f32
    %100 = vector.broadcast %cst_43 : f32 to vector<2x16x16xf32>
    %101 = arith.mulf %99, %100 : vector<2x16x16xf32>
    %102 = vector.broadcast %30 : vector<2x1x16xf32> to vector<2x16x16xf32>
    %103 = arith.addf %101, %102 : vector<2x16x16xf32>
    %cst_44 = arith.constant dense<0xFF800000> : vector<2x16xf32>
    %104 = vector.multi_reduction <maximumf>, %103, %cst_44 [2] : vector<2x16x16xf32> to vector<2x16xf32>
    %105 = vector.shape_cast %104 : vector<2x16xf32> to vector<2x16x1xf32>
    %106 = vector.broadcast %105 : vector<2x16x1xf32> to vector<2x16x16xf32>
    %107 = arith.subf %103, %106 : vector<2x16x16xf32>
    %108 = math.exp %107 : vector<2x16x16xf32>
    %cst_45 = arith.constant dense<0.000000e+00> : vector<2x16xf32>
    %109 = vector.multi_reduction <add>, %108, %cst_45 [2] : vector<2x16x16xf32> to vector<2x16xf32>
    %110 = vector.shape_cast %109 : vector<2x16xf32> to vector<2x16x1xf32>
    %111 = tpu.reciprocal %110 {approx = true} : vector<2x16x1xf32> -> vector<2x16x1xf32>
    %112 = vector.broadcast %111 : vector<2x16x1xf32> to vector<2x16x16xf32>
    %113 = arith.mulf %108, %112 : vector<2x16x16xf32>
    "tpu.trace_start"() <{level = 10 : i32, message = "bqk,bkd->bqd"}> : () -> ()
    %cst_46 = arith.constant dense<0.000000e+00> : vector<2x16x8xf32>
    %114 = tpu.matmul %113, %98, %cst_46 {dimension_numbers = #tpu.dot_dimension_numbers<[2], [1], [1], [2], [0, 0, 0, 1, 1, 2], [0], [0]>} : vector<2x16x16xf32>, vector<2x16x8xf32>, vector<2x16x8xf32> -> vector<2x16x8xf32>
    "tpu.trace_stop"() : () -> ()
    %115 = tpu.concatenate %57, %76, %95, %114 in 2 : vector<2x16x8xf32>, vector<2x16x8xf32>, vector<2x16x8xf32>, vector<2x16x8xf32> -> vector<2x16x32xf32>
    %116 = vector.shape_cast %115 : vector<2x16x32xf32> to vector<32x32xf32>
    %c0_47 = arith.constant 0 : index
    %c0_48 = arith.constant 0 : index
    %c0_49 = arith.constant 0 : index
    %c0_50 = arith.constant 0 : index
    %117 = vector.load %arg5[%c0_47, %c0_48, %c0_49, %c0_50] : memref<1x2x32x32xf32, #tpu.memory_space<vmem>>, vector<1x1x32x32xf32>
    %118 = vector.shape_cast %117 : vector<1x1x32x32xf32> to vector<32x32xf32>
    %cst_51 = arith.constant dense<0.000000e+00> : vector<32x32xf32>
    %119 = tpu.matmul %116, %118, %cst_51 {dimension_numbers = #tpu.dot_dimension_numbers<[1], [0], [0], [1], [0, 0, 1, 1], [], []>} : vector<32x32xf32>, vector<32x32xf32>, vector<32x32xf32> -> vector<32x32xf32>
    %c0_52 = arith.constant 0 : index
    %c2 = arith.constant 2 : index
    %c0_53 = arith.constant 0 : index
    %c0_54 = arith.constant 0 : index
    %120 = vector.load %arg9[%c0_52, %c2, %c0_53, %c0_54] : memref<1x14x1x32xf32, #tpu.memory_space<vmem>>, vector<1x1x1x32xf32>
    %121 = vector.shape_cast %120 : vector<1x1x1x32xf32> to vector<1x32xf32>
    %122 = vector.broadcast %121 : vector<1x32xf32> to vector<32x32xf32>
    %123 = arith.addf %119, %122 : vector<32x32xf32>
    %124 = arith.addf %28, %123 : vector<32x32xf32>
    %c0_55 = arith.constant 0 : index
    %c3 = arith.constant 3 : index
    %c0_56 = arith.constant 0 : index
    %c0_57 = arith.constant 0 : index
    %125 = vector.load %arg9[%c0_55, %c3, %c0_56, %c0_57] : memref<1x14x1x32xf32, #tpu.memory_space<vmem>>, vector<1x1x1x32xf32>
    %126 = vector.shape_cast %125 : vector<1x1x1x32xf32> to vector<1x32xf32>
    %c0_58 = arith.constant 0 : index
    %c4 = arith.constant 4 : index
    %c0_59 = arith.constant 0 : index
    %c0_60 = arith.constant 0 : index
    %127 = vector.load %arg9[%c0_58, %c4, %c0_59, %c0_60] : memref<1x14x1x32xf32, #tpu.memory_space<vmem>>, vector<1x1x1x32xf32>
    %128 = vector.shape_cast %127 : vector<1x1x1x32xf32> to vector<1x32xf32>
    %cst_61 = arith.constant dense<0.000000e+00> : vector<32xf32>
    %129 = vector.multi_reduction <add>, %124, %cst_61 [1] : vector<32x32xf32> to vector<32xf32>
    %130 = vector.shape_cast %129 : vector<32xf32> to vector<32x1xf32>
    %cst_62 = arith.constant 3.200000e+01 : f32
    %131 = vector.broadcast %cst_62 : f32 to vector<32x1xf32>
    %132 = arith.divf %130, %131 : vector<32x1xf32>
    %133 = vector.broadcast %132 : vector<32x1xf32> to vector<32x32xf32>
    %134 = arith.subf %124, %133 : vector<32x32xf32>
    %135 = arith.mulf %134, %134 : vector<32x32xf32>
    %cst_63 = arith.constant dense<0.000000e+00> : vector<32xf32>
    %136 = vector.multi_reduction <add>, %135, %cst_63 [1] : vector<32x32xf32> to vector<32xf32>
    %137 = vector.shape_cast %136 : vector<32xf32> to vector<32x1xf32>
    %cst_64 = arith.constant 3.200000e+01 : f32
    %138 = vector.broadcast %cst_64 : f32 to vector<32x1xf32>
    %139 = arith.divf %137, %138 : vector<32x1xf32>
    %140 = vector.broadcast %132 : vector<32x1xf32> to vector<32x32xf32>
    %141 = arith.subf %124, %140 : vector<32x32xf32>
    %cst_65 = arith.constant 9.99999996E-13 : f32
    %142 = vector.broadcast %cst_65 : f32 to vector<32x1xf32>
    %143 = arith.addf %139, %142 : vector<32x1xf32>
    %144 = math.rsqrt %143 : vector<32x1xf32>
    %145 = vector.broadcast %144 : vector<32x1xf32> to vector<32x32xf32>
    %146 = arith.mulf %141, %145 : vector<32x32xf32>
    %147 = vector.broadcast %126 : vector<1x32xf32> to vector<32x32xf32>
    %148 = arith.mulf %146, %147 : vector<32x32xf32>
    %149 = vector.broadcast %128 : vector<1x32xf32> to vector<32x32xf32>
    %150 = arith.addf %148, %149 : vector<32x32xf32>
    %c0_66 = arith.constant 0 : index
    %c0_67 = arith.constant 0 : index
    %c0_68 = arith.constant 0 : index
    %c0_69 = arith.constant 0 : index
    %151 = vector.load %arg6[%c0_66, %c0_67, %c0_68, %c0_69] : memref<1x2x32x64xf32, #tpu.memory_space<vmem>>, vector<1x1x32x64xf32>
    %152 = vector.shape_cast %151 : vector<1x1x32x64xf32> to vector<32x64xf32>
    %cst_70 = arith.constant dense<0.000000e+00> : vector<32x64xf32>
    %153 = tpu.matmul %150, %152, %cst_70 {dimension_numbers = #tpu.dot_dimension_numbers<[1], [0], [0], [1], [0, 0, 1, 1], [], []>} : vector<32x32xf32>, vector<32x64xf32>, vector<32x64xf32> -> vector<32x64xf32>
    %c0_71 = arith.constant 0 : index
    %c0_72 = arith.constant 0 : index
    %c0_73 = arith.constant 0 : index
    %c0_74 = arith.constant 0 : index
    %154 = vector.load %arg8[%c0_71, %c0_72, %c0_73, %c0_74] : memref<1x2x1x64xf32, #tpu.memory_space<vmem>>, vector<1x1x1x64xf32>
    %155 = vector.shape_cast %154 : vector<1x1x1x64xf32> to vector<1x64xf32>
    %156 = vector.broadcast %155 : vector<1x64xf32> to vector<32x64xf32>
    %157 = arith.addf %153, %156 : vector<32x64xf32>
    %158 = arith.mulf %157, %157 : vector<32x64xf32>
    %159 = arith.mulf %157, %158 : vector<32x64xf32>
    %cst_75 = arith.constant 4.471500e-02 : f32
    %160 = vector.broadcast %cst_75 : f32 to vector<32x64xf32>
    %161 = arith.mulf %160, %159 : vector<32x64xf32>
    %162 = arith.addf %157, %161 : vector<32x64xf32>
    %cst_76 = arith.constant 0.797884583 : f32
    %163 = vector.broadcast %cst_76 : f32 to vector<32x64xf32>
    %164 = arith.mulf %163, %162 : vector<32x64xf32>
    %165 = math.tanh %164 : vector<32x64xf32>
    %cst_77 = arith.constant 1.000000e+00 : f32
    %166 = vector.broadcast %cst_77 : f32 to vector<32x64xf32>
    %167 = arith.addf %166, %165 : vector<32x64xf32>
    %cst_78 = arith.constant 5.000000e-01 : f32
    %168 = vector.broadcast %cst_78 : f32 to vector<32x64xf32>
    %169 = arith.mulf %168, %167 : vector<32x64xf32>
    %170 = arith.mulf %157, %169 : vector<32x64xf32>
    %c0_79 = arith.constant 0 : index
    %c0_80 = arith.constant 0 : index
    %c0_81 = arith.constant 0 : index
    %c0_82 = arith.constant 0 : index
    %171 = vector.load %arg7[%c0_79, %c0_80, %c0_81, %c0_82] : memref<1x2x64x32xf32, #tpu.memory_space<vmem>>, vector<1x1x64x32xf32>
    %172 = vector.shape_cast %171 : vector<1x1x64x32xf32> to vector<64x32xf32>
    %cst_83 = arith.constant dense<0.000000e+00> : vector<32x32xf32>
    %173 = tpu.matmul %170, %172, %cst_83 {dimension_numbers = #tpu.dot_dimension_numbers<[1], [0], [0], [1], [0, 0, 1, 1], [], []>} : vector<32x64xf32>, vector<64x32xf32>, vector<32x32xf32> -> vector<32x32xf32>
    %c0_84 = arith.constant 0 : index
    %c5 = arith.constant 5 : index
    %c0_85 = arith.constant 0 : index
    %c0_86 = arith.constant 0 : index
    %174 = vector.load %arg9[%c0_84, %c5, %c0_85, %c0_86] : memref<1x14x1x32xf32, #tpu.memory_space<vmem>>, vector<1x1x1x32xf32>
    %175 = vector.shape_cast %174 : vector<1x1x1x32xf32> to vector<1x32xf32>
    %176 = vector.broadcast %175 : vector<1x32xf32> to vector<32x32xf32>
    %177 = arith.addf %173, %176 : vector<32x32xf32>
    %178 = arith.addf %150, %177 : vector<32x32xf32>
    %c0_87 = arith.constant 0 : index
    %c6 = arith.constant 6 : index
    %c0_88 = arith.constant 0 : index
    %c0_89 = arith.constant 0 : index
    %179 = vector.load %arg9[%c0_87, %c6, %c0_88, %c0_89] : memref<1x14x1x32xf32, #tpu.memory_space<vmem>>, vector<1x1x1x32xf32>
    %180 = vector.shape_cast %179 : vector<1x1x1x32xf32> to vector<1x32xf32>
    %c0_90 = arith.constant 0 : index
    %c7 = arith.constant 7 : index
    %c0_91 = arith.constant 0 : index
    %c0_92 = arith.constant 0 : index
    %181 = vector.load %arg9[%c0_90, %c7, %c0_91, %c0_92] : memref<1x14x1x32xf32, #tpu.memory_space<vmem>>, vector<1x1x1x32xf32>
    %182 = vector.shape_cast %181 : vector<1x1x1x32xf32> to vector<1x32xf32>
    %cst_93 = arith.constant dense<0.000000e+00> : vector<32xf32>
    %183 = vector.multi_reduction <add>, %178, %cst_93 [1] : vector<32x32xf32> to vector<32xf32>
    %184 = vector.shape_cast %183 : vector<32xf32> to vector<32x1xf32>
    %cst_94 = arith.constant 3.200000e+01 : f32
    %185 = vector.broadcast %cst_94 : f32 to vector<32x1xf32>
    %186 = arith.divf %184, %185 : vector<32x1xf32>
    %187 = vector.broadcast %186 : vector<32x1xf32> to vector<32x32xf32>
    %188 = arith.subf %178, %187 : vector<32x32xf32>
    %189 = arith.mulf %188, %188 : vector<32x32xf32>
    %cst_95 = arith.constant dense<0.000000e+00> : vector<32xf32>
    %190 = vector.multi_reduction <add>, %189, %cst_95 [1] : vector<32x32xf32> to vector<32xf32>
    %191 = vector.shape_cast %190 : vector<32xf32> to vector<32x1xf32>
    %cst_96 = arith.constant 3.200000e+01 : f32
    %192 = vector.broadcast %cst_96 : f32 to vector<32x1xf32>
    %193 = arith.divf %191, %192 : vector<32x1xf32>
    %194 = vector.broadcast %186 : vector<32x1xf32> to vector<32x32xf32>
    %195 = arith.subf %178, %194 : vector<32x32xf32>
    %cst_97 = arith.constant 9.99999996E-13 : f32
    %196 = vector.broadcast %cst_97 : f32 to vector<32x1xf32>
    %197 = arith.addf %193, %196 : vector<32x1xf32>
    %198 = math.rsqrt %197 : vector<32x1xf32>
    %199 = vector.broadcast %198 : vector<32x1xf32> to vector<32x32xf32>
    %200 = arith.mulf %195, %199 : vector<32x32xf32>
    %201 = vector.broadcast %180 : vector<1x32xf32> to vector<32x32xf32>
    %202 = arith.mulf %200, %201 : vector<32x32xf32>
    %203 = vector.broadcast %182 : vector<1x32xf32> to vector<32x32xf32>
    %204 = arith.addf %202, %203 : vector<32x32xf32>
    %c0_98 = arith.constant 0 : index
    %c1_99 = arith.constant 1 : index
    %c0_100 = arith.constant 0 : index
    %c0_101 = arith.constant 0 : index
    %205 = vector.load %arg3[%c0_98, %c1_99, %c0_100, %c0_101] : memref<1x2x32x96xf32, #tpu.memory_space<vmem>>, vector<1x1x32x96xf32>
    %206 = vector.shape_cast %205 : vector<1x1x32x96xf32> to vector<32x96xf32>
    %cst_102 = arith.constant dense<0.000000e+00> : vector<32x96xf32>
    %207 = tpu.matmul %204, %206, %cst_102 {dimension_numbers = #tpu.dot_dimension_numbers<[1], [0], [0], [1], [0, 0, 1, 1], [], []>} : vector<32x32xf32>, vector<32x96xf32>, vector<32x96xf32> -> vector<32x96xf32>
    %c0_103 = arith.constant 0 : index
    %c1_104 = arith.constant 1 : index
    %c0_105 = arith.constant 0 : index
    %c0_106 = arith.constant 0 : index
    %208 = vector.load %arg4[%c0_103, %c1_104, %c0_105, %c0_106] : memref<1x2x1x96xf32, #tpu.memory_space<vmem>>, vector<1x1x1x96xf32>
    %209 = vector.shape_cast %208 : vector<1x1x1x96xf32> to vector<1x96xf32>
    %210 = vector.broadcast %209 : vector<1x96xf32> to vector<32x96xf32>
    %211 = arith.addf %207, %210 : vector<32x96xf32>
    %212 = vector.shape_cast %211 : vector<32x96xf32> to vector<2x16x96xf32>
    %213 = vector.extract_strided_slice %212 {offsets = [0, 0, 0], sizes = [2, 16, 8], strides = [1, 1, 1]} : vector<2x16x96xf32> to vector<2x16x8xf32>
    %214 = vector.extract_strided_slice %212 {offsets = [0, 0, 32], sizes = [2, 16, 8], strides = [1, 1, 1]} : vector<2x16x96xf32> to vector<2x16x8xf32>
    %215 = vector.extract_strided_slice %212 {offsets = [0, 0, 64], sizes = [2, 16, 8], strides = [1, 1, 1]} : vector<2x16x96xf32> to vector<2x16x8xf32>
    "tpu.trace_start"() <{level = 10 : i32, message = "bqd,bkd->bqk"}> : () -> ()
    %cst_107 = arith.constant dense<0.000000e+00> : vector<2x16x16xf32>
    %216 = tpu.matmul %213, %214, %cst_107 {dimension_numbers = #tpu.dot_dimension_numbers<[2], [2], [1], [1], [0, 0, 0, 1, 1, 1], [0], [0]>} : vector<2x16x8xf32>, vector<2x16x8xf32>, vector<2x16x16xf32> -> vector<2x16x16xf32>
    "tpu.trace_stop"() : () -> ()
    %cst_108 = arith.constant 0.353553385 : f32
    %217 = vector.broadcast %cst_108 : f32 to vector<2x16x16xf32>
    %218 = arith.mulf %216, %217 : vector<2x16x16xf32>
    %219 = vector.broadcast %30 : vector<2x1x16xf32> to vector<2x16x16xf32>
    %220 = arith.addf %218, %219 : vector<2x16x16xf32>
    %cst_109 = arith.constant dense<0xFF800000> : vector<2x16xf32>
    %221 = vector.multi_reduction <maximumf>, %220, %cst_109 [2] : vector<2x16x16xf32> to vector<2x16xf32>
    %222 = vector.shape_cast %221 : vector<2x16xf32> to vector<2x16x1xf32>
    %223 = vector.broadcast %222 : vector<2x16x1xf32> to vector<2x16x16xf32>
    %224 = arith.subf %220, %223 : vector<2x16x16xf32>
    %225 = math.exp %224 : vector<2x16x16xf32>
    %cst_110 = arith.constant dense<0.000000e+00> : vector<2x16xf32>
    %226 = vector.multi_reduction <add>, %225, %cst_110 [2] : vector<2x16x16xf32> to vector<2x16xf32>
    %227 = vector.shape_cast %226 : vector<2x16xf32> to vector<2x16x1xf32>
    %228 = tpu.reciprocal %227 {approx = true} : vector<2x16x1xf32> -> vector<2x16x1xf32>
    %229 = vector.broadcast %228 : vector<2x16x1xf32> to vector<2x16x16xf32>
    %230 = arith.mulf %225, %229 : vector<2x16x16xf32>
    "tpu.trace_start"() <{level = 10 : i32, message = "bqk,bkd->bqd"}> : () -> ()
    %cst_111 = arith.constant dense<0.000000e+00> : vector<2x16x8xf32>
    %231 = tpu.matmul %230, %215, %cst_111 {dimension_numbers = #tpu.dot_dimension_numbers<[2], [1], [1], [2], [0, 0, 0, 1, 1, 2], [0], [0]>} : vector<2x16x16xf32>, vector<2x16x8xf32>, vector<2x16x8xf32> -> vector<2x16x8xf32>
    "tpu.trace_stop"() : () -> ()
    %232 = vector.extract_strided_slice %212 {offsets = [0, 0, 8], sizes = [2, 16, 8], strides = [1, 1, 1]} : vector<2x16x96xf32> to vector<2x16x8xf32>
    %233 = vector.extract_strided_slice %212 {offsets = [0, 0, 40], sizes = [2, 16, 8], strides = [1, 1, 1]} : vector<2x16x96xf32> to vector<2x16x8xf32>
    %234 = vector.extract_strided_slice %212 {offsets = [0, 0, 72], sizes = [2, 16, 8], strides = [1, 1, 1]} : vector<2x16x96xf32> to vector<2x16x8xf32>
    "tpu.trace_start"() <{level = 10 : i32, message = "bqd,bkd->bqk"}> : () -> ()
    %cst_112 = arith.constant dense<0.000000e+00> : vector<2x16x16xf32>
    %235 = tpu.matmul %232, %233, %cst_112 {dimension_numbers = #tpu.dot_dimension_numbers<[2], [2], [1], [1], [0, 0, 0, 1, 1, 1], [0], [0]>} : vector<2x16x8xf32>, vector<2x16x8xf32>, vector<2x16x16xf32> -> vector<2x16x16xf32>
    "tpu.trace_stop"() : () -> ()
    %cst_113 = arith.constant 0.353553385 : f32
    %236 = vector.broadcast %cst_113 : f32 to vector<2x16x16xf32>
    %237 = arith.mulf %235, %236 : vector<2x16x16xf32>
    %238 = vector.broadcast %30 : vector<2x1x16xf32> to vector<2x16x16xf32>
    %239 = arith.addf %237, %238 : vector<2x16x16xf32>
    %cst_114 = arith.constant dense<0xFF800000> : vector<2x16xf32>
    %240 = vector.multi_reduction <maximumf>, %239, %cst_114 [2] : vector<2x16x16xf32> to vector<2x16xf32>
    %241 = vector.shape_cast %240 : vector<2x16xf32> to vector<2x16x1xf32>
    %242 = vector.broadcast %241 : vector<2x16x1xf32> to vector<2x16x16xf32>
    %243 = arith.subf %239, %242 : vector<2x16x16xf32>
    %244 = math.exp %243 : vector<2x16x16xf32>
    %cst_115 = arith.constant dense<0.000000e+00> : vector<2x16xf32>
    %245 = vector.multi_reduction <add>, %244, %cst_115 [2] : vector<2x16x16xf32> to vector<2x16xf32>
    %246 = vector.shape_cast %245 : vector<2x16xf32> to vector<2x16x1xf32>
    %247 = tpu.reciprocal %246 {approx = true} : vector<2x16x1xf32> -> vector<2x16x1xf32>
    %248 = vector.broadcast %247 : vector<2x16x1xf32> to vector<2x16x16xf32>
    %249 = arith.mulf %244, %248 : vector<2x16x16xf32>
    "tpu.trace_start"() <{level = 10 : i32, message = "bqk,bkd->bqd"}> : () -> ()
    %cst_116 = arith.constant dense<0.000000e+00> : vector<2x16x8xf32>
    %250 = tpu.matmul %249, %234, %cst_116 {dimension_numbers = #tpu.dot_dimension_numbers<[2], [1], [1], [2], [0, 0, 0, 1, 1, 2], [0], [0]>} : vector<2x16x16xf32>, vector<2x16x8xf32>, vector<2x16x8xf32> -> vector<2x16x8xf32>
    "tpu.trace_stop"() : () -> ()
    %251 = vector.extract_strided_slice %212 {offsets = [0, 0, 16], sizes = [2, 16, 8], strides = [1, 1, 1]} : vector<2x16x96xf32> to vector<2x16x8xf32>
    %252 = vector.extract_strided_slice %212 {offsets = [0, 0, 48], sizes = [2, 16, 8], strides = [1, 1, 1]} : vector<2x16x96xf32> to vector<2x16x8xf32>
    %253 = vector.extract_strided_slice %212 {offsets = [0, 0, 80], sizes = [2, 16, 8], strides = [1, 1, 1]} : vector<2x16x96xf32> to vector<2x16x8xf32>
    "tpu.trace_start"() <{level = 10 : i32, message = "bqd,bkd->bqk"}> : () -> ()
    %cst_117 = arith.constant dense<0.000000e+00> : vector<2x16x16xf32>
    %254 = tpu.matmul %251, %252, %cst_117 {dimension_numbers = #tpu.dot_dimension_numbers<[2], [2], [1], [1], [0, 0, 0, 1, 1, 1], [0], [0]>} : vector<2x16x8xf32>, vector<2x16x8xf32>, vector<2x16x16xf32> -> vector<2x16x16xf32>
    "tpu.trace_stop"() : () -> ()
    %cst_118 = arith.constant 0.353553385 : f32
    %255 = vector.broadcast %cst_118 : f32 to vector<2x16x16xf32>
    %256 = arith.mulf %254, %255 : vector<2x16x16xf32>
    %257 = vector.broadcast %30 : vector<2x1x16xf32> to vector<2x16x16xf32>
    %258 = arith.addf %256, %257 : vector<2x16x16xf32>
    %cst_119 = arith.constant dense<0xFF800000> : vector<2x16xf32>
    %259 = vector.multi_reduction <maximumf>, %258, %cst_119 [2] : vector<2x16x16xf32> to vector<2x16xf32>
    %260 = vector.shape_cast %259 : vector<2x16xf32> to vector<2x16x1xf32>
    %261 = vector.broadcast %260 : vector<2x16x1xf32> to vector<2x16x16xf32>
    %262 = arith.subf %258, %261 : vector<2x16x16xf32>
    %263 = math.exp %262 : vector<2x16x16xf32>
    %cst_120 = arith.constant dense<0.000000e+00> : vector<2x16xf32>
    %264 = vector.multi_reduction <add>, %263, %cst_120 [2] : vector<2x16x16xf32> to vector<2x16xf32>
    %265 = vector.shape_cast %264 : vector<2x16xf32> to vector<2x16x1xf32>
    %266 = tpu.reciprocal %265 {approx = true} : vector<2x16x1xf32> -> vector<2x16x1xf32>
    %267 = vector.broadcast %266 : vector<2x16x1xf32> to vector<2x16x16xf32>
    %268 = arith.mulf %263, %267 : vector<2x16x16xf32>
    "tpu.trace_start"() <{level = 10 : i32, message = "bqk,bkd->bqd"}> : () -> ()
    %cst_121 = arith.constant dense<0.000000e+00> : vector<2x16x8xf32>
    %269 = tpu.matmul %268, %253, %cst_121 {dimension_numbers = #tpu.dot_dimension_numbers<[2], [1], [1], [2], [0, 0, 0, 1, 1, 2], [0], [0]>} : vector<2x16x16xf32>, vector<2x16x8xf32>, vector<2x16x8xf32> -> vector<2x16x8xf32>
    "tpu.trace_stop"() : () -> ()
    %270 = vector.extract_strided_slice %212 {offsets = [0, 0, 24], sizes = [2, 16, 8], strides = [1, 1, 1]} : vector<2x16x96xf32> to vector<2x16x8xf32>
    %271 = vector.extract_strided_slice %212 {offsets = [0, 0, 56], sizes = [2, 16, 8], strides = [1, 1, 1]} : vector<2x16x96xf32> to vector<2x16x8xf32>
    %272 = vector.extract_strided_slice %212 {offsets = [0, 0, 88], sizes = [2, 16, 8], strides = [1, 1, 1]} : vector<2x16x96xf32> to vector<2x16x8xf32>
    "tpu.trace_start"() <{level = 10 : i32, message = "bqd,bkd->bqk"}> : () -> ()
    %cst_122 = arith.constant dense<0.000000e+00> : vector<2x16x16xf32>
    %273 = tpu.matmul %270, %271, %cst_122 {dimension_numbers = #tpu.dot_dimension_numbers<[2], [2], [1], [1], [0, 0, 0, 1, 1, 1], [0], [0]>} : vector<2x16x8xf32>, vector<2x16x8xf32>, vector<2x16x16xf32> -> vector<2x16x16xf32>
    "tpu.trace_stop"() : () -> ()
    %cst_123 = arith.constant 0.353553385 : f32
    %274 = vector.broadcast %cst_123 : f32 to vector<2x16x16xf32>
    %275 = arith.mulf %273, %274 : vector<2x16x16xf32>
    %276 = vector.broadcast %30 : vector<2x1x16xf32> to vector<2x16x16xf32>
    %277 = arith.addf %275, %276 : vector<2x16x16xf32>
    %cst_124 = arith.constant dense<0xFF800000> : vector<2x16xf32>
    %278 = vector.multi_reduction <maximumf>, %277, %cst_124 [2] : vector<2x16x16xf32> to vector<2x16xf32>
    %279 = vector.shape_cast %278 : vector<2x16xf32> to vector<2x16x1xf32>
    %280 = vector.broadcast %279 : vector<2x16x1xf32> to vector<2x16x16xf32>
    %281 = arith.subf %277, %280 : vector<2x16x16xf32>
    %282 = math.exp %281 : vector<2x16x16xf32>
    %cst_125 = arith.constant dense<0.000000e+00> : vector<2x16xf32>
    %283 = vector.multi_reduction <add>, %282, %cst_125 [2] : vector<2x16x16xf32> to vector<2x16xf32>
    %284 = vector.shape_cast %283 : vector<2x16xf32> to vector<2x16x1xf32>
    %285 = tpu.reciprocal %284 {approx = true} : vector<2x16x1xf32> -> vector<2x16x1xf32>
    %286 = vector.broadcast %285 : vector<2x16x1xf32> to vector<2x16x16xf32>
    %287 = arith.mulf %282, %286 : vector<2x16x16xf32>
    "tpu.trace_start"() <{level = 10 : i32, message = "bqk,bkd->bqd"}> : () -> ()
    %cst_126 = arith.constant dense<0.000000e+00> : vector<2x16x8xf32>
    %288 = tpu.matmul %287, %272, %cst_126 {dimension_numbers = #tpu.dot_dimension_numbers<[2], [1], [1], [2], [0, 0, 0, 1, 1, 2], [0], [0]>} : vector<2x16x16xf32>, vector<2x16x8xf32>, vector<2x16x8xf32> -> vector<2x16x8xf32>
    "tpu.trace_stop"() : () -> ()
    %289 = tpu.concatenate %231, %250, %269, %288 in 2 : vector<2x16x8xf32>, vector<2x16x8xf32>, vector<2x16x8xf32>, vector<2x16x8xf32> -> vector<2x16x32xf32>
    %290 = vector.shape_cast %289 : vector<2x16x32xf32> to vector<32x32xf32>
    %c0_127 = arith.constant 0 : index
    %c1_128 = arith.constant 1 : index
    %c0_129 = arith.constant 0 : index
    %c0_130 = arith.constant 0 : index
    %291 = vector.load %arg5[%c0_127, %c1_128, %c0_129, %c0_130] : memref<1x2x32x32xf32, #tpu.memory_space<vmem>>, vector<1x1x32x32xf32>
    %292 = vector.shape_cast %291 : vector<1x1x32x32xf32> to vector<32x32xf32>
    %cst_131 = arith.constant dense<0.000000e+00> : vector<32x32xf32>
    %293 = tpu.matmul %290, %292, %cst_131 {dimension_numbers = #tpu.dot_dimension_numbers<[1], [0], [0], [1], [0, 0, 1, 1], [], []>} : vector<32x32xf32>, vector<32x32xf32>, vector<32x32xf32> -> vector<32x32xf32>
    %c0_132 = arith.constant 0 : index
    %c8 = arith.constant 8 : index
    %c0_133 = arith.constant 0 : index
    %c0_134 = arith.constant 0 : index
    %294 = vector.load %arg9[%c0_132, %c8, %c0_133, %c0_134] : memref<1x14x1x32xf32, #tpu.memory_space<vmem>>, vector<1x1x1x32xf32>
    %295 = vector.shape_cast %294 : vector<1x1x1x32xf32> to vector<1x32xf32>
    %296 = vector.broadcast %295 : vector<1x32xf32> to vector<32x32xf32>
    %297 = arith.addf %293, %296 : vector<32x32xf32>
    %298 = arith.addf %204, %297 : vector<32x32xf32>
    %c0_135 = arith.constant 0 : index
    %c9 = arith.constant 9 : index
    %c0_136 = arith.constant 0 : index
    %c0_137 = arith.constant 0 : index
    %299 = vector.load %arg9[%c0_135, %c9, %c0_136, %c0_137] : memref<1x14x1x32xf32, #tpu.memory_space<vmem>>, vector<1x1x1x32xf32>
    %300 = vector.shape_cast %299 : vector<1x1x1x32xf32> to vector<1x32xf32>
    %c0_138 = arith.constant 0 : index
    %c10 = arith.constant 10 : index
    %c0_139 = arith.constant 0 : index
    %c0_140 = arith.constant 0 : index
    %301 = vector.load %arg9[%c0_138, %c10, %c0_139, %c0_140] : memref<1x14x1x32xf32, #tpu.memory_space<vmem>>, vector<1x1x1x32xf32>
    %302 = vector.shape_cast %301 : vector<1x1x1x32xf32> to vector<1x32xf32>
    %cst_141 = arith.constant dense<0.000000e+00> : vector<32xf32>
    %303 = vector.multi_reduction <add>, %298, %cst_141 [1] : vector<32x32xf32> to vector<32xf32>
    %304 = vector.shape_cast %303 : vector<32xf32> to vector<32x1xf32>
    %cst_142 = arith.constant 3.200000e+01 : f32
    %305 = vector.broadcast %cst_142 : f32 to vector<32x1xf32>
    %306 = arith.divf %304, %305 : vector<32x1xf32>
    %307 = vector.broadcast %306 : vector<32x1xf32> to vector<32x32xf32>
    %308 = arith.subf %298, %307 : vector<32x32xf32>
    %309 = arith.mulf %308, %308 : vector<32x32xf32>
    %cst_143 = arith.constant dense<0.000000e+00> : vector<32xf32>
    %310 = vector.multi_reduction <add>, %309, %cst_143 [1] : vector<32x32xf32> to vector<32xf32>
    %311 = vector.shape_cast %310 : vector<32xf32> to vector<32x1xf32>
    %cst_144 = arith.constant 3.200000e+01 : f32
    %312 = vector.broadcast %cst_144 : f32 to vector<32x1xf32>
    %313 = arith.divf %311, %312 : vector<32x1xf32>
    %314 = vector.broadcast %306 : vector<32x1xf32> to vector<32x32xf32>
    %315 = arith.subf %298, %314 : vector<32x32xf32>
    %cst_145 = arith.constant 9.99999996E-13 : f32
    %316 = vector.broadcast %cst_145 : f32 to vector<32x1xf32>
    %317 = arith.addf %313, %316 : vector<32x1xf32>
    %318 = math.rsqrt %317 : vector<32x1xf32>
    %319 = vector.broadcast %318 : vector<32x1xf32> to vector<32x32xf32>
    %320 = arith.mulf %315, %319 : vector<32x32xf32>
    %321 = vector.broadcast %300 : vector<1x32xf32> to vector<32x32xf32>
    %322 = arith.mulf %320, %321 : vector<32x32xf32>
    %323 = vector.broadcast %302 : vector<1x32xf32> to vector<32x32xf32>
    %324 = arith.addf %322, %323 : vector<32x32xf32>
    %c0_146 = arith.constant 0 : index
    %c1_147 = arith.constant 1 : index
    %c0_148 = arith.constant 0 : index
    %c0_149 = arith.constant 0 : index
    %325 = vector.load %arg6[%c0_146, %c1_147, %c0_148, %c0_149] : memref<1x2x32x64xf32, #tpu.memory_space<vmem>>, vector<1x1x32x64xf32>
    %326 = vector.shape_cast %325 : vector<1x1x32x64xf32> to vector<32x64xf32>
    %cst_150 = arith.constant dense<0.000000e+00> : vector<32x64xf32>
    %327 = tpu.matmul %324, %326, %cst_150 {dimension_numbers = #tpu.dot_dimension_numbers<[1], [0], [0], [1], [0, 0, 1, 1], [], []>} : vector<32x32xf32>, vector<32x64xf32>, vector<32x64xf32> -> vector<32x64xf32>
    %c0_151 = arith.constant 0 : index
    %c1_152 = arith.constant 1 : index
    %c0_153 = arith.constant 0 : index
    %c0_154 = arith.constant 0 : index
    %328 = vector.load %arg8[%c0_151, %c1_152, %c0_153, %c0_154] : memref<1x2x1x64xf32, #tpu.memory_space<vmem>>, vector<1x1x1x64xf32>
    %329 = vector.shape_cast %328 : vector<1x1x1x64xf32> to vector<1x64xf32>
    %330 = vector.broadcast %329 : vector<1x64xf32> to vector<32x64xf32>
    %331 = arith.addf %327, %330 : vector<32x64xf32>
    %332 = arith.mulf %331, %331 : vector<32x64xf32>
    %333 = arith.mulf %331, %332 : vector<32x64xf32>
    %cst_155 = arith.constant 4.471500e-02 : f32
    %334 = vector.broadcast %cst_155 : f32 to vector<32x64xf32>
    %335 = arith.mulf %334, %333 : vector<32x64xf32>
    %336 = arith.addf %331, %335 : vector<32x64xf32>
    %cst_156 = arith.constant 0.797884583 : f32
    %337 = vector.broadcast %cst_156 : f32 to vector<32x64xf32>
    %338 = arith.mulf %337, %336 : vector<32x64xf32>
    %339 = math.tanh %338 : vector<32x64xf32>
    %cst_157 = arith.constant 1.000000e+00 : f32
    %340 = vector.broadcast %cst_157 : f32 to vector<32x64xf32>
    %341 = arith.addf %340, %339 : vector<32x64xf32>
    %cst_158 = arith.constant 5.000000e-01 : f32
    %342 = vector.broadcast %cst_158 : f32 to vector<32x64xf32>
    %343 = arith.mulf %342, %341 : vector<32x64xf32>
    %344 = arith.mulf %331, %343 : vector<32x64xf32>
    %c0_159 = arith.constant 0 : index
    %c1_160 = arith.constant 1 : index
    %c0_161 = arith.constant 0 : index
    %c0_162 = arith.constant 0 : index
    %345 = vector.load %arg7[%c0_159, %c1_160, %c0_161, %c0_162] : memref<1x2x64x32xf32, #tpu.memory_space<vmem>>, vector<1x1x64x32xf32>
    %346 = vector.shape_cast %345 : vector<1x1x64x32xf32> to vector<64x32xf32>
    %cst_163 = arith.constant dense<0.000000e+00> : vector<32x32xf32>
    %347 = tpu.matmul %344, %346, %cst_163 {dimension_numbers = #tpu.dot_dimension_numbers<[1], [0], [0], [1], [0, 0, 1, 1], [], []>} : vector<32x64xf32>, vector<64x32xf32>, vector<32x32xf32> -> vector<32x32xf32>
    %c0_164 = arith.constant 0 : index
    %c11 = arith.constant 11 : index
    %c0_165 = arith.constant 0 : index
    %c0_166 = arith.constant 0 : index
    %348 = vector.load %arg9[%c0_164, %c11, %c0_165, %c0_166] : memref<1x14x1x32xf32, #tpu.memory_space<vmem>>, vector<1x1x1x32xf32>
    %349 = vector.shape_cast %348 : vector<1x1x1x32xf32> to vector<1x32xf32>
    %350 = vector.broadcast %349 : vector<1x32xf32> to vector<32x32xf32>
    %351 = arith.addf %347, %350 : vector<32x32xf32>
    %352 = arith.addf %324, %351 : vector<32x32xf32>
    %c0_167 = arith.constant 0 : index
    %c12 = arith.constant 12 : index
    %c0_168 = arith.constant 0 : index
    %c0_169 = arith.constant 0 : index
    %353 = vector.load %arg9[%c0_167, %c12, %c0_168, %c0_169] : memref<1x14x1x32xf32, #tpu.memory_space<vmem>>, vector<1x1x1x32xf32>
    %354 = vector.shape_cast %353 : vector<1x1x1x32xf32> to vector<1x32xf32>
    %c0_170 = arith.constant 0 : index
    %c13 = arith.constant 13 : index
    %c0_171 = arith.constant 0 : index
    %c0_172 = arith.constant 0 : index
    %355 = vector.load %arg9[%c0_170, %c13, %c0_171, %c0_172] : memref<1x14x1x32xf32, #tpu.memory_space<vmem>>, vector<1x1x1x32xf32>
    %356 = vector.shape_cast %355 : vector<1x1x1x32xf32> to vector<1x32xf32>
    %cst_173 = arith.constant dense<0.000000e+00> : vector<32xf32>
    %357 = vector.multi_reduction <add>, %352, %cst_173 [1] : vector<32x32xf32> to vector<32xf32>
    %358 = vector.shape_cast %357 : vector<32xf32> to vector<32x1xf32>
    %cst_174 = arith.constant 3.200000e+01 : f32
    %359 = vector.broadcast %cst_174 : f32 to vector<32x1xf32>
    %360 = arith.divf %358, %359 : vector<32x1xf32>
    %361 = vector.broadcast %360 : vector<32x1xf32> to vector<32x32xf32>
    %362 = arith.subf %352, %361 : vector<32x32xf32>
    %363 = arith.mulf %362, %362 : vector<32x32xf32>
    %cst_175 = arith.constant dense<0.000000e+00> : vector<32xf32>
    %364 = vector.multi_reduction <add>, %363, %cst_175 [1] : vector<32x32xf32> to vector<32xf32>
    %365 = vector.shape_cast %364 : vector<32xf32> to vector<32x1xf32>
    %cst_176 = arith.constant 3.200000e+01 : f32
    %366 = vector.broadcast %cst_176 : f32 to vector<32x1xf32>
    %367 = arith.divf %365, %366 : vector<32x1xf32>
    %368 = vector.broadcast %360 : vector<32x1xf32> to vector<32x32xf32>
    %369 = arith.subf %352, %368 : vector<32x32xf32>
    %cst_177 = arith.constant 9.99999996E-13 : f32
    %370 = vector.broadcast %cst_177 : f32 to vector<32x1xf32>
    %371 = arith.addf %367, %370 : vector<32x1xf32>
    %372 = math.rsqrt %371 : vector<32x1xf32>
    %373 = vector.broadcast %372 : vector<32x1xf32> to vector<32x32xf32>
    %374 = arith.mulf %369, %373 : vector<32x32xf32>
    %375 = vector.broadcast %354 : vector<1x32xf32> to vector<32x32xf32>
    %376 = arith.mulf %374, %375 : vector<32x32xf32>
    %377 = vector.broadcast %356 : vector<1x32xf32> to vector<32x32xf32>
    %378 = arith.addf %376, %377 : vector<32x32xf32>
    %379 = vector.shape_cast %378 : vector<32x32xf32> to vector<2x16x32xf32>
    %380 = vector.extract_strided_slice %379 {offsets = [0, 0, 0], sizes = [2, 1, 32], strides = [1, 1, 1]} : vector<2x16x32xf32> to vector<2x1x32xf32>
    %381 = vector.shape_cast %380 : vector<2x1x32xf32> to vector<2x32xf32>
    %c0_178 = arith.constant 0 : index
    %c0_179 = arith.constant 0 : index
    %c0_180 = arith.constant 0 : index
    %382 = vector.load %arg10[%c0_178, %c0_179, %c0_180] : memref<1x2x32xf32, #tpu.memory_space<vmem>>, vector<1x2x32xf32>
    %383 = vector.shape_cast %382 : vector<1x2x32xf32> to vector<2x32xf32>
    %384 = vector.shape_cast %381 : vector<2x32xf32> to vector<1x2x32xf32>
    tpu.vector_store %arg10[%c0_178, %c0_179, %c0_180], %384 {strides = array<i32>} : memref<1x2x32xf32, #tpu.memory_space<vmem>>, vector<1x2x32xf32>,
    return
  }
  func.func @transform_0(%arg0: i32) -> (i32, i32, i32, i32) {
    %c0_i32 = arith.constant 0 : i32
    %c0_i32_0 = arith.constant 0 : i32
    %c0_i32_1 = arith.constant 0 : i32
    %c0_i32_2 = arith.constant 0 : i32
    return %arg0, %c0_i32, %c0_i32_0, %c0_i32_1 : i32, i32, i32, i32
  }
  func.func @transform_1(%arg0: i32) -> (i32, i32, i32, i32) {
    %c0_i32 = arith.constant 0 : i32
    %c0_i32_0 = arith.constant 0 : i32
    %c0_i32_1 = arith.constant 0 : i32
    %c0_i32_2 = arith.constant 0 : i32
    return %arg0, %c0_i32, %c0_i32_0, %c0_i32_1 : i32, i32, i32, i32
  }
  func.func @transform_2(%arg0: i32) -> (i32, i32, i32, i32) {
    %c0_i32 = arith.constant 0 : i32
    %c0_i32_0 = arith.constant 0 : i32
    %c0_i32_1 = arith.constant 0 : i32
    %c0_i32_2 = arith.constant 0 : i32
    return %arg0, %c0_i32, %c0_i32_0, %c0_i32_1 : i32, i32, i32, i32
  }
  func.func @transform_3(%arg0: i32) -> (i32, i32, i32, i32) {
    %c0_i32 = arith.constant 0 : i32
    %c0_i32_0 = arith.constant 0 : i32
    %c0_i32_1 = arith.constant 0 : i32
    %c0_i32_2 = arith.constant 0 : i32
    return %arg0, %c0_i32, %c0_i32_0, %c0_i32_1 : i32, i32, i32, i32
  }
  func.func @transform_4(%arg0: i32) -> (i32, i32, i32, i32) {
    %c0_i32 = arith.constant 0 : i32
    %c0_i32_0 = arith.constant 0 : i32
    %c0_i32_1 = arith.constant 0 : i32
    %c0_i32_2 = arith.constant 0 : i32
    return %arg0, %c0_i32, %c0_i32_0, %c0_i32_1 : i32, i32, i32, i32
  }
  func.func @transform_5(%arg0: i32) -> (i32, i32, i32, i32) {
    %c0_i32 = arith.constant 0 : i32
    %c0_i32_0 = arith.constant 0 : i32
    %c0_i32_1 = arith.constant 0 : i32
    %c0_i32_2 = arith.constant 0 : i32
    return %arg0, %c0_i32, %c0_i32_0, %c0_i32_1 : i32, i32, i32, i32
  }
  func.func @transform_6(%arg0: i32) -> (i32, i32, i32, i32) {
    %c0_i32 = arith.constant 0 : i32
    %c0_i32_0 = arith.constant 0 : i32
    %c0_i32_1 = arith.constant 0 : i32
    %c0_i32_2 = arith.constant 0 : i32
    return %arg0, %c0_i32, %c0_i32_0, %c0_i32_1 : i32, i32, i32, i32
  }
  func.func @transform_7(%arg0: i32) -> (i32, i32, i32, i32) {
    %c0_i32 = arith.constant 0 : i32
    %c0_i32_0 = arith.constant 0 : i32
    %c0_i32_1 = arith.constant 0 : i32
    %c0_i32_2 = arith.constant 0 : i32
    return %arg0, %c0_i32, %c0_i32_0, %c0_i32_1 : i32, i32, i32, i32
  }
  func.func @transform_8(%arg0: i32) -> (i32, i32, i32, i32) {
    %c0_i32 = arith.constant 0 : i32
    %c0_i32_0 = arith.constant 0 : i32
    %c0_i32_1 = arith.constant 0 : i32
    %c0_i32_2 = arith.constant 0 : i32
    return %arg0, %c0_i32, %c0_i32_0, %c0_i32_1 : i32, i32, i32, i32
  }
  func.func @transform_9(%arg0: i32) -> (i32, i32, i32) {
    %c0_i32 = arith.constant 0 : i32
    %c0_i32_0 = arith.constant 0 : i32
    %c0_i32_1 = arith.constant 0 : i32
    return %arg0, %c0_i32, %c0_i32_0 : i32, i32, i32
  }
}

</mosaic_0001>

<llo_original>
// kernel: dpr_combined_forward.1
$region0: #{dpr_combined_forward.1}
  #allocation0 [shape = 'u32[]', space=smem, size = 0x4, offset = 0x4, fixed_abs, tag = 'smem constant byte address 0x4 - core index']
  #allocation1 [shape = 'u32[144,128]{1,0:T(1,128)}', space=vmem, size = 0x12000, scoped, tag = 'internal scratch']
  %s0 = inlined_call_operand.vmem [shape: f32[2,2,16,32], index: 0, kind: input, shape index: {}]
  %s1 = inlined_call_operand.vmem [shape: f32[2,2,1,16], index: 1, kind: input, shape index: {}]
  %s2 = inlined_call_operand.vmem [shape: f32[2,2,32,96], index: 2, kind: input, shape index: {}]
  %s3 = inlined_call_operand.vmem [shape: f32[2,2,1,96], index: 3, kind: input, shape index: {}]
  %s4 = inlined_call_operand.vmem [shape: f32[2,2,32,32], index: 4, kind: input, shape index: {}]
  %s5 = inlined_call_operand.vmem [shape: f32[2,2,32,64], index: 5, kind: input, shape index: {}]
  %s6 = inlined_call_operand.vmem [shape: f32[2,2,64,32], index: 6, kind: input, shape index: {}]
  %s7 = inlined_call_operand.vmem [shape: f32[2,2,1,64], index: 7, kind: input, shape index: {}]
  %s8 = inlined_call_operand.vmem [shape: f32[2,14,1,32], index: 8, kind: input, shape index: {}]
  %s9 = inlined_call_operand.vmem [shape: f32[2,2,32], index: 9, kind: output, shape index: {}]
  %s10 = sld [smem:[#allocation0]]
  $region69: #{dpr_combined_forward.1} parent=0
    _
  %s12 = ssub.s32 1, %s10
  %s13 = scalar_select 0, %s12, %s10
  loop: start=0, step=1, limit=4
  $region2: #{dpr_combined_forward.1} parent=0 // loop_pre_header
    _
  $region3: #{dpr_combined_forward.1} parent=0 // loop_header
    %s15 = sphi 0, %s19
    %p16 = scmp.ge.s32.totalorder %s15, 4
    %s25 = sphi 0, %s27
    %s28 = sphi 0, %s25
    %s29 = sphi 0, %s28
    %s45 = sphi 0, %s29
    %s51 = sphi 0, %s53
    %s54 = sphi 0, %s51
    %s55 = sphi 0, %s54
    %s71 = sphi 0, %s55
    %s77 = sphi 0, %s79
    %s80 = sphi 0, %s77
    %s81 = sphi 0, %s80
    %s97 = sphi 0, %s81
    %s103 = sphi 0, %s105
    %s106 = sphi 0, %s103
    %s107 = sphi 0, %s106
    %s123 = sphi 0, %s107
    %s129 = sphi 0, %s131
    %s132 = sphi 0, %s129
    %s133 = sphi 0, %s132
    %s149 = sphi 0, %s133
    %s155 = sphi 0, %s157
    %s158 = sphi 0, %s155
    %s159 = sphi 0, %s158
    %s175 = sphi 0, %s159
    %s181 = sphi 0, %s183
    %s184 = sphi 0, %s181
    %s185 = sphi 0, %s184
    %s201 = sphi 0, %s185
    %s207 = sphi 0, %s209
    %s210 = sphi 0, %s207
    %s211 = sphi 0, %s210
    %s227 = sphi 0, %s211
    %s233 = sphi 0, %s235
    %s236 = sphi 0, %s233
    %s237 = sphi 0, %s236
    %s253 = sphi 0, %s237
    %s259 = sphi 0, %s261
    %s262 = sphi 0, %s259
    %s263 = sphi 0, %s262
    %s279 = sphi 0, %s263
  $region4: #{dpr_combined_forward.1} parent=0 // loop_header_branch
    %18 = sbr.rel (%p16) target = $region8
  $region5: #{dpr_combined_forward.1} parent=0 // loop_body
    %s20 = ssub.s32 %s15, 1
    %s21 = ssub.s32 %s15, 2
    %s22 = sadd.s32 %s15, 1
    %s23 = ssub.s32 %s15, %s22
    %p24 = scmp.eq.s32.totalorder %s23, 0
    %s26 = sadd.s32 %s25, 1
    %s27 = scalar_select %p24, %s25, %s26
    %p30 = pneg %p24
    %p31 = scmp.eq.s32.totalorder %s15, 1
    %p32 = por %p30, %p31
    %p33 = scmp.ne.s32.totalorder %s25, %s28
    %p34 = scmp.eq.s32.totalorder %s15, 0
    %p35 = por %p33, %p34
    %p36 = scmp.ne.s32.totalorder %s25, %s28
    %p37 = scmp.eq.s32.totalorder %s20, 1
    %p38 = por %p36, %p37
    %p39 = scmp.ne.s32.totalorder %s28, %s29
    %p40 = scmp.eq.s32.totalorder %s20, 0
    %p41 = por %p39, %p40
    %p42 = scmp.ne.s32.totalorder %s28, %s29
    %p43 = scmp.eq.s32.totalorder %s21, 1
    %p44 = por %p42, %p43
    %p46 = scmp.ne.s32.totalorder %s29, %s45
    %p47 = scmp.eq.s32.totalorder %s21, 0
    %p48 = por %p46, %p47
    %s49 = ssub.s32 %s15, %s22
    %p50 = scmp.eq.s32.totalorder %s49, 0
    %s52 = sadd.s32 %s51, 1
    %s53 = scalar_select %p50, %s51, %s52
    %p56 = pneg %p50
    %p57 = scmp.eq.s32.totalorder %s15, 1
    %p58 = por %p56, %p57
    %p59 = scmp.ne.s32.totalorder %s51, %s54
    %p60 = scmp.eq.s32.totalorder %s15, 0
    %p61 = por %p59, %p60
    %p62 = scmp.ne.s32.totalorder %s51, %s54
    %p63 = scmp.eq.s32.totalorder %s20, 1
    %p64 = por %p62, %p63
    %p65 = scmp.ne.s32.totalorder %s54, %s55
    %p66 = scmp.eq.s32.totalorder %s20, 0
    %p67 = por %p65, %p66
    %p68 = scmp.ne.s32.totalorder %s54, %s55
    %p69 = scmp.eq.s32.totalorder %s21, 1
    %p70 = por %p68, %p69
    %p72 = scmp.ne.s32.totalorder %s55, %s71
    %p73 = scmp.eq.s32.totalorder %s21, 0
    %p74 = por %p72, %p73
    %s75 = ssub.s32 %s15, %s22
    %p76 = scmp.eq.s32.totalorder %s75, 0
    %s78 = sadd.s32 %s77, 1
    %s79 = scalar_select %p76, %s77, %s78
    %p82 = pneg %p76
    %p83 = scmp.eq.s32.totalorder %s15, 1
    %p84 = por %p82, %p83
    %p85 = scmp.ne.s32.totalorder %s77, %s80
    %p86 = scmp.eq.s32.totalorder %s15, 0
    %p87 = por %p85, %p86
    %p88 = scmp.ne.s32.totalorder %s77, %s80
    %p89 = scmp.eq.s32.totalorder %s20, 1
    %p90 = por %p88, %p89
    %p91 = scmp.ne.s32.totalorder %s80, %s81
    %p92 = scmp.eq.s32.totalorder %s20, 0
    %p93 = por %p91, %p92
    %p94 = scmp.ne.s32.totalorder %s80, %s81
    %p95 = scmp.eq.s32.totalorder %s21, 1
    %p96 = por %p94, %p95
    %p98 = scmp.ne.s32.totalorder %s81, %s97
    %p99 = scmp.eq.s32.totalorder %s21, 0
    %p100 = por %p98, %p99
    %s101 = ssub.s32 %s15, %s22
    %p102 = scmp.eq.s32.totalorder %s101, 0
    %s104 = sadd.s32 %s103, 1
    %s105 = scalar_select %p102, %s103, %s104
    %p108 = pneg %p102
    %p109 = scmp.eq.s32.totalorder %s15, 1
    %p110 = por %p108, %p109
    %p111 = scmp.ne.s32.totalorder %s103, %s106
    %p112 = scmp.eq.s32.totalorder %s15, 0
    %p113 = por %p111, %p112
    %p114 = scmp.ne.s32.totalorder %s103, %s106
    %p115 = scmp.eq.s32.totalorder %s20, 1
    %p116 = por %p114, %p115
    %p117 = scmp.ne.s32.totalorder %s106, %s107
    %p118 = scmp.eq.s32.totalorder %s20, 0
    %p119 = por %p117, %p118
    %p120 = scmp.ne.s32.totalorder %s106, %s107
    %p121 = scmp.eq.s32.totalorder %s21, 1
    %p122 = por %p120, %p121
    %p124 = scmp.ne.s32.totalorder %s107, %s123
    %p125 = scmp.eq.s32.totalorder %s21, 0
    %p126 = por %p124, %p125
    %s127 = ssub.s32 %s15, %s22
    %p128 = scmp.eq.s32.totalorder %s127, 0
    %s130 = sadd.s32 %s129, 1
    %s131 = scalar_select %p128, %s129, %s130
    %p134 = pneg %p128
    %p135 = scmp.eq.s32.totalorder %s15, 1
    %p136 = por %p134, %p135
    %p137 = scmp.ne.s32.totalorder %s129, %s132
    %p138 = scmp.eq.s32.totalorder %s15, 0
    %p139 = por %p137, %p138
    %p140 = scmp.ne.s32.totalorder %s129, %s132
    %p141 = scmp.eq.s32.totalorder %s20, 1
    %p142 = por %p140, %p141
    %p143 = scmp.ne.s32.totalorder %s132, %s133
    %p144 = scmp.eq.s32.totalorder %s20, 0
    %p145 = por %p143, %p144
    %p146 = scmp.ne.s32.totalorder %s132, %s133
    %p147 = scmp.eq.s32.totalorder %s21, 1
    %p148 = por %p146, %p147
    %p150 = scmp.ne.s32.totalorder %s133, %s149
    %p151 = scmp.eq.s32.totalorder %s21, 0
    %p152 = por %p150, %p151
    %s153 = ssub.s32 %s15, %s22
    %p154 = scmp.eq.s32.totalorder %s153, 0
    %s156 = sadd.s32 %s155, 1
    %s157 = scalar_select %p154, %s155, %s156
    %p160 = pneg %p154
    %p161 = scmp.eq.s32.totalorder %s15, 1
    %p162 = por %p160, %p161
    %p163 = scmp.ne.s32.totalorder %s155, %s158
    %p164 = scmp.eq.s32.totalorder %s15, 0
    %p165 = por %p163, %p164
    %p166 = scmp.ne.s32.totalorder %s155, %s158
    %p167 = scmp.eq.s32.totalorder %s20, 1
    %p168 = por %p166, %p167
    %p169 = scmp.ne.s32.totalorder %s158, %s159
    %p170 = scmp.eq.s32.totalorder %s20, 0
    %p171 = por %p169, %p170
    %p172 = scmp.ne.s32.totalorder %s158, %s159
    %p173 = scmp.eq.s32.totalorder %s21, 1
    %p174 = por %p172, %p173
    %p176 = scmp.ne.s32.totalorder %s159, %s175
    %p177 = scmp.eq.s32.totalorder %s21, 0
    %p178 = por %p176, %p177
    %s179 = ssub.s32 %s15, %s22
    %p180 = scmp.eq.s32.totalorder %s179, 0
    %s182 = sadd.s32 %s181, 1
    %s183 = scalar_select %p180, %s181, %s182
    %p186 = pneg %p180
    %p187 = scmp.eq.s32.totalorder %s15, 1
    %p188 = por %p186, %p187
    %p189 = scmp.ne.s32.totalorder %s181, %s184
    %p190 = scmp.eq.s32.totalorder %s15, 0
    %p191 = por %p189, %p190
    %p192 = scmp.ne.s32.totalorder %s181, %s184
    %p193 = scmp.eq.s32.totalorder %s20, 1
    %p194 = por %p192, %p193
    %p195 = scmp.ne.s32.totalorder %s184, %s185
    %p196 = scmp.eq.s32.totalorder %s20, 0
    %p197 = por %p195, %p196
    %p198 = scmp.ne.s32.totalorder %s184, %s185
    %p199 = scmp.eq.s32.totalorder %s21, 1
    %p200 = por %p198, %p199
    %p202 = scmp.ne.s32.totalorder %s185, %s201
    %p203 = scmp.eq.s32.totalorder %s21, 0
    %p204 = por %p202, %p203
    %s205 = ssub.s32 %s15, %s22
    %p206 = scmp.eq.s32.totalorder %s205, 0
    %s208 = sadd.s32 %s207, 1
    %s209 = scalar_select %p206, %s207, %s208
    %p212 = pneg %p206
    %p213 = scmp.eq.s32.totalorder %s15, 1
    %p214 = por %p212, %p213
    %p215 = scmp.ne.s32.totalorder %s207, %s210
    %p216 = scmp.eq.s32.totalorder %s15, 0
    %p217 = por %p215, %p216
    %p218 = scmp.ne.s32.totalorder %s207, %s210
    %p219 = scmp.eq.s32.totalorder %s20, 1
    %p220 = por %p218, %p219
    %p221 = scmp.ne.s32.totalorder %s210, %s211
    %p222 = scmp.eq.s32.totalorder %s20, 0
    %p223 = por %p221, %p222
    %p224 = scmp.ne.s32.totalorder %s210, %s211
    %p225 = scmp.eq.s32.totalorder %s21, 1
    %p226 = por %p224, %p225
    %p228 = scmp.ne.s32.totalorder %s211, %s227
    %p229 = scmp.eq.s32.totalorder %s21, 0
    %p230 = por %p228, %p229
    %s231 = ssub.s32 %s15, %s22
    %p232 = scmp.eq.s32.totalorder %s231, 0
    %s234 = sadd.s32 %s233, 1
    %s235 = scalar_select %p232, %s233, %s234
    %p238 = pneg %p232
    %p239 = scmp.eq.s32.totalorder %s15, 1
    %p240 = por %p238, %p239
    %p241 = scmp.ne.s32.totalorder %s233, %s236
    %p242 = scmp.eq.s32.totalorder %s15, 0
    %p243 = por %p241, %p242
    %p244 = scmp.ne.s32.totalorder %s233, %s236
    %p245 = scmp.eq.s32.totalorder %s20, 1
    %p246 = por %p244, %p245
    %p247 = scmp.ne.s32.totalorder %s236, %s237
    %p248 = scmp.eq.s32.totalorder %s20, 0
    %p249 = por %p247, %p248
    %p250 = scmp.ne.s32.totalorder %s236, %s237
    %p251 = scmp.eq.s32.totalorder %s21, 1
    %p252 = por %p250, %p251
    %p254 = scmp.ne.s32.totalorder %s237, %s253
    %p255 = scmp.eq.s32.totalorder %s21, 0
    %p256 = por %p254, %p255
    %s257 = ssub.s32 %s15, %s22
    %p258 = scmp.eq.s32.totalorder %s257, 0
    %s260 = sadd.s32 %s259, 1
    %s261 = scalar_select %p258, %s259, %s260
    %p264 = pneg %p258
    %p265 = scmp.eq.s32.totalorder %s15, 1
    %p266 = por %p264, %p265
    %p267 = scmp.ne.s32.totalorder %s259, %s262
    %p268 = scmp.eq.s32.totalorder %s15, 0
    %p269 = por %p267, %p268
    %p270 = scmp.ne.s32.totalorder %s259, %s262
    %p271 = scmp.eq.s32.totalorder %s20, 1
    %p272 = por %p270, %p271
    %p273 = scmp.ne.s32.totalorder %s262, %s263
    %p274 = scmp.eq.s32.totalorder %s20, 0
    %p275 = por %p273, %p274
    %p276 = scmp.ne.s32.totalorder %s262, %s263
    %p277 = scmp.eq.s32.totalorder %s21, 1
    %p278 = por %p276, %p277
    %p280 = scmp.ne.s32.totalorder %s263, %s279
    %p281 = scmp.eq.s32.totalorder %s21, 0
    %p282 = por %p280, %p281
    %p283 = scmp.le.s32.totalorder 1, %s15
    %p284 = scmp.lt.s32.totalorder %s15, 3
    %p285 = pnand %p283, %p284
    %p286 = pneg %p285
    // Predicated region
    $region9: #{dpr_combined_forward.1} parent=5 // pred_check
      _
    $region10: #{dpr_combined_forward.1} parent=5 // pred_check_branch
      %288 = sbr.rel (%p285) target = $region12
    $region11: #{dpr_combined_forward.1} parent=5 // pred_region
      %s289 = ssub.s32 %s15, 1
    $region12: #{dpr_combined_forward.1} parent=5 // pred_fallthru
      _
    %p290 = scmp.lt.s32.totalorder %s15, 2
    // Predicated region
    $region13: #{dpr_combined_forward.1} parent=5 // pred_check
      %p291 = pneg %p290
    $region14: #{dpr_combined_forward.1} parent=5 // pred_check_branch
      %293 = sbr.rel (%p291) target = $region16
    $region15: #{dpr_combined_forward.1} parent=5 // pred_region
      // Predicated region
      $region17: #{dpr_combined_forward.1} parent=15 // pred_check
        %p294 = pneg %p35
      $region18: #{dpr_combined_forward.1} parent=15 // pred_check_branch
        %296 = sbr.rel (%p294) target = $region20
      $region19: #{dpr_combined_forward.1} parent=15 // pred_region
        %p297 = scmp.lt.s32.totalorder %s15, 1
        %s298 = scalar_select %p297, %s15, 1
        %s299 = smul.addr %s298, 4
        %s300 = smul.addr %s299, 8
        %s301 = scalar_lea.vmem %s0, %s300
      $region20: #{dpr_combined_forward.1} parent=15 // pred_fallthru
        _
      // Predicated region
      $region21: #{dpr_combined_forward.1} parent=15 // pred_check
        %p302 = pneg %p61
      $region22: #{dpr_combined_forward.1} parent=15 // pred_check_branch
        %304 = sbr.rel (%p302) target = $region24
      $region23: #{dpr_combined_forward.1} parent=15 // pred_region
        %p305 = scmp.lt.s32.totalorder %s15, 1
        %s306 = scalar_select %p305, %s15, 1
        %s307 = smul.addr %s306, 2
        %s308 = scalar_lea.vmem %s1, %s307
      $region24: #{dpr_combined_forward.1} parent=15 // pred_fallthru
        _
      // Predicated region
      $region25: #{dpr_combined_forward.1} parent=15 // pred_check
        %p309 = pneg %p87
      $region26: #{dpr_combined_forward.1} parent=15 // pred_check_branch
        %311 = sbr.rel (%p309) target = $region28
      $region27: #{dpr_combined_forward.1} parent=15 // pred_region
        %p312 = scmp.lt.s32.totalorder %s15, 1
        %s313 = scalar_select %p312, %s15, 1
        %s314 = smul.addr %s313, 8
        %s315 = smul.addr %s314, 8
        %s316 = scalar_lea.vmem %s2, %s315
      $region28: #{dpr_combined_forward.1} parent=15 // pred_fallthru
        _
      // Predicated region
      $region29: #{dpr_combined_forward.1} parent=15 // pred_check
        %p317 = pneg %p113
      $region30: #{dpr_combined_forward.1} parent=15 // pred_check_branch
        %319 = sbr.rel (%p317) target = $region32
      $region31: #{dpr_combined_forward.1} parent=15 // pred_region
        %p320 = scmp.lt.s32.totalorder %s15, 1
        %s321 = scalar_select %p320, %s15, 1
        %s322 = smul.addr %s321, 2
        %s323 = scalar_lea.vmem %s3, %s322
      $region32: #{dpr_combined_forward.1} parent=15 // pred_fallthru
        _
      // Predicated region
      $region33: #{dpr_combined_forward.1} parent=15 // pred_check
        %p324 = pneg %p139
      $region34: #{dpr_combined_forward.1} parent=15 // pred_check_branch
        %326 = sbr.rel (%p324) target = $region36
      $region35: #{dpr_combined_forward.1} parent=15 // pred_region
        %p327 = scmp.lt.s32.totalorder %s15, 1
        %s328 = scalar_select %p327, %s15, 1
        %s329 = smul.addr %s328, 8
        %s330 = smul.addr %s329, 8
        %s331 = scalar_lea.vmem %s4, %s330
      $region36: #{dpr_combined_forward.1} parent=15 // pred_fallthru
        _
      // Predicated region
      $region37: #{dpr_combined_forward.1} parent=15 // pred_check
        %p332 = pneg %p165
      $region38: #{dpr_combined_forward.1} parent=15 // pred_check_branch
        %334 = sbr.rel (%p332) target = $region40
      $region39: #{dpr_combined_forward.1} parent=15 // pred_region
        %p335 = scmp.lt.s32.totalorder %s15, 1
        %s336 = scalar_select %p335, %s15, 1
        %s337 = smul.addr %s336, 8
        %s338 = smul.addr %s337, 8
        %s339 = scalar_lea.vmem %s5, %s338
      $region40: #{dpr_combined_forward.1} parent=15 // pred_fallthru
        _
      // Predicated region
      $region41: #{dpr_combined_forward.1} parent=15 // pred_check
        %p340 = pneg %p191
      $region42: #{dpr_combined_forward.1} parent=15 // pred_check_branch
        %342 = sbr.rel (%p340) target = $region44
      $region43: #{dpr_combined_forward.1} parent=15 // pred_region
        %p343 = scmp.lt.s32.totalorder %s15, 1
        %s344 = scalar_select %p343, %s15, 1
        %s345 = smul.addr %s344, 16
        %s346 = smul.addr %s345, 8
        %s347 = scalar_lea.vmem %s6, %s346
      $region44: #{dpr_combined_forward.1} parent=15 // pred_fallthru
        _
      // Predicated region
      $region45: #{dpr_combined_forward.1} parent=15 // pred_check
        %p348 = pneg %p217
      $region46: #{dpr_combined_forward.1} parent=15 // pred_check_branch
        %350 = sbr.rel (%p348) target = $region48
      $region47: #{dpr_combined_forward.1} parent=15 // pred_region
        %p351 = scmp.lt.s32.totalorder %s15, 1
        %s352 = scalar_select %p351, %s15, 1
        %s353 = smul.addr %s352, 2
        %s354 = scalar_lea.vmem %s7, %s353
      $region48: #{dpr_combined_forward.1} parent=15 // pred_fallthru
        _
      // Predicated region
      $region49: #{dpr_combined_forward.1} parent=15 // pred_check
        %p355 = pneg %p243
      $region50: #{dpr_combined_forward.1} parent=15 // pred_check_branch
        %357 = sbr.rel (%p355) target = $region52
      $region51: #{dpr_combined_forward.1} parent=15 // pred_region
        %p358 = scmp.lt.s32.totalorder %s15, 1
        %s359 = scalar_select %p358, %s15, 1
        %s360 = smul.addr %s359, 14
        %s361 = scalar_lea.vmem %s8, %s360
      $region52: #{dpr_combined_forward.1} parent=15 // pred_fallthru
        _
    $region16: #{dpr_combined_forward.1} parent=5 // pred_fallthru
      _
    %p362 = scmp.le.s32.totalorder 1, %s15
    %p363 = scmp.lt.s32.totalorder %s15, 3
    %p364 = pnand %p362, %p363
    %p365 = pneg %p364
    // Predicated region
    $region53: #{dpr_combined_forward.1} parent=5 // pred_check
      _
    $region54: #{dpr_combined_forward.1} parent=5 // pred_check_branch
      %367 = sbr.rel (%p364) target = $region56
    $region55: #{dpr_combined_forward.1} parent=5 // pred_region
      %s368 = ssub.s32 %s15, 1
      %p369 = scmp.lt.s32.totalorder %s20, 1
      %s370 = scalar_select %p369, %s20, 1
      %s371 = smul.addr %s370, 4
      %s372 = smul.addr %s371, 8
      %s373 = scalar_lea.vmem %s0, %s372
      %p374 = pneg %p41
      %p375 = pneg %p38
      %p376 = scmp.lt.s32.totalorder %s20, 1
      %s377 = scalar_select %p376, %s20, 1
      %s378 = smul.addr %s377, 2
      %s379 = scalar_lea.vmem %s1, %s378
      %p380 = pneg %p67
      %p381 = pneg %p64
      %p382 = scmp.lt.s32.totalorder %s20, 1
      %s383 = scalar_select %p382, %s20, 1
      %s384 = smul.addr %s383, 8
      %s385 = smul.addr %s384, 8
      %s386 = scalar_lea.vmem %s2, %s385
      %p387 = pneg %p93
      %p388 = pneg %p90
      %p389 = scmp.lt.s32.totalorder %s20, 1
      %s390 = scalar_select %p389, %s20, 1
      %s391 = smul.addr %s390, 2
      %s392 = scalar_lea.vmem %s3, %s391
      %p393 = pneg %p119
      %p394 = pneg %p116
      %p395 = scmp.lt.s32.totalorder %s20, 1
      %s396 = scalar_select %p395, %s20, 1
      %s397 = smul.addr %s396, 8
      %s398 = smul.addr %s397, 8
      %s399 = scalar_lea.vmem %s4, %s398
      %p400 = pneg %p145
      %p401 = pneg %p142
      %p402 = scmp.lt.s32.totalorder %s20, 1
      %s403 = scalar_select %p402, %s20, 1
      %s404 = smul.addr %s403, 8
      %s405 = smul.addr %s404, 8
      %s406 = scalar_lea.vmem %s5, %s405
      %p407 = pneg %p171
      %p408 = pneg %p168
      %p409 = scmp.lt.s32.totalorder %s20, 1
      %s410 = scalar_select %p409, %s20, 1
      %s411 = smul.addr %s410, 16
      %s412 = smul.addr %s411, 8
      %s413 = scalar_lea.vmem %s6, %s412
      %p414 = pneg %p197
      %p415 = pneg %p194
      %p416 = scmp.lt.s32.totalorder %s20, 1
      %s417 = scalar_select %p416, %s20, 1
      %s418 = smul.addr %s417, 2
      %s419 = scalar_lea.vmem %s7, %s418
      %p420 = pneg %p223
      %p421 = pneg %p220
      %p422 = scmp.lt.s32.totalorder %s20, 1
      %s423 = scalar_select %p422, %s20, 1
      %s424 = smul.addr %s423, 14
      %s425 = scalar_lea.vmem %s8, %s424
      %p426 = pneg %p249
      %p427 = pneg %p246
      %p428 = pneg %p275
      %p429 = pneg %p272
      %p430 = scmp.lt.s32.totalorder %s20, 1
      %s431 = scalar_select %p430, %s20, 1
      %s432 = smul.addr %s431, 2
      %s433 = scalar_lea.vmem %s9, %s432
      %p434 = scmp.lt.s32.totalorder %s20, 1
      %s435 = scalar_select %p434, %s20, 1
      %s436 = smul.addr %s435, 4
      %s437 = smul.addr %s436, 8
      %s438 = scalar_lea.vmem %s0, %s437
      %p439 = scmp.lt.s32.totalorder %s20, 1
      %s440 = scalar_select %p439, %s20, 1
      %s441 = smul.addr %s440, 2
      %s442 = scalar_lea.vmem %s1, %s441
      %p443 = scmp.lt.s32.totalorder %s20, 1
      %s444 = scalar_select %p443, %s20, 1
      %s445 = smul.addr %s444, 8
      %s446 = smul.addr %s445, 8
      %s447 = scalar_lea.vmem %s2, %s446
      %p448 = scmp.lt.s32.totalorder %s20, 1
      %s449 = scalar_select %p448, %s20, 1
      %s450 = smul.addr %s449, 2
      %s451 = scalar_lea.vmem %s3, %s450
      %p452 = scmp.lt.s32.totalorder %s20, 1
      %s453 = scalar_select %p452, %s20, 1
      %s454 = smul.addr %s453, 8
      %s455 = smul.addr %s454, 8
      %s456 = scalar_lea.vmem %s4, %s455
      %p457 = scmp.lt.s32.totalorder %s20, 1
      %s458 = scalar_select %p457, %s20, 1
      %s459 = smul.addr %s458, 8
      %s460 = smul.addr %s459, 8
      %s461 = scalar_lea.vmem %s5, %s460
      %p462 = scmp.lt.s32.totalorder %s20, 1
      %s463 = scalar_select %p462, %s20, 1
      %s464 = smul.addr %s463, 16
      %s465 = smul.addr %s464, 8
      %s466 = scalar_lea.vmem %s6, %s465
      %p467 = scmp.lt.s32.totalorder %s20, 1
      %s468 = scalar_select %p467, %s20, 1
      %s469 = smul.addr %s468, 2
      %s470 = scalar_lea.vmem %s7, %s469
      %p471 = scmp.lt.s32.totalorder %s20, 1
      %s472 = scalar_select %p471, %s20, 1
      %s473 = smul.addr %s472, 14
      %s474 = scalar_lea.vmem %s8, %s473
      %p475 = scmp.lt.s32.totalorder %s20, 1
      %s476 = scalar_select %p475, %s20, 1
      %s477 = smul.addr %s476, 2
      %s478 = scalar_lea.vmem %s9, %s477
      %v479 = vld [vmem:[%s438] sm:$0xff]
      %v480 = vld [vmem:[%s438 + $0x8] sm:$0xff]
      %v481 = vld [vmem:[%s438 + $0x10] sm:$0xff]
      %v482 = vld [vmem:[%s438 + $0x18] sm:$0xff]
      %v483 = vld [vmem:[%s474] sm:$0x1]
      %s484 = scalar_lea.vmem %s474, 1
      %v485 = vld [vmem:[%s484] sm:$0x1]
      %vm486 = vcmask 261120
      %v487 = vsel %vm486, %v479, 0.0
      %488 = vadd.xlane.f32.xlu0 %v487
      %v489 = vpop.xlane.xlu0 %488
      %v490 = vsel %vm486, %v480, 0.0
      %491 = vadd.xlane.f32.xlu0 %v490
      %v492 = vpop.xlane.xlu0 %491
      %v493 = vsel %vm486, %v481, 0.0
      %494 = vadd.xlane.f32.xlu0 %v493
      %v495 = vpop.xlane.xlu0 %494
      %v496 = vsel %vm486, %v482, 0.0
      %497 = vadd.xlane.f32.xlu0 %v496
      %v498 = vpop.xlane.xlu0 %497
      %v499 = vrcp.pop 32.0
      %v500 = vmul.f32 %v489, %v499
      %v501 = vmul.f32 %v492, %v499
      %v502 = vmul.f32 %v495, %v499
      %v503 = vmul.f32 %v498, %v499
      %v504 = vsub.f32 %v479, %v500
      %v505 = vsub.f32 %v480, %v501
      %v506 = vsub.f32 %v481, %v502
      %v507 = vsub.f32 %v482, %v503
      %v508 = vmul.f32 %v504, %v504
      %v509 = vmul.f32 %v505, %v505
      %v510 = vmul.f32 %v506, %v506
      %v511 = vmul.f32 %v507, %v507
      %v512 = vsel %vm486, %v508, 0.0
      %513 = vadd.xlane.f32.xlu0 %v512
      %v514 = vpop.xlane.xlu0 %513
      %v515 = vsel %vm486, %v509, 0.0
      %516 = vadd.xlane.f32.xlu0 %v515
      %v517 = vpop.xlane.xlu0 %516
      %v518 = vsel %vm486, %v510, 0.0
      %519 = vadd.xlane.f32.xlu0 %v518
      %v520 = vpop.xlane.xlu0 %519
      %v521 = vsel %vm486, %v511, 0.0
      %522 = vadd.xlane.f32.xlu0 %v521
      %v523 = vpop.xlane.xlu0 %522
      %v524 = vmul.f32 %v514, %v499
      %v525 = vmul.f32 %v517, %v499
      %v526 = vmul.f32 %v520, %v499
      %v527 = vmul.f32 %v523, %v499
      %v528 = vadd.f32 %v524, 1e-12
      %v529 = vadd.f32 %v525, 1e-12
      %v530 = vadd.f32 %v526, 1e-12
      %v531 = vadd.f32 %v527, 1e-12
      %v532 = vrsqrt.pop %v528
      %v533 = vrsqrt.pop %v529
      %v534 = vrsqrt.pop %v530
      %v535 = vrsqrt.pop %v531
      %v536 = vmul.f32 %v504, %v532
      %v537 = vmul.f32 %v505, %v533
      %v538 = vmul.f32 %v506, %v534
      %v539 = vmul.f32 %v507, %v535
      %v541 = vlaneseq
      %v542 = vshrl.u32 %v541, 7
      %v543 = vsub.s32 0, %v542
      %v544 = vrot.slane %v483, %v543
      %v546 = vmul.f32 %v536, %v544
      %v547 = vmul.f32 %v537, %v544
      %v548 = vmul.f32 %v538, %v544
      %v549 = vmul.f32 %v539, %v544
      %v551 = vlaneseq
      %v552 = vshrl.u32 %v551, 7
      %v553 = vsub.s32 0, %v552
      %v554 = vrot.slane %v485, %v553
      %v556 = vadd.f32 %v546, %v554
      %v557 = vadd.f32 %v547, %v554
      %v558 = vadd.f32 %v548, %v554
      %v559 = vadd.f32 %v549, %v554
      %v560 = vld [vmem:[%s442] sm:$0x1]
      %v561 = vld [vmem:[%s442 + $0x1] sm:$0x1]
      %v562 = vld [vmem:[%s447] sm:$0xff]
      %v563 = vld [vmem:[%s447 + $0x8] sm:$0xff]
      %v564 = vld [vmem:[%s447 + $0x10] sm:$0xff]
      %v565 = vld [vmem:[%s447 + $0x18] sm:$0xff]
      %v566 = vld [vmem:[%s451] sm:$0x1]
      %v568 = vlaneseq
      %v569 = vshrl.u32 %v568, 7
      %v570 = vsub.s32 0, %v569
      %v571 = vrot.slane %v566, %v570
      %v574 = vsel %vm486, %v556, 0
      %v577 = vsel %vm486, %v557, 0
      %v580 = vsel %vm486, %v558, 0
      %v583 = vsel %vm486, %v559, 0
      %585 = vmatprep.subr.mxu0 0.0
      %586 = vmatpush1.msra.mxu0 0.0
      %587 = vmatprep.subr.mxu0 0.0
      %588 = vmatpush1.msra.mxu0 0.0
      %589 = vmatprep.subr.mxu0 0.0
      %590 = vmatpush1.msra.mxu0 0.0
      %591 = vmatprep.subr.mxu0 0.0
      %592 = vmatpush1.msra.mxu0 0.0
      %593 = vmatprep.subr.mxu0 0.0
      %594 = vmatpush1.msra.mxu0 0.0
      %595 = vmatprep.subr.mxu0 0.0
      %596 = vmatpush1.msra.mxu0 0.0
      %597 = vmatprep.subr.mxu0 0.0
      %598 = vmatpush1.msra.mxu0 0.0
      %599 = vmatprep.subr.mxu0 0.0
      %600 = vmatpush1.msra.mxu0 0.0
      %601 = vmatprep.subr.mxu0 0.0
      %602 = vmatpush1.msra.mxu0 0.0
      %603 = vmatprep.subr.mxu0 0.0
      %604 = vmatpush1.msra.mxu0 0.0
      %605 = vmatprep.subr.mxu0 0.0
      %606 = vmatpush1.msra.mxu0 0.0
      %607 = vmatprep.subr.mxu0 0.0
      %608 = vmatpush1.msra.mxu0 0.0
      %609 = vmatprep.subr.mxu0 0.0
      %610 = vmatpush1.msra.mxu0 %v565
      %611 = vmatprep.subr.mxu0 0.0
      %612 = vmatpush1.msra.mxu0 %v564
      %613 = vmatprep.subr.mxu0 0.0
      %614 = vmatpush1.msra.mxu0 %v563
      %615 = vmatprep.subr.mxu0 0.0
      %616 = vmatpush1.msra.mxu0 %v562
      %617 = vmatprep.subr.mxu0 0.0
      %618 = vmatpush2.msra.mxu0 0.0
      %619 = vmatprep.subr.mxu0 0.0
      %620 = vmatpush2.msra.mxu0 0.0
      %621 = vmatprep.subr.mxu0 0.0
      %622 = vmatpush2.msra.mxu0 0.0
      %623 = vmatprep.subr.mxu0 0.0
      %624 = vmatpush2.msra.mxu0 0.0
      %625 = vmatprep.subr.mxu0 0.0
      %626 = vmatpush2.msra.mxu0 0.0
      %627 = vmatprep.subr.mxu0 0.0
      %628 = vmatpush2.msra.mxu0 0.0
      %629 = vmatprep.subr.mxu0 0.0
      %630 = vmatpush2.msra.mxu0 0.0
      %631 = vmatprep.subr.mxu0 0.0
      %632 = vmatpush2.msra.mxu0 0.0
      %633 = vmatprep.subr.mxu0 0.0
      %634 = vmatpush2.msra.mxu0 0.0
      %635 = vmatprep.subr.mxu0 0.0
      %636 = vmatpush2.msra.mxu0 0.0
      %637 = vmatprep.subr.mxu0 0.0
      %638 = vmatpush2.msra.mxu0 0.0
      %639 = vmatprep.subr.mxu0 0.0
      %640 = vmatpush2.msra.mxu0 0.0
      %641 = vmatprep.subr.mxu0 0.0
      %642 = vmatpush2.msra.mxu0 0.0
      %643 = vmatprep.subr.mxu0 0.0
      %644 = vmatpush2.msra.mxu0 0.0
      %645 = vmatprep.subr.mxu0 0.0
      %646 = vmatpush2.msra.mxu0 0.0
      %647 = vmatprep.subr.mxu0 0.0
      %648 = vmatpush2.msra.mxu0 0.0
      %649 = vmatprep.mubr.f32.mxu0 0.0
      %650 = vmatmul.mubr.f32.gmra.mxu0 %v574
      %v651 = vpop.f32.mrf.mxu0
      %v652 = vadd.f32 %v571, %v651
      %v653 = vpop.f32.mrf.mxu0
      %654 = vmatprep.mubr.f32.mxu0 0.0
      %655 = vmatmul.mubr.f32.gmra.mxu0 %v577
      %v656 = vpop.f32.mrf.mxu0
      %v657 = vadd.f32 %v571, %v656
      %v658 = vpop.f32.mrf.mxu0
      %659 = vmatprep.mubr.f32.mxu0 0.0
      %660 = vmatmul.mubr.f32.gmra.mxu0 %v580
      %v661 = vpop.f32.mrf.mxu0
      %v662 = vadd.f32 %v571, %v661
      %v663 = vpop.f32.mrf.mxu0
      %664 = vmatprep.mubr.f32.mxu0 0.0
      %665 = vmatmul.mubr.f32.gmra.mxu0 %v583
      %v666 = vpop.f32.mrf.mxu0
      %v667 = vadd.f32 %v571, %v666
      %v668 = vpop.f32.mrf.mxu0
      %669 = vdwg.mxu0
      %672 = vrot.lane.b32.xlu0 %v652, 96
      %v673 = vpop.permute.xlu0 %672
      %674 = vrot.lane.b32.xlu0 %v657, 96
      %v675 = vpop.permute.xlu0 %674
      %vm676 = vcmask 64512
      %v677 = vsel %vm676, %v652, 0
      %v679 = vsel %vm676, %v657, 0
      %v681 = vsel %vm676, %v673, 0
      %v683 = vsel %vm676, %v675, 0
      %685 = vmatprep.subr.mxu0 0.0
      %686 = vmatpush1.xpose.msra.mxu0 0.0
      %687 = vmatprep.subr.mxu0 0.0
      %688 = vmatpush1.xpose.msra.mxu0 0.0
      %689 = vmatprep.subr.mxu0 0.0
      %690 = vmatpush1.xpose.msra.mxu0 0.0
      %691 = vmatprep.subr.mxu0 0.0
      %692 = vmatpush1.xpose.msra.mxu0 0.0
      %693 = vmatprep.subr.mxu0 0.0
      %694 = vmatpush1.xpose.msra.mxu0 0.0
      %695 = vmatprep.subr.mxu0 0.0
      %696 = vmatpush1.xpose.msra.mxu0 0.0
      %697 = vmatprep.subr.mxu0 0.0
      %698 = vmatpush1.xpose.msra.mxu0 0.0
      %699 = vmatprep.subr.mxu0 0.0
      %700 = vmatpush1.xpose.msra.mxu0 0.0
      %701 = vmatprep.subr.mxu0 0.0
      %702 = vmatpush1.xpose.msra.mxu0 0.0
      %703 = vmatprep.subr.mxu0 0.0
      %704 = vmatpush1.xpose.msra.mxu0 0.0
      %705 = vmatprep.subr.mxu0 0.0
      %706 = vmatpush1.xpose.msra.mxu0 0.0
      %707 = vmatprep.subr.mxu0 0.0
      %708 = vmatpush1.xpose.msra.mxu0 0.0
      %709 = vmatprep.subr.mxu0 0.0
      %710 = vmatpush1.xpose.msra.mxu0 0.0
      %711 = vmatprep.subr.mxu0 0.0
      %712 = vmatpush1.xpose.msra.mxu0 0.0
      %713 = vmatprep.subr.mxu0 0.0
      %714 = vmatpush1.xpose.msra.mxu0 %v683
      %715 = vmatprep.subr.mxu0 0.0
      %716 = vmatpush1.xpose.msra.mxu0 %v681
      %717 = vmatprep.subr.mxu0 0.0
      %718 = vmatpush2.xpose.msra.mxu0 0.0
      %719 = vmatprep.subr.mxu0 0.0
      %720 = vmatpush2.xpose.msra.mxu0 0.0
      %721 = vmatprep.subr.mxu0 0.0
      %722 = vmatpush2.xpose.msra.mxu0 0.0
      %723 = vmatprep.subr.mxu0 0.0
      %724 = vmatpush2.xpose.msra.mxu0 0.0
      %725 = vmatprep.subr.mxu0 0.0
      %726 = vmatpush2.xpose.msra.mxu0 0.0
      %727 = vmatprep.subr.mxu0 0.0
      %728 = vmatpush2.xpose.msra.mxu0 0.0
      %729 = vmatprep.subr.mxu0 0.0
      %730 = vmatpush2.xpose.msra.mxu0 0.0
      %731 = vmatprep.subr.mxu0 0.0
      %732 = vmatpush2.xpose.msra.mxu0 0.0
      %733 = vmatprep.subr.mxu0 0.0
      %734 = vmatpush2.xpose.msra.mxu0 0.0
      %735 = vmatprep.subr.mxu0 0.0
      %736 = vmatpush2.xpose.msra.mxu0 0.0
      %737 = vmatprep.subr.mxu0 0.0
      %738 = vmatpush2.xpose.msra.mxu0 0.0
      %739 = vmatprep.subr.mxu0 0.0
      %740 = vmatpush2.xpose.msra.mxu0 0.0
      %741 = vmatprep.subr.mxu0 0.0
      %742 = vmatpush2.xpose.msra.mxu0 0.0
      %743 = vmatprep.subr.mxu0 0.0
      %744 = vmatpush2.xpose.msra.mxu0 0.0
      %745 = vmatprep.subr.mxu0 0.0
      %746 = vmatpush2.xpose.msra.mxu0 0.0
      %747 = vmatprep.subr.mxu0 0.0
      %748 = vmatpush2.xpose.msra.mxu0 0.0
      %749 = vmatprep.mubr.f32.mxu0 0.0
      %750 = vmatmul.mubr.f32.gmra.mxu0 %v677
      %v751 = vpop.f32.mrf.mxu0
      %v752 = vadd.f32 0.0, %v751
      %v753 = vpop.f32.mrf.mxu0
      %754 = vmatprep.mubr.f32.mxu0 0.0
      %755 = vmatmul.mubr.f32.gmra.mxu0 %v679
      %v756 = vpop.f32.mrf.mxu0
      %v757 = vadd.f32 0.0, %v756
      %v758 = vpop.f32.mrf.mxu0
      %759 = vdwg.mxu0
      %762 = vrot.lane.b32.xlu0 %v662, 96
      %v763 = vpop.permute.xlu0 %762
      %764 = vrot.lane.b32.xlu0 %v667, 96
      %v765 = vpop.permute.xlu0 %764
      %v766 = vsel %vm676, %v662, 0
      %v768 = vsel %vm676, %v667, 0
      %v770 = vsel %vm676, %v763, 0
      %v772 = vsel %vm676, %v765, 0
      %774 = vmatprep.subr.mxu0 0.0
      %775 = vmatpush1.xpose.msra.mxu0 0.0
      %776 = vmatprep.subr.mxu0 0.0
      %777 = vmatpush1.xpose.msra.mxu0 0.0
      %778 = vmatprep.subr.mxu0 0.0
      %779 = vmatpush1.xpose.msra.mxu0 0.0
      %780 = vmatprep.subr.mxu0 0.0
      %781 = vmatpush1.xpose.msra.mxu0 0.0
      %782 = vmatprep.subr.mxu0 0.0
      %783 = vmatpush1.xpose.msra.mxu0 0.0
      %784 = vmatprep.subr.mxu0 0.0
      %785 = vmatpush1.xpose.msra.mxu0 0.0
      %786 = vmatprep.subr.mxu0 0.0
      %787 = vmatpush1.xpose.msra.mxu0 0.0
      %788 = vmatprep.subr.mxu0 0.0
      %789 = vmatpush1.xpose.msra.mxu0 0.0
      %790 = vmatprep.subr.mxu0 0.0
      %791 = vmatpush1.xpose.msra.mxu0 0.0
      %792 = vmatprep.subr.mxu0 0.0
      %793 = vmatpush1.xpose.msra.mxu0 0.0
      %794 = vmatprep.subr.mxu0 0.0
      %795 = vmatpush1.xpose.msra.mxu0 0.0
      %796 = vmatprep.subr.mxu0 0.0
      %797 = vmatpush1.xpose.msra.mxu0 0.0
      %798 = vmatprep.subr.mxu0 0.0
      %799 = vmatpush1.xpose.msra.mxu0 0.0
      %800 = vmatprep.subr.mxu0 0.0
      %801 = vmatpush1.xpose.msra.mxu0 0.0
      %802 = vmatprep.subr.mxu0 0.0
      %803 = vmatpush1.xpose.msra.mxu0 %v772
      %804 = vmatprep.subr.mxu0 0.0
      %805 = vmatpush1.xpose.msra.mxu0 %v770
      %806 = vmatprep.subr.mxu0 0.0
      %807 = vmatpush2.xpose.msra.mxu0 0.0
      %808 = vmatprep.subr.mxu0 0.0
      %809 = vmatpush2.xpose.msra.mxu0 0.0
      %810 = vmatprep.subr.mxu0 0.0
      %811 = vmatpush2.xpose.msra.mxu0 0.0
      %812 = vmatprep.subr.mxu0 0.0
      %813 = vmatpush2.xpose.msra.mxu0 0.0
      %814 = vmatprep.subr.mxu0 0.0
      %815 = vmatpush2.xpose.msra.mxu0 0.0
      %816 = vmatprep.subr.mxu0 0.0
      %817 = vmatpush2.xpose.msra.mxu0 0.0
      %818 = vmatprep.subr.mxu0 0.0
      %819 = vmatpush2.xpose.msra.mxu0 0.0
      %820 = vmatprep.subr.mxu0 0.0
      %821 = vmatpush2.xpose.msra.mxu0 0.0
      %822 = vmatprep.subr.mxu0 0.0
      %823 = vmatpush2.xpose.msra.mxu0 0.0
      %824 = vmatprep.subr.mxu0 0.0
      %825 = vmatpush2.xpose.msra.mxu0 0.0
      %826 = vmatprep.subr.mxu0 0.0
      %827 = vmatpush2.xpose.msra.mxu0 0.0
      %828 = vmatprep.subr.mxu0 0.0
      %829 = vmatpush2.xpose.msra.mxu0 0.0
      %830 = vmatprep.subr.mxu0 0.0
      %831 = vmatpush2.xpose.msra.mxu0 0.0
      %832 = vmatprep.subr.mxu0 0.0
      %833 = vmatpush2.xpose.msra.mxu0 0.0
      %834 = vmatprep.subr.mxu0 0.0
      %835 = vmatpush2.xpose.msra.mxu0 0.0
      %836 = vmatprep.subr.mxu0 0.0
      %837 = vmatpush2.xpose.msra.mxu0 0.0
      %838 = vmatprep.mubr.f32.mxu0 0.0
      %839 = vmatmul.mubr.f32.gmra.mxu0 %v766
      %v840 = vpop.f32.mrf.mxu0
      %v841 = vadd.f32 0.0, %v840
      %v842 = vpop.f32.mrf.mxu0
      %843 = vmatprep.mubr.f32.mxu0 0.0
      %844 = vmatmul.mubr.f32.gmra.mxu0 %v768
      %v845 = vpop.f32.mrf.mxu0
      %v846 = vadd.f32 0.0, %v845
      %v847 = vpop.f32.mrf.mxu0
      %848 = vdwg.mxu0
      %v849 = vmul.f32 %v752, 0.35355338
      %v850 = vmul.f32 %v757, 0.35355338
      %v851 = vmul.f32 %v841, 0.35355338
      %v852 = vmul.f32 %v846, 0.35355338
      %v855 = vlaneseq
      %v856 = vshrl.u32 %v855, 7
      %v857 = vsub.s32 0, %v856
      %v858 = vrot.slane %v560, %v857
      %v859 = vlaneseq
      %v860 = vshrl.u32 %v859, 7
      %v861 = vsub.s32 0, %v860
      %v862 = vrot.slane %v561, %v861
      %v865 = vadd.f32 %v849, %v858
      %v866 = vadd.f32 %v850, %v858
      %v867 = vadd.f32 %v851, %v862
      %v868 = vadd.f32 %v852, %v862
      %vm869 = vcmask 130048
      %v870 = vsel %vm869, %v865, -inf
      %871 = vmax.xlane.f32.xlu0 %v870
      %v872 = vpop.xlane.xlu0 %871
      %v873 = vsel %vm869, %v866, -inf
      %874 = vmax.xlane.f32.xlu0 %v873
      %v875 = vpop.xlane.xlu0 %874
      %v876 = vsel %vm869, %v867, -inf
      %877 = vmax.xlane.f32.xlu0 %v876
      %v878 = vpop.xlane.xlu0 %877
      %v879 = vsel %vm869, %v868, -inf
      %880 = vmax.xlane.f32.xlu0 %v879
      %v881 = vpop.xlane.xlu0 %880
      %v882 = vsub.f32 %v865, %v872
      %v883 = vsub.f32 %v866, %v875
      %v884 = vsub.f32 %v867, %v878
      %v885 = vsub.f32 %v868, %v881
      %v886 = vmul.f32 %v882, 1.442695
      %v887 = vpow.pop %v886
      %v888 = vmul.f32 %v883, 1.442695
      %v889 = vpow.pop %v888
      %v890 = vmul.f32 %v884, 1.442695
      %v891 = vpow.pop %v890
      %v892 = vmul.f32 %v885, 1.442695
      %v893 = vpow.pop %v892
      %v894 = vsel %vm869, %v887, 0.0
      %895 = vadd.xlane.f32.xlu0 %v894
      %v896 = vpop.xlane.xlu0 %895
      %v897 = vsel %vm869, %v889, 0.0
      %898 = vadd.xlane.f32.xlu0 %v897
      %v899 = vpop.xlane.xlu0 %898
      %v900 = vsel %vm869, %v891, 0.0
      %901 = vadd.xlane.f32.xlu0 %v900
      %v902 = vpop.xlane.xlu0 %901
      %v903 = vsel %vm869, %v893, 0.0
      %904 = vadd.xlane.f32.xlu0 %v903
      %v905 = vpop.xlane.xlu0 %904
      %v906 = vrcp.pop %v896
      %v907 = vrcp.pop %v899
      %v908 = vrcp.pop %v902
      %v909 = vrcp.pop %v905
      %v910 = vmul.f32 %v887, %v906
      %v911 = vmul.f32 %v889, %v907
      %v912 = vmul.f32 %v891, %v908
      %v913 = vmul.f32 %v893, %v909
      %914 = vrot.lane.b32.xlu0 %v652, 64
      %v915 = vpop.permute.xlu0 %914
      %916 = vrot.lane.b32.xlu0 %v657, 64
      %v917 = vpop.permute.xlu0 %916
      %v921 = vsel %vm869, %v910, 0
      %v924 = vsel %vm869, %v911, 0
      %926 = vmatprep.subr.mxu0 0.0
      %927 = vmatpush1.msra.mxu0 0.0
      %928 = vmatprep.subr.mxu0 0.0
      %929 = vmatpush1.msra.mxu0 0.0
      %930 = vmatprep.subr.mxu0 0.0
      %931 = vmatpush1.msra.mxu0 0.0
      %932 = vmatprep.subr.mxu0 0.0
      %933 = vmatpush1.msra.mxu0 0.0
      %934 = vmatprep.subr.mxu0 0.0
      %935 = vmatpush1.msra.mxu0 0.0
      %936 = vmatprep.subr.mxu0 0.0
      %937 = vmatpush1.msra.mxu0 0.0
      %938 = vmatprep.subr.mxu0 0.0
      %939 = vmatpush1.msra.mxu0 0.0
      %940 = vmatprep.subr.mxu0 0.0
      %941 = vmatpush1.msra.mxu0 0.0
      %942 = vmatprep.subr.mxu0 0.0
      %943 = vmatpush1.msra.mxu0 0.0
      %944 = vmatprep.subr.mxu0 0.0
      %945 = vmatpush1.msra.mxu0 0.0
      %946 = vmatprep.subr.mxu0 0.0
      %947 = vmatpush1.msra.mxu0 0.0
      %948 = vmatprep.subr.mxu0 0.0
      %949 = vmatpush1.msra.mxu0 0.0
      %950 = vmatprep.subr.mxu0 0.0
      %951 = vmatpush1.msra.mxu0 0.0
      %952 = vmatprep.subr.mxu0 0.0
      %953 = vmatpush1.msra.mxu0 0.0
      %954 = vmatprep.subr.mxu0 0.0
      %955 = vmatpush1.msra.mxu0 %v917
      %956 = vmatprep.subr.mxu0 0.0
      %957 = vmatpush1.msra.mxu0 %v915
      %958 = vmatprep.subr.mxu0 0.0
      %959 = vmatpush2.msra.mxu0 0.0
      %960 = vmatprep.subr.mxu0 0.0
      %961 = vmatpush2.msra.mxu0 0.0
      %962 = vmatprep.subr.mxu0 0.0
      %963 = vmatpush2.msra.mxu0 0.0
      %964 = vmatprep.subr.mxu0 0.0
      %965 = vmatpush2.msra.mxu0 0.0
      %966 = vmatprep.subr.mxu0 0.0
      %967 = vmatpush2.msra.mxu0 0.0
      %968 = vmatprep.subr.mxu0 0.0
      %969 = vmatpush2.msra.mxu0 0.0
      %970 = vmatprep.subr.mxu0 0.0
      %971 = vmatpush2.msra.mxu0 0.0
      %972 = vmatprep.subr.mxu0 0.0
      %973 = vmatpush2.msra.mxu0 0.0
      %974 = vmatprep.subr.mxu0 0.0
      %975 = vmatpush2.msra.mxu0 0.0
      %976 = vmatprep.subr.mxu0 0.0
      %977 = vmatpush2.msra.mxu0 0.0
      %978 = vmatprep.subr.mxu0 0.0
      %979 = vmatpush2.msra.mxu0 0.0
      %980 = vmatprep.subr.mxu0 0.0
      %981 = vmatpush2.msra.mxu0 0.0
      %982 = vmatprep.subr.mxu0 0.0
      %983 = vmatpush2.msra.mxu0 0.0
      %984 = vmatprep.subr.mxu0 0.0
      %985 = vmatpush2.msra.mxu0 0.0
      %986 = vmatprep.subr.mxu0 0.0
      %987 = vmatpush2.msra.mxu0 0.0
      %988 = vmatprep.subr.mxu0 0.0
      %989 = vmatpush2.msra.mxu0 0.0
      %990 = vmatprep.mubr.f32.mxu0 0.0
      %991 = vmatmul.mubr.f32.gmra.mxu0 %v921
      %v992 = vpop.f32.mrf.mxu0
      %v993 = vadd.f32 0.0, %v992
      %v994 = vpop.f32.mrf.mxu0
      %995 = vmatprep.mubr.f32.mxu0 0.0
      %996 = vmatmul.mubr.f32.gmra.mxu0 %v924
      %v997 = vpop.f32.mrf.mxu0
      %v998 = vadd.f32 0.0, %v997
      %v999 = vpop.f32.mrf.mxu0
      %1000 = vdwg.mxu0
      %1001 = vrot.lane.b32.xlu0 %v662, 64
      %v1002 = vpop.permute.xlu0 %1001
      %1003 = vrot.lane.b32.xlu0 %v667, 64
      %v1004 = vpop.permute.xlu0 %1003
      %v1008 = vsel %vm869, %v912, 0
      %v1011 = vsel %vm869, %v913, 0
      %1013 = vmatprep.subr.mxu0 0.0
      %1014 = vmatpush1.msra.mxu0 0.0
      %1015 = vmatprep.subr.mxu0 0.0
      %1016 = vmatpush1.msra.mxu0 0.0
      %1017 = vmatprep.subr.mxu0 0.0
      %1018 = vmatpush1.msra.mxu0 0.0
      %1019 = vmatprep.subr.mxu0 0.0
      %1020 = vmatpush1.msra.mxu0 0.0
      %1021 = vmatprep.subr.mxu0 0.0
      %1022 = vmatpush1.msra.mxu0 0.0
      %1023 = vmatprep.subr.mxu0 0.0
      %1024 = vmatpush1.msra.mxu0 0.0
      %1025 = vmatprep.subr.mxu0 0.0
      %1026 = vmatpush1.msra.mxu0 0.0
      %1027 = vmatprep.subr.mxu0 0.0
      %1028 = vmatpush1.msra.mxu0 0.0
      %1029 = vmatprep.subr.mxu0 0.0
      %1030 = vmatpush1.msra.mxu0 0.0
      %1031 = vmatprep.subr.mxu0 0.0
      %1032 = vmatpush1.msra.mxu0 0.0
      %1033 = vmatprep.subr.mxu0 0.0
      %1034 = vmatpush1.msra.mxu0 0.0
      %1035 = vmatprep.subr.mxu0 0.0
      %1036 = vmatpush1.msra.mxu0 0.0
      %1037 = vmatprep.subr.mxu0 0.0
      %1038 = vmatpush1.msra.mxu0 0.0
      %1039 = vmatprep.subr.mxu0 0.0
      %1040 = vmatpush1.msra.mxu0 0.0
      %1041 = vmatprep.subr.mxu0 0.0
      %1042 = vmatpush1.msra.mxu0 %v1004
      %1043 = vmatprep.subr.mxu0 0.0
      %1044 = vmatpush1.msra.mxu0 %v1002
      %1045 = vmatprep.subr.mxu0 0.0
      %1046 = vmatpush2.msra.mxu0 0.0
      %1047 = vmatprep.subr.mxu0 0.0
      %1048 = vmatpush2.msra.mxu0 0.0
      %1049 = vmatprep.subr.mxu0 0.0
      %1050 = vmatpush2.msra.mxu0 0.0
      %1051 = vmatprep.subr.mxu0 0.0
      %1052 = vmatpush2.msra.mxu0 0.0
      %1053 = vmatprep.subr.mxu0 0.0
      %1054 = vmatpush2.msra.mxu0 0.0
      %1055 = vmatprep.subr.mxu0 0.0
      %1056 = vmatpush2.msra.mxu0 0.0
      %1057 = vmatprep.subr.mxu0 0.0
      %1058 = vmatpush2.msra.mxu0 0.0
      %1059 = vmatprep.subr.mxu0 0.0
      %1060 = vmatpush2.msra.mxu0 0.0
      %1061 = vmatprep.subr.mxu0 0.0
      %1062 = vmatpush2.msra.mxu0 0.0
      %1063 = vmatprep.subr.mxu0 0.0
      %1064 = vmatpush2.msra.mxu0 0.0
      %1065 = vmatprep.subr.mxu0 0.0
      %1066 = vmatpush2.msra.mxu0 0.0
      %1067 = vmatprep.subr.mxu0 0.0
      %1068 = vmatpush2.msra.mxu0 0.0
      %1069 = vmatprep.subr.mxu0 0.0
      %1070 = vmatpush2.msra.mxu0 0.0
      %1071 = vmatprep.subr.mxu0 0.0
      %1072 = vmatpush2.msra.mxu0 0.0
      %1073 = vmatprep.subr.mxu0 0.0
      %1074 = vmatpush2.msra.mxu0 0.0
      %1075 = vmatprep.subr.mxu0 0.0
      %1076 = vmatpush2.msra.mxu0 0.0
      %1077 = vmatprep.mubr.f32.mxu0 0.0
      %1078 = vmatmul.mubr.f32.gmra.mxu0 %v1008
      %v1079 = vpop.f32.mrf.mxu0
      %v1080 = vadd.f32 0.0, %v1079
      %v1081 = vpop.f32.mrf.mxu0
      %1082 = vmatprep.mubr.f32.mxu0 0.0
      %1083 = vmatmul.mubr.f32.gmra.mxu0 %v1011
      %v1084 = vpop.f32.mrf.mxu0
      %v1085 = vadd.f32 0.0, %v1084
      %v1086 = vpop.f32.mrf.mxu0
      %1087 = vdwg.mxu0
      %1088 = vrot.lane.b32.xlu0 %v652, 120
      %v1089 = vpop.permute.xlu0 %1088
      %1090 = vrot.lane.b32.xlu0 %v657, 120
      %v1091 = vpop.permute.xlu0 %1090
      %1092 = vrot.lane.b32.xlu0 %v652, 88
      %v1093 = vpop.permute.xlu0 %1092
      %1094 = vrot.lane.b32.xlu0 %v657, 88
      %v1095 = vpop.permute.xlu0 %1094
      %v1096 = vsel %vm676, %v1089, 0
      %v1098 = vsel %vm676, %v1091, 0
      %v1100 = vsel %vm676, %v1093, 0
      %v1102 = vsel %vm676, %v1095, 0
      %1104 = vmatprep.subr.mxu0 0.0
      %1105 = vmatpush1.xpose.msra.mxu0 0.0
      %1106 = vmatprep.subr.mxu0 0.0
      %1107 = vmatpush1.xpose.msra.mxu0 0.0
      %1108 = vmatprep.subr.mxu0 0.0
      %1109 = vmatpush1.xpose.msra.mxu0 0.0
      %1110 = vmatprep.subr.mxu0 0.0
      %1111 = vmatpush1.xpose.msra.mxu0 0.0
      %1112 = vmatprep.subr.mxu0 0.0
      %1113 = vmatpush1.xpose.msra.mxu0 0.0
      %1114 = vmatprep.subr.mxu0 0.0
      %1115 = vmatpush1.xpose.msra.mxu0 0.0
      %1116 = vmatprep.subr.mxu0 0.0
      %1117 = vmatpush1.xpose.msra.mxu0 0.0
      %1118 = vmatprep.subr.mxu0 0.0
      %1119 = vmatpush1.xpose.msra.mxu0 0.0
      %1120 = vmatprep.subr.mxu0 0.0
      %1121 = vmatpush1.xpose.msra.mxu0 0.0
      %1122 = vmatprep.subr.mxu0 0.0
      %1123 = vmatpush1.xpose.msra.mxu0 0.0
      %1124 = vmatprep.subr.mxu0 0.0
      %1125 = vmatpush1.xpose.msra.mxu0 0.0
      %1126 = vmatprep.subr.mxu0 0.0
      %1127 = vmatpush1.xpose.msra.mxu0 0.0
      %1128 = vmatprep.subr.mxu0 0.0
      %1129 = vmatpush1.xpose.msra.mxu0 0.0
      %1130 = vmatprep.subr.mxu0 0.0
      %1131 = vmatpush1.xpose.msra.mxu0 0.0
      %1132 = vmatprep.subr.mxu0 0.0
      %1133 = vmatpush1.xpose.msra.mxu0 %v1102
      %1134 = vmatprep.subr.mxu0 0.0
      %1135 = vmatpush1.xpose.msra.mxu0 %v1100
      %1136 = vmatprep.subr.mxu0 0.0
      %1137 = vmatpush2.xpose.msra.mxu0 0.0
      %1138 = vmatprep.subr.mxu0 0.0
      %1139 = vmatpush2.xpose.msra.mxu0 0.0
      %1140 = vmatprep.subr.mxu0 0.0
      %1141 = vmatpush2.xpose.msra.mxu0 0.0
      %1142 = vmatprep.subr.mxu0 0.0
      %1143 = vmatpush2.xpose.msra.mxu0 0.0
      %1144 = vmatprep.subr.mxu0 0.0
      %1145 = vmatpush2.xpose.msra.mxu0 0.0
      %1146 = vmatprep.subr.mxu0 0.0
      %1147 = vmatpush2.xpose.msra.mxu0 0.0
      %1148 = vmatprep.subr.mxu0 0.0
      %1149 = vmatpush2.xpose.msra.mxu0 0.0
      %1150 = vmatprep.subr.mxu0 0.0
      %1151 = vmatpush2.xpose.msra.mxu0 0.0
      %1152 = vmatprep.subr.mxu0 0.0
      %1153 = vmatpush2.xpose.msra.mxu0 0.0
      %1154 = vmatprep.subr.mxu0 0.0
      %1155 = vmatpush2.xpose.msra.mxu0 0.0
      %1156 = vmatprep.subr.mxu0 0.0
      %1157 = vmatpush2.xpose.msra.mxu0 0.0
      %1158 = vmatprep.subr.mxu0 0.0
      %1159 = vmatpush2.xpose.msra.mxu0 0.0
      %1160 = vmatprep.subr.mxu0 0.0
      %1161 = vmatpush2.xpose.msra.mxu0 0.0
      %1162 = vmatprep.subr.mxu0 0.0
      %1163 = vmatpush2.xpose.msra.mxu0 0.0
      %1164 = vmatprep.subr.mxu0 0.0
      %1165 = vmatpush2.xpose.msra.mxu0 0.0
      %1166 = vmatprep.subr.mxu0 0.0
      %1167 = vmatpush2.xpose.msra.mxu0 0.0
      %1168 = vmatprep.mubr.f32.mxu0 0.0
      %1169 = vmatmul.mubr.f32.gmra.mxu0 %v1096
      %v1170 = vpop.f32.mrf.mxu0
      %v1171 = vadd.f32 0.0, %v1170
      %v1172 = vpop.f32.mrf.mxu0
      %1173 = vmatprep.mubr.f32.mxu0 0.0
      %1174 = vmatmul.mubr.f32.gmra.mxu0 %v1098
      %v1175 = vpop.f32.mrf.mxu0
      %v1176 = vadd.f32 0.0, %v1175
      %v1177 = vpop.f32.mrf.mxu0
      %1178 = vdwg.mxu0
      %1179 = vrot.lane.b32.xlu0 %v662, 120
      %v1180 = vpop.permute.xlu0 %1179
      %1181 = vrot.lane.b32.xlu0 %v667, 120
      %v1182 = vpop.permute.xlu0 %1181
      %1183 = vrot.lane.b32.xlu0 %v662, 88
      %v1184 = vpop.permute.xlu0 %1183
      %1185 = vrot.lane.b32.xlu0 %v667, 88
      %v1186 = vpop.permute.xlu0 %1185
      %v1187 = vsel %vm676, %v1180, 0
      %v1189 = vsel %vm676, %v1182, 0
      %v1191 = vsel %vm676, %v1184, 0
      %v1193 = vsel %vm676, %v1186, 0
      %1195 = vmatprep.subr.mxu0 0.0
      %1196 = vmatpush1.xpose.msra.mxu0 0.0
      %1197 = vmatprep.subr.mxu0 0.0
      %1198 = vmatpush1.xpose.msra.mxu0 0.0
      %1199 = vmatprep.subr.mxu0 0.0
      %1200 = vmatpush1.xpose.msra.mxu0 0.0
      %1201 = vmatprep.subr.mxu0 0.0
      %1202 = vmatpush1.xpose.msra.mxu0 0.0
      %1203 = vmatprep.subr.mxu0 0.0
      %1204 = vmatpush1.xpose.msra.mxu0 0.0
      %1205 = vmatprep.subr.mxu0 0.0
      %1206 = vmatpush1.xpose.msra.mxu0 0.0
      %1207 = vmatprep.subr.mxu0 0.0
      %1208 = vmatpush1.xpose.msra.mxu0 0.0
      %1209 = vmatprep.subr.mxu0 0.0
      %1210 = vmatpush1.xpose.msra.mxu0 0.0
      %1211 = vmatprep.subr.mxu0 0.0
      %1212 = vmatpush1.xpose.msra.mxu0 0.0
      %1213 = vmatprep.subr.mxu0 0.0
      %1214 = vmatpush1.xpose.msra.mxu0 0.0
      %1215 = vmatprep.subr.mxu0 0.0
      %1216 = vmatpush1.xpose.msra.mxu0 0.0
      %1217 = vmatprep.subr.mxu0 0.0
      %1218 = vmatpush1.xpose.msra.mxu0 0.0
      %1219 = vmatprep.subr.mxu0 0.0
      %1220 = vmatpush1.xpose.msra.mxu0 0.0
      %1221 = vmatprep.subr.mxu0 0.0
      %1222 = vmatpush1.xpose.msra.mxu0 0.0
      %1223 = vmatprep.subr.mxu0 0.0
      %1224 = vmatpush1.xpose.msra.mxu0 %v1193
      %1225 = vmatprep.subr.mxu0 0.0
      %1226 = vmatpush1.xpose.msra.mxu0 %v1191
      %1227 = vmatprep.subr.mxu0 0.0
      %1228 = vmatpush2.xpose.msra.mxu0 0.0
      %1229 = vmatprep.subr.mxu0 0.0
      %1230 = vmatpush2.xpose.msra.mxu0 0.0
      %1231 = vmatprep.subr.mxu0 0.0
      %1232 = vmatpush2.xpose.msra.mxu0 0.0
      %1233 = vmatprep.subr.mxu0 0.0
      %1234 = vmatpush2.xpose.msra.mxu0 0.0
      %1235 = vmatprep.subr.mxu0 0.0
      %1236 = vmatpush2.xpose.msra.mxu0 0.0
      %1237 = vmatprep.subr.mxu0 0.0
      %1238 = vmatpush2.xpose.msra.mxu0 0.0
      %1239 = vmatprep.subr.mxu0 0.0
      %1240 = vmatpush2.xpose.msra.mxu0 0.0
      %1241 = vmatprep.subr.mxu0 0.0
      %1242 = vmatpush2.xpose.msra.mxu0 0.0
      %1243 = vmatprep.subr.mxu0 0.0
      %1244 = vmatpush2.xpose.msra.mxu0 0.0
      %1245 = vmatprep.subr.mxu0 0.0
      %1246 = vmatpush2.xpose.msra.mxu0 0.0
      %1247 = vmatprep.subr.mxu0 0.0
      %1248 = vmatpush2.xpose.msra.mxu0 0.0
      %1249 = vmatprep.subr.mxu0 0.0
      %1250 = vmatpush2.xpose.msra.mxu0 0.0
      %1251 = vmatprep.subr.mxu0 0.0
      %1252 = vmatpush2.xpose.msra.mxu0 0.0
      %1253 = vmatprep.subr.mxu0 0.0
      %1254 = vmatpush2.xpose.msra.mxu0 0.0
      %1255 = vmatprep.subr.mxu0 0.0
      %1256 = vmatpush2.xpose.msra.mxu0 0.0
      %1257 = vmatprep.subr.mxu0 0.0
      %1258 = vmatpush2.xpose.msra.mxu0 0.0
      %1259 = vmatprep.mubr.f32.mxu0 0.0
      %1260 = vmatmul.mubr.f32.gmra.mxu0 %v1187
      %v1261 = vpop.f32.mrf.mxu0
      %v1262 = vadd.f32 0.0, %v1261
      %v1263 = vpop.f32.mrf.mxu0
      %1264 = vmatprep.mubr.f32.mxu0 0.0
      %1265 = vmatmul.mubr.f32.gmra.mxu0 %v1189
      %v1266 = vpop.f32.mrf.mxu0
      %v1267 = vadd.f32 0.0, %v1266
      %v1268 = vpop.f32.mrf.mxu0
      %1269 = vdwg.mxu0
      %v1270 = vmul.f32 %v1171, 0.35355338
      %v1271 = vmul.f32 %v1176, 0.35355338
      %v1272 = vmul.f32 %v1262, 0.35355338
      %v1273 = vmul.f32 %v1267, 0.35355338
      %v1274 = vadd.f32 %v1270, %v858
      %v1275 = vadd.f32 %v1271, %v858
      %v1276 = vadd.f32 %v1272, %v862
      %v1277 = vadd.f32 %v1273, %v862
      %v1278 = vsel %vm869, %v1274, -inf
      %1279 = vmax.xlane.f32.xlu0 %v1278
      %v1280 = vpop.xlane.xlu0 %1279
      %v1281 = vsel %vm869, %v1275, -inf
      %1282 = vmax.xlane.f32.xlu0 %v1281
      %v1283 = vpop.xlane.xlu0 %1282
      %v1284 = vsel %vm869, %v1276, -inf
      %1285 = vmax.xlane.f32.xlu0 %v1284
      %v1286 = vpop.xlane.xlu0 %1285
      %v1287 = vsel %vm869, %v1277, -inf
      %1288 = vmax.xlane.f32.xlu0 %v1287
      %v1289 = vpop.xlane.xlu0 %1288
      %v1290 = vsub.f32 %v1274, %v1280
      %v1291 = vsub.f32 %v1275, %v1283
      %v1292 = vsub.f32 %v1276, %v1286
      %v1293 = vsub.f32 %v1277, %v1289
      %v1294 = vmul.f32 %v1290, 1.442695
      %v1295 = vpow.pop %v1294
      %v1296 = vmul.f32 %v1291, 1.442695
      %v1297 = vpow.pop %v1296
      %v1298 = vmul.f32 %v1292, 1.442695
      %v1299 = vpow.pop %v1298
      %v1300 = vmul.f32 %v1293, 1.442695
      %v1301 = vpow.pop %v1300
      %v1302 = vsel %vm869, %v1295, 0.0
      %1303 = vadd.xlane.f32.xlu0 %v1302
      %v1304 = vpop.xlane.xlu0 %1303
      %v1305 = vsel %vm869, %v1297, 0.0
      %1306 = vadd.xlane.f32.xlu0 %v1305
      %v1307 = vpop.xlane.xlu0 %1306
      %v1308 = vsel %vm869, %v1299, 0.0
      %1309 = vadd.xlane.f32.xlu0 %v1308
      %v1310 = vpop.xlane.xlu0 %1309
      %v1311 = vsel %vm869, %v1301, 0.0
      %1312 = vadd.xlane.f32.xlu0 %v1311
      %v1313 = vpop.xlane.xlu0 %1312
      %v1314 = vrcp.pop %v1304
      %v1315 = vrcp.pop %v1307
      %v1316 = vrcp.pop %v1310
      %v1317 = vrcp.pop %v1313
      %v1318 = vmul.f32 %v1295, %v1314
      %v1319 = vmul.f32 %v1297, %v1315
      %v1320 = vmul.f32 %v1299, %v1316
      %v1321 = vmul.f32 %v1301, %v1317
      %1322 = vrot.lane.b32.xlu0 %v652, 56
      %v1323 = vpop.permute.xlu0 %1322
      %1324 = vrot.lane.b32.xlu0 %v657, 56
      %v1325 = vpop.permute.xlu0 %1324
      %v1329 = vsel %vm869, %v1318, 0
      %v1332 = vsel %vm869, %v1319, 0
      %1334 = vmatprep.subr.mxu0 0.0
      %1335 = vmatpush1.msra.mxu0 0.0
      %1336 = vmatprep.subr.mxu0 0.0
      %1337 = vmatpush1.msra.mxu0 0.0
      %1338 = vmatprep.subr.mxu0 0.0
      %1339 = vmatpush1.msra.mxu0 0.0
      %1340 = vmatprep.subr.mxu0 0.0
      %1341 = vmatpush1.msra.mxu0 0.0
      %1342 = vmatprep.subr.mxu0 0.0
      %1343 = vmatpush1.msra.mxu0 0.0
      %1344 = vmatprep.subr.mxu0 0.0
      %1345 = vmatpush1.msra.mxu0 0.0
      %1346 = vmatprep.subr.mxu0 0.0
      %1347 = vmatpush1.msra.mxu0 0.0
      %1348 = vmatprep.subr.mxu0 0.0
      %1349 = vmatpush1.msra.mxu0 0.0
      %1350 = vmatprep.subr.mxu0 0.0
      %1351 = vmatpush1.msra.mxu0 0.0
      %1352 = vmatprep.subr.mxu0 0.0
      %1353 = vmatpush1.msra.mxu0 0.0
      %1354 = vmatprep.subr.mxu0 0.0
      %1355 = vmatpush1.msra.mxu0 0.0
      %1356 = vmatprep.subr.mxu0 0.0
      %1357 = vmatpush1.msra.mxu0 0.0
      %1358 = vmatprep.subr.mxu0 0.0
      %1359 = vmatpush1.msra.mxu0 0.0
      %1360 = vmatprep.subr.mxu0 0.0
      %1361 = vmatpush1.msra.mxu0 0.0
      %1362 = vmatprep.subr.mxu0 0.0
      %1363 = vmatpush1.msra.mxu0 %v1325
      %1364 = vmatprep.subr.mxu0 0.0
      %1365 = vmatpush1.msra.mxu0 %v1323
      %1366 = vmatprep.subr.mxu0 0.0
      %1367 = vmatpush2.msra.mxu0 0.0
      %1368 = vmatprep.subr.mxu0 0.0
      %1369 = vmatpush2.msra.mxu0 0.0
      %1370 = vmatprep.subr.mxu0 0.0
      %1371 = vmatpush2.msra.mxu0 0.0
      %1372 = vmatprep.subr.mxu0 0.0
      %1373 = vmatpush2.msra.mxu0 0.0
      %1374 = vmatprep.subr.mxu0 0.0
      %1375 = vmatpush2.msra.mxu0 0.0
      %1376 = vmatprep.subr.mxu0 0.0
      %1377 = vmatpush2.msra.mxu0 0.0
      %1378 = vmatprep.subr.mxu0 0.0
      %1379 = vmatpush2.msra.mxu0 0.0
      %1380 = vmatprep.subr.mxu0 0.0
      %1381 = vmatpush2.msra.mxu0 0.0
      %1382 = vmatprep.subr.mxu0 0.0
      %1383 = vmatpush2.msra.mxu0 0.0
      %1384 = vmatprep.subr.mxu0 0.0
      %1385 = vmatpush2.msra.mxu0 0.0
      %1386 = vmatprep.subr.mxu0 0.0
      %1387 = vmatpush2.msra.mxu0 0.0
      %1388 = vmatprep.subr.mxu0 0.0
      %1389 = vmatpush2.msra.mxu0 0.0
      %1390 = vmatprep.subr.mxu0 0.0
      %1391 = vmatpush2.msra.mxu0 0.0
      %1392 = vmatprep.subr.mxu0 0.0
      %1393 = vmatpush2.msra.mxu0 0.0
      %1394 = vmatprep.subr.mxu0 0.0
      %1395 = vmatpush2.msra.mxu0 0.0
      %1396 = vmatprep.subr.mxu0 0.0
      %1397 = vmatpush2.msra.mxu0 0.0
      %1398 = vmatprep.mubr.f32.mxu0 0.0
      %1399 = vmatmul.mubr.f32.gmra.mxu0 %v1329
      %v1400 = vpop.f32.mrf.mxu0
      %v1401 = vadd.f32 0.0, %v1400
      %v1402 = vpop.f32.mrf.mxu0
      %1403 = vmatprep.mubr.f32.mxu0 0.0
      %1404 = vmatmul.mubr.f32.gmra.mxu0 %v1332
      %v1405 = vpop.f32.mrf.mxu0
      %v1406 = vadd.f32 0.0, %v1405
      %v1407 = vpop.f32.mrf.mxu0
      %1408 = vdwg.mxu0
      %1409 = vrot.lane.b32.xlu0 %v662, 56
      %v1410 = vpop.permute.xlu0 %1409
      %1411 = vrot.lane.b32.xlu0 %v667, 56
      %v1412 = vpop.permute.xlu0 %1411
      %v1416 = vsel %vm869, %v1320, 0
      %v1419 = vsel %vm869, %v1321, 0
      %1421 = vmatprep.subr.mxu0 0.0
      %1422 = vmatpush1.msra.mxu0 0.0
      %1423 = vmatprep.subr.mxu0 0.0
      %1424 = vmatpush1.msra.mxu0 0.0
      %1425 = vmatprep.subr.mxu0 0.0
      %1426 = vmatpush1.msra.mxu0 0.0
      %1427 = vmatprep.subr.mxu0 0.0
      %1428 = vmatpush1.msra.mxu0 0.0
      %1429 = vmatprep.subr.mxu0 0.0
      %1430 = vmatpush1.msra.mxu0 0.0
      %1431 = vmatprep.subr.mxu0 0.0
      %1432 = vmatpush1.msra.mxu0 0.0
      %1433 = vmatprep.subr.mxu0 0.0
      %1434 = vmatpush1.msra.mxu0 0.0
      %1435 = vmatprep.subr.mxu0 0.0
      %1436 = vmatpush1.msra.mxu0 0.0
      %1437 = vmatprep.subr.mxu0 0.0
      %1438 = vmatpush1.msra.mxu0 0.0
      %1439 = vmatprep.subr.mxu0 0.0
      %1440 = vmatpush1.msra.mxu0 0.0
      %1441 = vmatprep.subr.mxu0 0.0
      %1442 = vmatpush1.msra.mxu0 0.0
      %1443 = vmatprep.subr.mxu0 0.0
      %1444 = vmatpush1.msra.mxu0 0.0
      %1445 = vmatprep.subr.mxu0 0.0
      %1446 = vmatpush1.msra.mxu0 0.0
      %1447 = vmatprep.subr.mxu0 0.0
      %1448 = vmatpush1.msra.mxu0 0.0
      %1449 = vmatprep.subr.mxu0 0.0
      %1450 = vmatpush1.msra.mxu0 %v1412
      %1451 = vmatprep.subr.mxu0 0.0
      %1452 = vmatpush1.msra.mxu0 %v1410
      %1453 = vmatprep.subr.mxu0 0.0
      %1454 = vmatpush2.msra.mxu0 0.0
      %1455 = vmatprep.subr.mxu0 0.0
      %1456 = vmatpush2.msra.mxu0 0.0
      %1457 = vmatprep.subr.mxu0 0.0
      %1458 = vmatpush2.msra.mxu0 0.0
      %1459 = vmatprep.subr.mxu0 0.0
      %1460 = vmatpush2.msra.mxu0 0.0
      %1461 = vmatprep.subr.mxu0 0.0
      %1462 = vmatpush2.msra.mxu0 0.0
      %1463 = vmatprep.subr.mxu0 0.0
      %1464 = vmatpush2.msra.mxu0 0.0
      %1465 = vmatprep.subr.mxu0 0.0
      %1466 = vmatpush2.msra.mxu0 0.0
      %1467 = vmatprep.subr.mxu0 0.0
      %1468 = vmatpush2.msra.mxu0 0.0
      %1469 = vmatprep.subr.mxu0 0.0
      %1470 = vmatpush2.msra.mxu0 0.0
      %1471 = vmatprep.subr.mxu0 0.0
      %1472 = vmatpush2.msra.mxu0 0.0
      %1473 = vmatprep.subr.mxu0 0.0
      %1474 = vmatpush2.msra.mxu0 0.0
      %1475 = vmatprep.subr.mxu0 0.0
      %1476 = vmatpush2.msra.mxu0 0.0
      %1477 = vmatprep.subr.mxu0 0.0
      %1478 = vmatpush2.msra.mxu0 0.0
      %1479 = vmatprep.subr.mxu0 0.0
      %1480 = vmatpush2.msra.mxu0 0.0
      %1481 = vmatprep.subr.mxu0 0.0
      %1482 = vmatpush2.msra.mxu0 0.0
      %1483 = vmatprep.subr.mxu0 0.0
      %1484 = vmatpush2.msra.mxu0 0.0
      %1485 = vmatprep.mubr.f32.mxu0 0.0
      %1486 = vmatmul.mubr.f32.gmra.mxu0 %v1416
      %v1487 = vpop.f32.mrf.mxu0
      %v1488 = vadd.f32 0.0, %v1487
      %v1489 = vpop.f32.mrf.mxu0
      %1490 = vmatprep.mubr.f32.mxu0 0.0
      %1491 = vmatmul.mubr.f32.gmra.mxu0 %v1419
      %v1492 = vpop.f32.mrf.mxu0
      %v1493 = vadd.f32 0.0, %v1492
      %v1494 = vpop.f32.mrf.mxu0
      %1495 = vdwg.mxu0
      %1496 = vrot.lane.b32.xlu0 %v652, 112
      %v1497 = vpop.permute.xlu0 %1496
      %1498 = vrot.lane.b32.xlu0 %v657, 112
      %v1499 = vpop.permute.xlu0 %1498
      %1500 = vrot.lane.b32.xlu0 %v652, 80
      %v1501 = vpop.permute.xlu0 %1500
      %1502 = vrot.lane.b32.xlu0 %v657, 80
      %v1503 = vpop.permute.xlu0 %1502
      %v1504 = vsel %vm676, %v1497, 0
      %v1506 = vsel %vm676, %v1499, 0
      %v1508 = vsel %vm676, %v1501, 0
      %v1510 = vsel %vm676, %v1503, 0
      %1512 = vmatprep.subr.mxu0 0.0
      %1513 = vmatpush1.xpose.msra.mxu0 0.0
      %1514 = vmatprep.subr.mxu0 0.0
      %1515 = vmatpush1.xpose.msra.mxu0 0.0
      %1516 = vmatprep.subr.mxu0 0.0
      %1517 = vmatpush1.xpose.msra.mxu0 0.0
      %1518 = vmatprep.subr.mxu0 0.0
      %1519 = vmatpush1.xpose.msra.mxu0 0.0
      %1520 = vmatprep.subr.mxu0 0.0
      %1521 = vmatpush1.xpose.msra.mxu0 0.0
      %1522 = vmatprep.subr.mxu0 0.0
      %1523 = vmatpush1.xpose.msra.mxu0 0.0
      %1524 = vmatprep.subr.mxu0 0.0
      %1525 = vmatpush1.xpose.msra.mxu0 0.0
      %1526 = vmatprep.subr.mxu0 0.0
      %1527 = vmatpush1.xpose.msra.mxu0 0.0
      %1528 = vmatprep.subr.mxu0 0.0
      %1529 = vmatpush1.xpose.msra.mxu0 0.0
      %1530 = vmatprep.subr.mxu0 0.0
      %1531 = vmatpush1.xpose.msra.mxu0 0.0
      %1532 = vmatprep.subr.mxu0 0.0
      %1533 = vmatpush1.xpose.msra.mxu0 0.0
      %1534 = vmatprep.subr.mxu0 0.0
      %1535 = vmatpush1.xpose.msra.mxu0 0.0
      %1536 = vmatprep.subr.mxu0 0.0
      %1537 = vmatpush1.xpose.msra.mxu0 0.0
      %1538 = vmatprep.subr.mxu0 0.0
      %1539 = vmatpush1.xpose.msra.mxu0 0.0
      %1540 = vmatprep.subr.mxu0 0.0
      %1541 = vmatpush1.xpose.msra.mxu0 %v1510
      %1542 = vmatprep.subr.mxu0 0.0
      %1543 = vmatpush1.xpose.msra.mxu0 %v1508
      %1544 = vmatprep.subr.mxu0 0.0
      %1545 = vmatpush2.xpose.msra.mxu0 0.0
      %1546 = vmatprep.subr.mxu0 0.0
      %1547 = vmatpush2.xpose.msra.mxu0 0.0
      %1548 = vmatprep.subr.mxu0 0.0
      %1549 = vmatpush2.xpose.msra.mxu0 0.0
      %1550 = vmatprep.subr.mxu0 0.0
      %1551 = vmatpush2.xpose.msra.mxu0 0.0
      %1552 = vmatprep.subr.mxu0 0.0
      %1553 = vmatpush2.xpose.msra.mxu0 0.0
      %1554 = vmatprep.subr.mxu0 0.0
      %1555 = vmatpush2.xpose.msra.mxu0 0.0
      %1556 = vmatprep.subr.mxu0 0.0
      %1557 = vmatpush2.xpose.msra.mxu0 0.0
      %1558 = vmatprep.subr.mxu0 0.0
      %1559 = vmatpush2.xpose.msra.mxu0 0.0
      %1560 = vmatprep.subr.mxu0 0.0
      %1561 = vmatpush2.xpose.msra.mxu0 0.0
      %1562 = vmatprep.subr.mxu0 0.0
      %1563 = vmatpush2.xpose.msra.mxu0 0.0
      %1564 = vmatprep.subr.mxu0 0.0
      %1565 = vmatpush2.xpose.msra.mxu0 0.0
      %1566 = vmatprep.subr.mxu0 0.0
      %1567 = vmatpush2.xpose.msra.mxu0 0.0
      %1568 = vmatprep.subr.mxu0 0.0
      %1569 = vmatpush2.xpose.msra.mxu0 0.0
      %1570 = vmatprep.subr.mxu0 0.0
      %1571 = vmatpush2.xpose.msra.mxu0 0.0
      %1572 = vmatprep.subr.mxu0 0.0
      %1573 = vmatpush2.xpose.msra.mxu0 0.0
      %1574 = vmatprep.subr.mxu0 0.0
      %1575 = vmatpush2.xpose.msra.mxu0 0.0
      %1576 = vmatprep.mubr.f32.mxu0 0.0
      %1577 = vmatmul.mubr.f32.gmra.mxu0 %v1504
      %v1578 = vpop.f32.mrf.mxu0
      %v1579 = vadd.f32 0.0, %v1578
      %v1580 = vpop.f32.mrf.mxu0
      %1581 = vmatprep.mubr.f32.mxu0 0.0
      %1582 = vmatmul.mubr.f32.gmra.mxu0 %v1506
      %v1583 = vpop.f32.mrf.mxu0
      %v1584 = vadd.f32 0.0, %v1583
      %v1585 = vpop.f32.mrf.mxu0
      %1586 = vdwg.mxu0
      %1587 = vrot.lane.b32.xlu0 %v662, 112
      %v1588 = vpop.permute.xlu0 %1587
      %1589 = vrot.lane.b32.xlu0 %v667, 112
      %v1590 = vpop.permute.xlu0 %1589
      %1591 = vrot.lane.b32.xlu0 %v662, 80
      %v1592 = vpop.permute.xlu0 %1591
      %1593 = vrot.lane.b32.xlu0 %v667, 80
      %v1594 = vpop.permute.xlu0 %1593
      %v1595 = vsel %vm676, %v1588, 0
      %v1597 = vsel %vm676, %v1590, 0
      %v1599 = vsel %vm676, %v1592, 0
      %v1601 = vsel %vm676, %v1594, 0
      %1603 = vmatprep.subr.mxu0 0.0
      %1604 = vmatpush1.xpose.msra.mxu0 0.0
      %1605 = vmatprep.subr.mxu0 0.0
      %1606 = vmatpush1.xpose.msra.mxu0 0.0
      %1607 = vmatprep.subr.mxu0 0.0
      %1608 = vmatpush1.xpose.msra.mxu0 0.0
      %1609 = vmatprep.subr.mxu0 0.0
      %1610 = vmatpush1.xpose.msra.mxu0 0.0
      %1611 = vmatprep.subr.mxu0 0.0
      %1612 = vmatpush1.xpose.msra.mxu0 0.0
      %1613 = vmatprep.subr.mxu0 0.0
      %1614 = vmatpush1.xpose.msra.mxu0 0.0
      %1615 = vmatprep.subr.mxu0 0.0
      %1616 = vmatpush1.xpose.msra.mxu0 0.0
      %1617 = vmatprep.subr.mxu0 0.0
      %1618 = vmatpush1.xpose.msra.mxu0 0.0
      %1619 = vmatprep.subr.mxu0 0.0
      %1620 = vmatpush1.xpose.msra.mxu0 0.0
      %1621 = vmatprep.subr.mxu0 0.0
      %1622 = vmatpush1.xpose.msra.mxu0 0.0
      %1623 = vmatprep.subr.mxu0 0.0
      %1624 = vmatpush1.xpose.msra.mxu0 0.0
      %1625 = vmatprep.subr.mxu0 0.0
      %1626 = vmatpush1.xpose.msra.mxu0 0.0
      %1627 = vmatprep.subr.mxu0 0.0
      %1628 = vmatpush1.xpose.msra.mxu0 0.0
      %1629 = vmatprep.subr.mxu0 0.0
      %1630 = vmatpush1.xpose.msra.mxu0 0.0
      %1631 = vmatprep.subr.mxu0 0.0
      %1632 = vmatpush1.xpose.msra.mxu0 %v1601
      %1633 = vmatprep.subr.mxu0 0.0
      %1634 = vmatpush1.xpose.msra.mxu0 %v1599
      %1635 = vmatprep.subr.mxu0 0.0
      %1636 = vmatpush2.xpose.msra.mxu0 0.0
      %1637 = vmatprep.subr.mxu0 0.0
      %1638 = vmatpush2.xpose.msra.mxu0 0.0
      %1639 = vmatprep.subr.mxu0 0.0
      %1640 = vmatpush2.xpose.msra.mxu0 0.0
      %1641 = vmatprep.subr.mxu0 0.0
      %1642 = vmatpush2.xpose.msra.mxu0 0.0
      %1643 = vmatprep.subr.mxu0 0.0
      %1644 = vmatpush2.xpose.msra.mxu0 0.0
      %1645 = vmatprep.subr.mxu0 0.0
      %1646 = vmatpush2.xpose.msra.mxu0 0.0
      %1647 = vmatprep.subr.mxu0 0.0
      %1648 = vmatpush2.xpose.msra.mxu0 0.0
      %1649 = vmatprep.subr.mxu0 0.0
      %1650 = vmatpush2.xpose.msra.mxu0 0.0
      %1651 = vmatprep.subr.mxu0 0.0
      %1652 = vmatpush2.xpose.msra.mxu0 0.0
      %1653 = vmatprep.subr.mxu0 0.0
      %1654 = vmatpush2.xpose.msra.mxu0 0.0
      %1655 = vmatprep.subr.mxu0 0.0
      %1656 = vmatpush2.xpose.msra.mxu0 0.0
      %1657 = vmatprep.subr.mxu0 0.0
      %1658 = vmatpush2.xpose.msra.mxu0 0.0
      %1659 = vmatprep.subr.mxu0 0.0
      %1660 = vmatpush2.xpose.msra.mxu0 0.0
      %1661 = vmatprep.subr.mxu0 0.0
      %1662 = vmatpush2.xpose.msra.mxu0 0.0
      %1663 = vmatprep.subr.mxu0 0.0
      %1664 = vmatpush2.xpose.msra.mxu0 0.0
      %1665 = vmatprep.subr.mxu0 0.0
      %1666 = vmatpush2.xpose.msra.mxu0 0.0
      %1667 = vmatprep.mubr.f32.mxu0 0.0
      %1668 = vmatmul.mubr.f32.gmra.mxu0 %v1595
      %v1669 = vpop.f32.mrf.mxu0
      %v1670 = vadd.f32 0.0, %v1669
      %v1671 = vpop.f32.mrf.mxu0
      %1672 = vmatprep.mubr.f32.mxu0 0.0
      %1673 = vmatmul.mubr.f32.gmra.mxu0 %v1597
      %v1674 = vpop.f32.mrf.mxu0
      %v1675 = vadd.f32 0.0, %v1674
      %v1676 = vpop.f32.mrf.mxu0
      %1677 = vdwg.mxu0
      %v1678 = vmul.f32 %v1579, 0.35355338
      %v1679 = vmul.f32 %v1584, 0.35355338
      %v1680 = vmul.f32 %v1670, 0.35355338
      %v1681 = vmul.f32 %v1675, 0.35355338
      %v1682 = vadd.f32 %v1678, %v858
      %v1683 = vadd.f32 %v1679, %v858
      %v1684 = vadd.f32 %v1680, %v862
      %v1685 = vadd.f32 %v1681, %v862
      %v1686 = vsel %vm869, %v1682, -inf
      %1687 = vmax.xlane.f32.xlu0 %v1686
      %v1688 = vpop.xlane.xlu0 %1687
      %v1689 = vsel %vm869, %v1683, -inf
      %1690 = vmax.xlane.f32.xlu0 %v1689
      %v1691 = vpop.xlane.xlu0 %1690
      %v1692 = vsel %vm869, %v1684, -inf
      %1693 = vmax.xlane.f32.xlu0 %v1692
      %v1694 = vpop.xlane.xlu0 %1693
      %v1695 = vsel %vm869, %v1685, -inf
      %1696 = vmax.xlane.f32.xlu0 %v1695
      %v1697 = vpop.xlane.xlu0 %1696
      %v1698 = vsub.f32 %v1682, %v1688
      %v1699 = vsub.f32 %v1683, %v1691
      %v1700 = vsub.f32 %v1684, %v1694
      %v1701 = vsub.f32 %v1685, %v1697
      %v1702 = vmul.f32 %v1698, 1.442695
      %v1703 = vpow.pop %v1702
      %v1704 = vmul.f32 %v1699, 1.442695
      %v1705 = vpow.pop %v1704
      %v1706 = vmul.f32 %v1700, 1.442695
      %v1707 = vpow.pop %v1706
      %v1708 = vmul.f32 %v1701, 1.442695
      %v1709 = vpow.pop %v1708
      %v1710 = vsel %vm869, %v1703, 0.0
      %1711 = vadd.xlane.f32.xlu0 %v1710
      %v1712 = vpop.xlane.xlu0 %1711
      %v1713 = vsel %vm869, %v1705, 0.0
      %1714 = vadd.xlane.f32.xlu0 %v1713
      %v1715 = vpop.xlane.xlu0 %1714
      %v1716 = vsel %vm869, %v1707, 0.0
      %1717 = vadd.xlane.f32.xlu0 %v1716
      %v1718 = vpop.xlane.xlu0 %1717
      %v1719 = vsel %vm869, %v1709, 0.0
      %1720 = vadd.xlane.f32.xlu0 %v1719
      %v1721 = vpop.xlane.xlu0 %1720
      %v1722 = vrcp.pop %v1712
      %v1723 = vrcp.pop %v1715
      %v1724 = vrcp.pop %v1718
      %v1725 = vrcp.pop %v1721
      %v1726 = vmul.f32 %v1703, %v1722
      %v1727 = vmul.f32 %v1705, %v1723
      %v1728 = vmul.f32 %v1707, %v1724
      %v1729 = vmul.f32 %v1709, %v1725
      %1730 = vrot.lane.b32.xlu0 %v652, 48
      %v1731 = vpop.permute.xlu0 %1730
      %1732 = vrot.lane.b32.xlu0 %v657, 48
      %v1733 = vpop.permute.xlu0 %1732
      %v1737 = vsel %vm869, %v1726, 0
      %v1740 = vsel %vm869, %v1727, 0
      %1742 = vmatprep.subr.mxu0 0.0
      %1743 = vmatpush1.msra.mxu0 0.0
      %1744 = vmatprep.subr.mxu0 0.0
      %1745 = vmatpush1.msra.mxu0 0.0
      %1746 = vmatprep.subr.mxu0 0.0
      %1747 = vmatpush1.msra.mxu0 0.0
      %1748 = vmatprep.subr.mxu0 0.0
      %1749 = vmatpush1.msra.mxu0 0.0
      %1750 = vmatprep.subr.mxu0 0.0
      %1751 = vmatpush1.msra.mxu0 0.0
      %1752 = vmatprep.subr.mxu0 0.0
      %1753 = vmatpush1.msra.mxu0 0.0
      %1754 = vmatprep.subr.mxu0 0.0
      %1755 = vmatpush1.msra.mxu0 0.0
      %1756 = vmatprep.subr.mxu0 0.0
      %1757 = vmatpush1.msra.mxu0 0.0
      %1758 = vmatprep.subr.mxu0 0.0
      %1759 = vmatpush1.msra.mxu0 0.0
      %1760 = vmatprep.subr.mxu0 0.0
      %1761 = vmatpush1.msra.mxu0 0.0
      %1762 = vmatprep.subr.mxu0 0.0
      %1763 = vmatpush1.msra.mxu0 0.0
      %1764 = vmatprep.subr.mxu0 0.0
      %1765 = vmatpush1.msra.mxu0 0.0
      %1766 = vmatprep.subr.mxu0 0.0
      %1767 = vmatpush1.msra.mxu0 0.0
      %1768 = vmatprep.subr.mxu0 0.0
      %1769 = vmatpush1.msra.mxu0 0.0
      %1770 = vmatprep.subr.mxu0 0.0
      %1771 = vmatpush1.msra.mxu0 %v1733
      %1772 = vmatprep.subr.mxu0 0.0
      %1773 = vmatpush1.msra.mxu0 %v1731
      %1774 = vmatprep.subr.mxu0 0.0
      %1775 = vmatpush2.msra.mxu0 0.0
      %1776 = vmatprep.subr.mxu0 0.0
      %1777 = vmatpush2.msra.mxu0 0.0
      %1778 = vmatprep.subr.mxu0 0.0
      %1779 = vmatpush2.msra.mxu0 0.0
      %1780 = vmatprep.subr.mxu0 0.0
      %1781 = vmatpush2.msra.mxu0 0.0
      %1782 = vmatprep.subr.mxu0 0.0
      %1783 = vmatpush2.msra.mxu0 0.0
      %1784 = vmatprep.subr.mxu0 0.0
      %1785 = vmatpush2.msra.mxu0 0.0
      %1786 = vmatprep.subr.mxu0 0.0
      %1787 = vmatpush2.msra.mxu0 0.0
      %1788 = vmatprep.subr.mxu0 0.0
      %1789 = vmatpush2.msra.mxu0 0.0
      %1790 = vmatprep.subr.mxu0 0.0
      %1791 = vmatpush2.msra.mxu0 0.0
      %1792 = vmatprep.subr.mxu0 0.0
      %1793 = vmatpush2.msra.mxu0 0.0
      %1794 = vmatprep.subr.mxu0 0.0
      %1795 = vmatpush2.msra.mxu0 0.0
      %1796 = vmatprep.subr.mxu0 0.0
      %1797 = vmatpush2.msra.mxu0 0.0
      %1798 = vmatprep.subr.mxu0 0.0
      %1799 = vmatpush2.msra.mxu0 0.0
      %1800 = vmatprep.subr.mxu0 0.0
      %1801 = vmatpush2.msra.mxu0 0.0
      %1802 = vmatprep.subr.mxu0 0.0
      %1803 = vmatpush2.msra.mxu0 0.0
      %1804 = vmatprep.subr.mxu0 0.0
      %1805 = vmatpush2.msra.mxu0 0.0
      %1806 = vmatprep.mubr.f32.mxu0 0.0
      %1807 = vmatmul.mubr.f32.gmra.mxu0 %v1737
      %v1808 = vpop.f32.mrf.mxu0
      %v1809 = vadd.f32 0.0, %v1808
      %v1810 = vpop.f32.mrf.mxu0
      %1811 = vmatprep.mubr.f32.mxu0 0.0
      %1812 = vmatmul.mubr.f32.gmra.mxu0 %v1740
      %v1813 = vpop.f32.mrf.mxu0
      %v1814 = vadd.f32 0.0, %v1813
      %v1815 = vpop.f32.mrf.mxu0
      %1816 = vdwg.mxu0
      %1817 = vrot.lane.b32.xlu0 %v662, 48
      %v1818 = vpop.permute.xlu0 %1817
      %1819 = vrot.lane.b32.xlu0 %v667, 48
      %v1820 = vpop.permute.xlu0 %1819
      %v1824 = vsel %vm869, %v1728, 0
      %v1827 = vsel %vm869, %v1729, 0
      %1829 = vmatprep.subr.mxu0 0.0
      %1830 = vmatpush1.msra.mxu0 0.0
      %1831 = vmatprep.subr.mxu0 0.0
      %1832 = vmatpush1.msra.mxu0 0.0
      %1833 = vmatprep.subr.mxu0 0.0
      %1834 = vmatpush1.msra.mxu0 0.0
      %1835 = vmatprep.subr.mxu0 0.0
      %1836 = vmatpush1.msra.mxu0 0.0
      %1837 = vmatprep.subr.mxu0 0.0
      %1838 = vmatpush1.msra.mxu0 0.0
      %1839 = vmatprep.subr.mxu0 0.0
      %1840 = vmatpush1.msra.mxu0 0.0
      %1841 = vmatprep.subr.mxu0 0.0
      %1842 = vmatpush1.msra.mxu0 0.0
      %1843 = vmatprep.subr.mxu0 0.0
      %1844 = vmatpush1.msra.mxu0 0.0
      %1845 = vmatprep.subr.mxu0 0.0
      %1846 = vmatpush1.msra.mxu0 0.0
      %1847 = vmatprep.subr.mxu0 0.0
      %1848 = vmatpush1.msra.mxu0 0.0
      %1849 = vmatprep.subr.mxu0 0.0
      %1850 = vmatpush1.msra.mxu0 0.0
      %1851 = vmatprep.subr.mxu0 0.0
      %1852 = vmatpush1.msra.mxu0 0.0
      %1853 = vmatprep.subr.mxu0 0.0
      %1854 = vmatpush1.msra.mxu0 0.0
      %1855 = vmatprep.subr.mxu0 0.0
      %1856 = vmatpush1.msra.mxu0 0.0
      %1857 = vmatprep.subr.mxu0 0.0
      %1858 = vmatpush1.msra.mxu0 %v1820
      %1859 = vmatprep.subr.mxu0 0.0
      %1860 = vmatpush1.msra.mxu0 %v1818
      %1861 = vmatprep.subr.mxu0 0.0
      %1862 = vmatpush2.msra.mxu0 0.0
      %1863 = vmatprep.subr.mxu0 0.0
      %1864 = vmatpush2.msra.mxu0 0.0
      %1865 = vmatprep.subr.mxu0 0.0
      %1866 = vmatpush2.msra.mxu0 0.0
      %1867 = vmatprep.subr.mxu0 0.0
      %1868 = vmatpush2.msra.mxu0 0.0
      %1869 = vmatprep.subr.mxu0 0.0
      %1870 = vmatpush2.msra.mxu0 0.0
      %1871 = vmatprep.subr.mxu0 0.0
      %1872 = vmatpush2.msra.mxu0 0.0
      %1873 = vmatprep.subr.mxu0 0.0
      %1874 = vmatpush2.msra.mxu0 0.0
      %1875 = vmatprep.subr.mxu0 0.0
      %1876 = vmatpush2.msra.mxu0 0.0
      %1877 = vmatprep.subr.mxu0 0.0
      %1878 = vmatpush2.msra.mxu0 0.0
      %1879 = vmatprep.subr.mxu0 0.0
      %1880 = vmatpush2.msra.mxu0 0.0
      %1881 = vmatprep.subr.mxu0 0.0
      %1882 = vmatpush2.msra.mxu0 0.0
      %1883 = vmatprep.subr.mxu0 0.0
      %1884 = vmatpush2.msra.mxu0 0.0
      %1885 = vmatprep.subr.mxu0 0.0
      %1886 = vmatpush2.msra.mxu0 0.0
      %1887 = vmatprep.subr.mxu0 0.0
      %1888 = vmatpush2.msra.mxu0 0.0
      %1889 = vmatprep.subr.mxu0 0.0
      %1890 = vmatpush2.msra.mxu0 0.0
      %1891 = vmatprep.subr.mxu0 0.0
      %1892 = vmatpush2.msra.mxu0 0.0
      %1893 = vmatprep.mubr.f32.mxu0 0.0
      %1894 = vmatmul.mubr.f32.gmra.mxu0 %v1824
      %v1895 = vpop.f32.mrf.mxu0
      %v1896 = vadd.f32 0.0, %v1895
      %v1897 = vpop.f32.mrf.mxu0
      %1898 = vmatprep.mubr.f32.mxu0 0.0
      %1899 = vmatmul.mubr.f32.gmra.mxu0 %v1827
      %v1900 = vpop.f32.mrf.mxu0
      %v1901 = vadd.f32 0.0, %v1900
      %v1902 = vpop.f32.mrf.mxu0
      %1903 = vdwg.mxu0
      %1904 = vrot.lane.b32.xlu0 %v652, 104
      %v1905 = vpop.permute.xlu0 %1904
      %1906 = vrot.lane.b32.xlu0 %v657, 104
      %v1907 = vpop.permute.xlu0 %1906
      %1908 = vrot.lane.b32.xlu0 %v652, 72
      %v1909 = vpop.permute.xlu0 %1908
      %1910 = vrot.lane.b32.xlu0 %v657, 72
      %v1911 = vpop.permute.xlu0 %1910
      %v1912 = vsel %vm676, %v1905, 0
      %v1914 = vsel %vm676, %v1907, 0
      %v1916 = vsel %vm676, %v1909, 0
      %v1918 = vsel %vm676, %v1911, 0
      %1920 = vmatprep.subr.mxu0 0.0
      %1921 = vmatpush1.xpose.msra.mxu0 0.0
      %1922 = vmatprep.subr.mxu0 0.0
      %1923 = vmatpush1.xpose.msra.mxu0 0.0
      %1924 = vmatprep.subr.mxu0 0.0
      %1925 = vmatpush1.xpose.msra.mxu0 0.0
      %1926 = vmatprep.subr.mxu0 0.0
      %1927 = vmatpush1.xpose.msra.mxu0 0.0
      %1928 = vmatprep.subr.mxu0 0.0
      %1929 = vmatpush1.xpose.msra.mxu0 0.0
      %1930 = vmatprep.subr.mxu0 0.0
      %1931 = vmatpush1.xpose.msra.mxu0 0.0
      %1932 = vmatprep.subr.mxu0 0.0
      %1933 = vmatpush1.xpose.msra.mxu0 0.0
      %1934 = vmatprep.subr.mxu0 0.0
      %1935 = vmatpush1.xpose.msra.mxu0 0.0
      %1936 = vmatprep.subr.mxu0 0.0
      %1937 = vmatpush1.xpose.msra.mxu0 0.0
      %1938 = vmatprep.subr.mxu0 0.0
      %1939 = vmatpush1.xpose.msra.mxu0 0.0
      %1940 = vmatprep.subr.mxu0 0.0
      %1941 = vmatpush1.xpose.msra.mxu0 0.0
      %1942 = vmatprep.subr.mxu0 0.0
      %1943 = vmatpush1.xpose.msra.mxu0 0.0
      %1944 = vmatprep.subr.mxu0 0.0
      %1945 = vmatpush1.xpose.msra.mxu0 0.0
      %1946 = vmatprep.subr.mxu0 0.0
      %1947 = vmatpush1.xpose.msra.mxu0 0.0
      %1948 = vmatprep.subr.mxu0 0.0
      %1949 = vmatpush1.xpose.msra.mxu0 %v1918
      %1950 = vmatprep.subr.mxu0 0.0
      %1951 = vmatpush1.xpose.msra.mxu0 %v1916
      %1952 = vmatprep.subr.mxu0 0.0
      %1953 = vmatpush2.xpose.msra.mxu0 0.0
      %1954 = vmatprep.subr.mxu0 0.0
      %1955 = vmatpush2.xpose.msra.mxu0 0.0
      %1956 = vmatprep.subr.mxu0 0.0
      %1957 = vmatpush2.xpose.msra.mxu0 0.0
      %1958 = vmatprep.subr.mxu0 0.0
      %1959 = vmatpush2.xpose.msra.mxu0 0.0
      %1960 = vmatprep.subr.mxu0 0.0
      %1961 = vmatpush2.xpose.msra.mxu0 0.0
      %1962 = vmatprep.subr.mxu0 0.0
      %1963 = vmatpush2.xpose.msra.mxu0 0.0
      %1964 = vmatprep.subr.mxu0 0.0
      %1965 = vmatpush2.xpose.msra.mxu0 0.0
      %1966 = vmatprep.subr.mxu0 0.0
      %1967 = vmatpush2.xpose.msra.mxu0 0.0
      %1968 = vmatprep.subr.mxu0 0.0
      %1969 = vmatpush2.xpose.msra.mxu0 0.0
      %1970 = vmatprep.subr.mxu0 0.0
      %1971 = vmatpush2.xpose.msra.mxu0 0.0
      %1972 = vmatprep.subr.mxu0 0.0
      %1973 = vmatpush2.xpose.msra.mxu0 0.0
      %1974 = vmatprep.subr.mxu0 0.0
      %1975 = vmatpush2.xpose.msra.mxu0 0.0
      %1976 = vmatprep.subr.mxu0 0.0
      %1977 = vmatpush2.xpose.msra.mxu0 0.0
      %1978 = vmatprep.subr.mxu0 0.0
      %1979 = vmatpush2.xpose.msra.mxu0 0.0
      %1980 = vmatprep.subr.mxu0 0.0
      %1981 = vmatpush2.xpose.msra.mxu0 0.0
      %1982 = vmatprep.subr.mxu0 0.0
      %1983 = vmatpush2.xpose.msra.mxu0 0.0
      %1984 = vmatprep.mubr.f32.mxu0 0.0
      %1985 = vmatmul.mubr.f32.gmra.mxu0 %v1912
      %v1986 = vpop.f32.mrf.mxu0
      %v1987 = vadd.f32 0.0, %v1986
      %v1988 = vpop.f32.mrf.mxu0
      %1989 = vmatprep.mubr.f32.mxu0 0.0
      %1990 = vmatmul.mubr.f32.gmra.mxu0 %v1914
      %v1991 = vpop.f32.mrf.mxu0
      %v1992 = vadd.f32 0.0, %v1991
      %v1993 = vpop.f32.mrf.mxu0
      %1994 = vdwg.mxu0
      %1995 = vrot.lane.b32.xlu0 %v662, 104
      %v1996 = vpop.permute.xlu0 %1995
      %1997 = vrot.lane.b32.xlu0 %v667, 104
      %v1998 = vpop.permute.xlu0 %1997
      %1999 = vrot.lane.b32.xlu0 %v662, 72
      %v2000 = vpop.permute.xlu0 %1999
      %2001 = vrot.lane.b32.xlu0 %v667, 72
      %v2002 = vpop.permute.xlu0 %2001
      %v2003 = vsel %vm676, %v1996, 0
      %v2005 = vsel %vm676, %v1998, 0
      %v2007 = vsel %vm676, %v2000, 0
      %v2009 = vsel %vm676, %v2002, 0
      %2011 = vmatprep.subr.mxu0 0.0
      %2012 = vmatpush1.xpose.msra.mxu0 0.0
      %2013 = vmatprep.subr.mxu0 0.0
      %2014 = vmatpush1.xpose.msra.mxu0 0.0
      %2015 = vmatprep.subr.mxu0 0.0
      %2016 = vmatpush1.xpose.msra.mxu0 0.0
      %2017 = vmatprep.subr.mxu0 0.0
      %2018 = vmatpush1.xpose.msra.mxu0 0.0
      %2019 = vmatprep.subr.mxu0 0.0
      %2020 = vmatpush1.xpose.msra.mxu0 0.0
      %2021 = vmatprep.subr.mxu0 0.0
      %2022 = vmatpush1.xpose.msra.mxu0 0.0
      %2023 = vmatprep.subr.mxu0 0.0
      %2024 = vmatpush1.xpose.msra.mxu0 0.0
      %2025 = vmatprep.subr.mxu0 0.0
      %2026 = vmatpush1.xpose.msra.mxu0 0.0
      %2027 = vmatprep.subr.mxu0 0.0
      %2028 = vmatpush1.xpose.msra.mxu0 0.0
      %2029 = vmatprep.subr.mxu0 0.0
      %2030 = vmatpush1.xpose.msra.mxu0 0.0
      %2031 = vmatprep.subr.mxu0 0.0
      %2032 = vmatpush1.xpose.msra.mxu0 0.0
      %2033 = vmatprep.subr.mxu0 0.0
      %2034 = vmatpush1.xpose.msra.mxu0 0.0
      %2035 = vmatprep.subr.mxu0 0.0
      %2036 = vmatpush1.xpose.msra.mxu0 0.0
      %2037 = vmatprep.subr.mxu0 0.0
      %2038 = vmatpush1.xpose.msra.mxu0 0.0
      %2039 = vmatprep.subr.mxu0 0.0
      %2040 = vmatpush1.xpose.msra.mxu0 %v2009
      %2041 = vmatprep.subr.mxu0 0.0
      %2042 = vmatpush1.xpose.msra.mxu0 %v2007
      %2043 = vmatprep.subr.mxu0 0.0
      %2044 = vmatpush2.xpose.msra.mxu0 0.0
      %2045 = vmatprep.subr.mxu0 0.0
      %2046 = vmatpush2.xpose.msra.mxu0 0.0
      %2047 = vmatprep.subr.mxu0 0.0
      %2048 = vmatpush2.xpose.msra.mxu0 0.0
      %2049 = vmatprep.subr.mxu0 0.0
      %2050 = vmatpush2.xpose.msra.mxu0 0.0
      %2051 = vmatprep.subr.mxu0 0.0
      %2052 = vmatpush2.xpose.msra.mxu0 0.0
      %2053 = vmatprep.subr.mxu0 0.0
      %2054 = vmatpush2.xpose.msra.mxu0 0.0
      %2055 = vmatprep.subr.mxu0 0.0
      %2056 = vmatpush2.xpose.msra.mxu0 0.0
      %2057 = vmatprep.subr.mxu0 0.0
      %2058 = vmatpush2.xpose.msra.mxu0 0.0
      %2059 = vmatprep.subr.mxu0 0.0
      %2060 = vmatpush2.xpose.msra.mxu0 0.0
      %2061 = vmatprep.subr.mxu0 0.0
      %2062 = vmatpush2.xpose.msra.mxu0 0.0
      %2063 = vmatprep.subr.mxu0 0.0
      %2064 = vmatpush2.xpose.msra.mxu0 0.0
      %2065 = vmatprep.subr.mxu0 0.0
      %2066 = vmatpush2.xpose.msra.mxu0 0.0
      %2067 = vmatprep.subr.mxu0 0.0
      %2068 = vmatpush2.xpose.msra.mxu0 0.0
      %2069 = vmatprep.subr.mxu0 0.0
      %2070 = vmatpush2.xpose.msra.mxu0 0.0
      %2071 = vmatprep.subr.mxu0 0.0
      %2072 = vmatpush2.xpose.msra.mxu0 0.0
      %2073 = vmatprep.subr.mxu0 0.0
      %2074 = vmatpush2.xpose.msra.mxu0 0.0
      %2075 = vmatprep.mubr.f32.mxu0 0.0
      %2076 = vmatmul.mubr.f32.gmra.mxu0 %v2003
      %v2077 = vpop.f32.mrf.mxu0
      %v2078 = vadd.f32 0.0, %v2077
      %v2079 = vpop.f32.mrf.mxu0
      %2080 = vmatprep.mubr.f32.mxu0 0.0
      %2081 = vmatmul.mubr.f32.gmra.mxu0 %v2005
      %v2082 = vpop.f32.mrf.mxu0
      %v2083 = vadd.f32 0.0, %v2082
      %v2084 = vpop.f32.mrf.mxu0
      %2085 = vdwg.mxu0
      %v2086 = vmul.f32 %v1987, 0.35355338
      %v2087 = vmul.f32 %v1992, 0.35355338
      %v2088 = vmul.f32 %v2078, 0.35355338
      %v2089 = vmul.f32 %v2083, 0.35355338
      %v2090 = vadd.f32 %v2086, %v858
      %v2091 = vadd.f32 %v2087, %v858
      %v2092 = vadd.f32 %v2088, %v862
      %v2093 = vadd.f32 %v2089, %v862
      %v2094 = vsel %vm869, %v2090, -inf
      %2095 = vmax.xlane.f32.xlu0 %v2094
      %v2096 = vpop.xlane.xlu0 %2095
      %v2097 = vsel %vm869, %v2091, -inf
      %2098 = vmax.xlane.f32.xlu0 %v2097
      %v2099 = vpop.xlane.xlu0 %2098
      %v2100 = vsel %vm869, %v2092, -inf
      %2101 = vmax.xlane.f32.xlu0 %v2100
      %v2102 = vpop.xlane.xlu0 %2101
      %v2103 = vsel %vm869, %v2093, -inf
      %2104 = vmax.xlane.f32.xlu0 %v2103
      %v2105 = vpop.xlane.xlu0 %2104
      %v2106 = vsub.f32 %v2090, %v2096
      %v2107 = vsub.f32 %v2091, %v2099
      %v2108 = vsub.f32 %v2092, %v2102
      %v2109 = vsub.f32 %v2093, %v2105
      %v2110 = vmul.f32 %v2106, 1.442695
      %v2111 = vpow.pop %v2110
      %v2112 = vmul.f32 %v2107, 1.442695
      %v2113 = vpow.pop %v2112
      %v2114 = vmul.f32 %v2108, 1.442695
      %v2115 = vpow.pop %v2114
      %v2116 = vmul.f32 %v2109, 1.442695
      %v2117 = vpow.pop %v2116
      %v2118 = vsel %vm869, %v2111, 0.0
      %2119 = vadd.xlane.f32.xlu0 %v2118
      %v2120 = vpop.xlane.xlu0 %2119
      %v2121 = vsel %vm869, %v2113, 0.0
      %2122 = vadd.xlane.f32.xlu0 %v2121
      %v2123 = vpop.xlane.xlu0 %2122
      %v2124 = vsel %vm869, %v2115, 0.0
      %2125 = vadd.xlane.f32.xlu0 %v2124
      %v2126 = vpop.xlane.xlu0 %2125
      %v2127 = vsel %vm869, %v2117, 0.0
      %2128 = vadd.xlane.f32.xlu0 %v2127
      %v2129 = vpop.xlane.xlu0 %2128
      %v2130 = vrcp.pop %v2120
      %v2131 = vrcp.pop %v2123
      %v2132 = vrcp.pop %v2126
      %v2133 = vrcp.pop %v2129
      %v2134 = vmul.f32 %v2111, %v2130
      %v2135 = vmul.f32 %v2113, %v2131
      %v2136 = vmul.f32 %v2115, %v2132
      %v2137 = vmul.f32 %v2117, %v2133
      %2138 = vrot.lane.b32.xlu0 %v652, 40
      %v2139 = vpop.permute.xlu0 %2138
      %2140 = vrot.lane.b32.xlu0 %v657, 40
      %v2141 = vpop.permute.xlu0 %2140
      %v2145 = vsel %vm869, %v2134, 0
      %v2148 = vsel %vm869, %v2135, 0
      %2150 = vmatprep.subr.mxu0 0.0
      %2151 = vmatpush1.msra.mxu0 0.0
      %2152 = vmatprep.subr.mxu0 0.0
      %2153 = vmatpush1.msra.mxu0 0.0
      %2154 = vmatprep.subr.mxu0 0.0
      %2155 = vmatpush1.msra.mxu0 0.0
      %2156 = vmatprep.subr.mxu0 0.0
      %2157 = vmatpush1.msra.mxu0 0.0
      %2158 = vmatprep.subr.mxu0 0.0
      %2159 = vmatpush1.msra.mxu0 0.0
      %2160 = vmatprep.subr.mxu0 0.0
      %2161 = vmatpush1.msra.mxu0 0.0
      %2162 = vmatprep.subr.mxu0 0.0
      %2163 = vmatpush1.msra.mxu0 0.0
      %2164 = vmatprep.subr.mxu0 0.0
      %2165 = vmatpush1.msra.mxu0 0.0
      %2166 = vmatprep.subr.mxu0 0.0
      %2167 = vmatpush1.msra.mxu0 0.0
      %2168 = vmatprep.subr.mxu0 0.0
      %2169 = vmatpush1.msra.mxu0 0.0
      %2170 = vmatprep.subr.mxu0 0.0
      %2171 = vmatpush1.msra.mxu0 0.0
      %2172 = vmatprep.subr.mxu0 0.0
      %2173 = vmatpush1.msra.mxu0 0.0
      %2174 = vmatprep.subr.mxu0 0.0
      %2175 = vmatpush1.msra.mxu0 0.0
      %2176 = vmatprep.subr.mxu0 0.0
      %2177 = vmatpush1.msra.mxu0 0.0
      %2178 = vmatprep.subr.mxu0 0.0
      %2179 = vmatpush1.msra.mxu0 %v2141
      %2180 = vmatprep.subr.mxu0 0.0
      %2181 = vmatpush1.msra.mxu0 %v2139
      %2182 = vmatprep.subr.mxu0 0.0
      %2183 = vmatpush2.msra.mxu0 0.0
      %2184 = vmatprep.subr.mxu0 0.0
      %2185 = vmatpush2.msra.mxu0 0.0
      %2186 = vmatprep.subr.mxu0 0.0
      %2187 = vmatpush2.msra.mxu0 0.0
      %2188 = vmatprep.subr.mxu0 0.0
      %2189 = vmatpush2.msra.mxu0 0.0
      %2190 = vmatprep.subr.mxu0 0.0
      %2191 = vmatpush2.msra.mxu0 0.0
      %2192 = vmatprep.subr.mxu0 0.0
      %2193 = vmatpush2.msra.mxu0 0.0
      %2194 = vmatprep.subr.mxu0 0.0
      %2195 = vmatpush2.msra.mxu0 0.0
      %2196 = vmatprep.subr.mxu0 0.0
      %2197 = vmatpush2.msra.mxu0 0.0
      %2198 = vmatprep.subr.mxu0 0.0
      %2199 = vmatpush2.msra.mxu0 0.0
      %2200 = vmatprep.subr.mxu0 0.0
      %2201 = vmatpush2.msra.mxu0 0.0
      %2202 = vmatprep.subr.mxu0 0.0
      %2203 = vmatpush2.msra.mxu0 0.0
      %2204 = vmatprep.subr.mxu0 0.0
      %2205 = vmatpush2.msra.mxu0 0.0
      %2206 = vmatprep.subr.mxu0 0.0
      %2207 = vmatpush2.msra.mxu0 0.0
      %2208 = vmatprep.subr.mxu0 0.0
      %2209 = vmatpush2.msra.mxu0 0.0
      %2210 = vmatprep.subr.mxu0 0.0
      %2211 = vmatpush2.msra.mxu0 0.0
      %2212 = vmatprep.subr.mxu0 0.0
      %2213 = vmatpush2.msra.mxu0 0.0
      %2214 = vmatprep.mubr.f32.mxu0 0.0
      %2215 = vmatmul.mubr.f32.gmra.mxu0 %v2145
      %v2216 = vpop.f32.mrf.mxu0
      %v2217 = vadd.f32 0.0, %v2216
      %v2218 = vpop.f32.mrf.mxu0
      %2219 = vmatprep.mubr.f32.mxu0 0.0
      %2220 = vmatmul.mubr.f32.gmra.mxu0 %v2148
      %v2221 = vpop.f32.mrf.mxu0
      %v2222 = vadd.f32 0.0, %v2221
      %v2223 = vpop.f32.mrf.mxu0
      %2224 = vdwg.mxu0
      %2225 = vrot.lane.b32.xlu0 %v662, 40
      %v2226 = vpop.permute.xlu0 %2225
      %2227 = vrot.lane.b32.xlu0 %v667, 40
      %v2228 = vpop.permute.xlu0 %2227
      %v2232 = vsel %vm869, %v2136, 0
      %v2235 = vsel %vm869, %v2137, 0
      %2237 = vmatprep.subr.mxu0 0.0
      %2238 = vmatpush1.msra.mxu0 0.0
      %2239 = vmatprep.subr.mxu0 0.0
      %2240 = vmatpush1.msra.mxu0 0.0
      %2241 = vmatprep.subr.mxu0 0.0
      %2242 = vmatpush1.msra.mxu0 0.0
      %2243 = vmatprep.subr.mxu0 0.0
      %2244 = vmatpush1.msra.mxu0 0.0
      %2245 = vmatprep.subr.mxu0 0.0
      %2246 = vmatpush1.msra.mxu0 0.0
      %2247 = vmatprep.subr.mxu0 0.0
      %2248 = vmatpush1.msra.mxu0 0.0
      %2249 = vmatprep.subr.mxu0 0.0
      %2250 = vmatpush1.msra.mxu0 0.0
      %2251 = vmatprep.subr.mxu0 0.0
      %2252 = vmatpush1.msra.mxu0 0.0
      %2253 = vmatprep.subr.mxu0 0.0
      %2254 = vmatpush1.msra.mxu0 0.0
      %2255 = vmatprep.subr.mxu0 0.0
      %2256 = vmatpush1.msra.mxu0 0.0
      %2257 = vmatprep.subr.mxu0 0.0
      %2258 = vmatpush1.msra.mxu0 0.0
      %2259 = vmatprep.subr.mxu0 0.0
      %2260 = vmatpush1.msra.mxu0 0.0
      %2261 = vmatprep.subr.mxu0 0.0
      %2262 = vmatpush1.msra.mxu0 0.0
      %2263 = vmatprep.subr.mxu0 0.0
      %2264 = vmatpush1.msra.mxu0 0.0
      %2265 = vmatprep.subr.mxu0 0.0
      %2266 = vmatpush1.msra.mxu0 %v2228
      %2267 = vmatprep.subr.mxu0 0.0
      %2268 = vmatpush1.msra.mxu0 %v2226
      %2269 = vmatprep.subr.mxu0 0.0
      %2270 = vmatpush2.msra.mxu0 0.0
      %2271 = vmatprep.subr.mxu0 0.0
      %2272 = vmatpush2.msra.mxu0 0.0
      %2273 = vmatprep.subr.mxu0 0.0
      %2274 = vmatpush2.msra.mxu0 0.0
      %2275 = vmatprep.subr.mxu0 0.0
      %2276 = vmatpush2.msra.mxu0 0.0
      %2277 = vmatprep.subr.mxu0 0.0
      %2278 = vmatpush2.msra.mxu0 0.0
      %2279 = vmatprep.subr.mxu0 0.0
      %2280 = vmatpush2.msra.mxu0 0.0
      %2281 = vmatprep.subr.mxu0 0.0
      %2282 = vmatpush2.msra.mxu0 0.0
      %2283 = vmatprep.subr.mxu0 0.0
      %2284 = vmatpush2.msra.mxu0 0.0
      %2285 = vmatprep.subr.mxu0 0.0
      %2286 = vmatpush2.msra.mxu0 0.0
      %2287 = vmatprep.subr.mxu0 0.0
      %2288 = vmatpush2.msra.mxu0 0.0
      %2289 = vmatprep.subr.mxu0 0.0
      %2290 = vmatpush2.msra.mxu0 0.0
      %2291 = vmatprep.subr.mxu0 0.0
      %2292 = vmatpush2.msra.mxu0 0.0
      %2293 = vmatprep.subr.mxu0 0.0
      %2294 = vmatpush2.msra.mxu0 0.0
      %2295 = vmatprep.subr.mxu0 0.0
      %2296 = vmatpush2.msra.mxu0 0.0
      %2297 = vmatprep.subr.mxu0 0.0
      %2298 = vmatpush2.msra.mxu0 0.0
      %2299 = vmatprep.subr.mxu0 0.0
      %2300 = vmatpush2.msra.mxu0 0.0
      %2301 = vmatprep.mubr.f32.mxu0 0.0
      %2302 = vmatmul.mubr.f32.gmra.mxu0 %v2232
      %v2303 = vpop.f32.mrf.mxu0
      %v2304 = vadd.f32 0.0, %v2303
      %v2305 = vpop.f32.mrf.mxu0
      %2306 = vmatprep.mubr.f32.mxu0 0.0
      %2307 = vmatmul.mubr.f32.gmra.mxu0 %v2235
      %v2308 = vpop.f32.mrf.mxu0
      %v2309 = vadd.f32 0.0, %v2308
      %v2310 = vpop.f32.mrf.mxu0
      %2311 = vdwg.mxu0
      %2316 = vrot.lane.b32.xlu0 %v1401, 8
      %v2317 = vpop.permute.xlu0 %2316
      %2318 = vrot.lane.b32.xlu0 %v1406, 8
      %v2319 = vpop.permute.xlu0 %2318
      %2320 = vrot.lane.b32.xlu0 %v1488, 8
      %v2321 = vpop.permute.xlu0 %2320
      %2322 = vrot.lane.b32.xlu0 %v1493, 8
      %v2323 = vpop.permute.xlu0 %2322
      %2332 = vrot.lane.b32.xlu0 %v1809, 16
      %v2333 = vpop.permute.xlu0 %2332
      %2334 = vrot.lane.b32.xlu0 %v1814, 16
      %v2335 = vpop.permute.xlu0 %2334
      %2336 = vrot.lane.b32.xlu0 %v1896, 16
      %v2337 = vpop.permute.xlu0 %2336
      %2338 = vrot.lane.b32.xlu0 %v1901, 16
      %v2339 = vpop.permute.xlu0 %2338
      %2348 = vrot.lane.b32.xlu0 %v2217, 24
      %v2349 = vpop.permute.xlu0 %2348
      %2350 = vrot.lane.b32.xlu0 %v2222, 24
      %v2351 = vpop.permute.xlu0 %2350
      %2352 = vrot.lane.b32.xlu0 %v2304, 24
      %v2353 = vpop.permute.xlu0 %2352
      %2354 = vrot.lane.b32.xlu0 %v2309, 24
      %v2355 = vpop.permute.xlu0 %2354
      %v2360 = vsel %vm676, %v993, %v2317
      %v2361 = vsel %vm676, %v998, %v2319
      %v2362 = vsel %vm676, %v1080, %v2321
      %v2363 = vsel %vm676, %v1085, %v2323
      %v2364 = vsel %vm869, %v2360, %v2333
      %v2365 = vsel %vm869, %v2361, %v2335
      %v2366 = vsel %vm869, %v2362, %v2337
      %v2367 = vsel %vm869, %v2363, %v2339
      %vm2368 = vcmask 195584
      %v2369 = vsel %vm2368, %v2364, %v2349
      %v2370 = vsel %vm2368, %v2365, %v2351
      %v2371 = vsel %vm2368, %v2366, %v2353
      %v2372 = vsel %vm2368, %v2367, %v2355
      %v2373 = vld [vmem:[%s456] sm:$0xff]
      %v2374 = vld [vmem:[%s456 + $0x8] sm:$0xff]
      %v2375 = vld [vmem:[%s456 + $0x10] sm:$0xff]
      %v2376 = vld [vmem:[%s456 + $0x18] sm:$0xff]
      %s2377 = scalar_lea.vmem %s474, 2
      %v2378 = vld [vmem:[%s2377] sm:$0x1]
      %v2380 = vlaneseq
      %v2381 = vshrl.u32 %v2380, 7
      %v2382 = vsub.s32 0, %v2381
      %v2383 = vrot.slane %v2378, %v2382
      %v2386 = vsel %vm486, %v2369, 0
      %v2389 = vsel %vm486, %v2370, 0
      %v2392 = vsel %vm486, %v2371, 0
      %v2395 = vsel %vm486, %v2372, 0
      %2397 = vmatprep.subr.mxu0 0.0
      %2398 = vmatpush1.msra.mxu0 0.0
      %2399 = vmatprep.subr.mxu0 0.0
      %2400 = vmatpush1.msra.mxu0 0.0
      %2401 = vmatprep.subr.mxu0 0.0
      %2402 = vmatpush1.msra.mxu0 0.0
      %2403 = vmatprep.subr.mxu0 0.0
      %2404 = vmatpush1.msra.mxu0 0.0
      %2405 = vmatprep.subr.mxu0 0.0
      %2406 = vmatpush1.msra.mxu0 0.0
      %2407 = vmatprep.subr.mxu0 0.0
      %2408 = vmatpush1.msra.mxu0 0.0
      %2409 = vmatprep.subr.mxu0 0.0
      %2410 = vmatpush1.msra.mxu0 0.0
      %2411 = vmatprep.subr.mxu0 0.0
      %2412 = vmatpush1.msra.mxu0 0.0
      %2413 = vmatprep.subr.mxu0 0.0
      %2414 = vmatpush1.msra.mxu0 0.0
      %2415 = vmatprep.subr.mxu0 0.0
      %2416 = vmatpush1.msra.mxu0 0.0
      %2417 = vmatprep.subr.mxu0 0.0
      %2418 = vmatpush1.msra.mxu0 0.0
      %2419 = vmatprep.subr.mxu0 0.0
      %2420 = vmatpush1.msra.mxu0 0.0
      %2421 = vmatprep.subr.mxu0 0.0
      %2422 = vmatpush1.msra.mxu0 %v2376
      %2423 = vmatprep.subr.mxu0 0.0
      %2424 = vmatpush1.msra.mxu0 %v2375
      %2425 = vmatprep.subr.mxu0 0.0
      %2426 = vmatpush1.msra.mxu0 %v2374
      %2427 = vmatprep.subr.mxu0 0.0
      %2428 = vmatpush1.msra.mxu0 %v2373
      %2429 = vmatprep.subr.mxu0 0.0
      %2430 = vmatpush2.msra.mxu0 0.0
      %2431 = vmatprep.subr.mxu0 0.0
      %2432 = vmatpush2.msra.mxu0 0.0
      %2433 = vmatprep.subr.mxu0 0.0
      %2434 = vmatpush2.msra.mxu0 0.0
      %2435 = vmatprep.subr.mxu0 0.0
      %2436 = vmatpush2.msra.mxu0 0.0
      %2437 = vmatprep.subr.mxu0 0.0
      %2438 = vmatpush2.msra.mxu0 0.0
      %2439 = vmatprep.subr.mxu0 0.0
      %2440 = vmatpush2.msra.mxu0 0.0
      %2441 = vmatprep.subr.mxu0 0.0
      %2442 = vmatpush2.msra.mxu0 0.0
      %2443 = vmatprep.subr.mxu0 0.0
      %2444 = vmatpush2.msra.mxu0 0.0
      %2445 = vmatprep.subr.mxu0 0.0
      %2446 = vmatpush2.msra.mxu0 0.0
      %2447 = vmatprep.subr.mxu0 0.0
      %2448 = vmatpush2.msra.mxu0 0.0
      %2449 = vmatprep.subr.mxu0 0.0
      %2450 = vmatpush2.msra.mxu0 0.0
      %2451 = vmatprep.subr.mxu0 0.0
      %2452 = vmatpush2.msra.mxu0 0.0
      %2453 = vmatprep.subr.mxu0 0.0
      %2454 = vmatpush2.msra.mxu0 0.0
      %2455 = vmatprep.subr.mxu0 0.0
      %2456 = vmatpush2.msra.mxu0 0.0
      %2457 = vmatprep.subr.mxu0 0.0
      %2458 = vmatpush2.msra.mxu0 0.0
      %2459 = vmatprep.subr.mxu0 0.0
      %2460 = vmatpush2.msra.mxu0 0.0
      %2461 = vmatprep.mubr.f32.mxu0 0.0
      %2462 = vmatmul.mubr.f32.gmra.mxu0 %v2386
      %v2463 = vpop.f32.mrf.mxu0
      %v2464 = vadd.f32 %v2383, %v2463
      %v2465 = vpop.f32.mrf.mxu0
      %2466 = vmatprep.mubr.f32.mxu0 0.0
      %2467 = vmatmul.mubr.f32.gmra.mxu0 %v2389
      %v2468 = vpop.f32.mrf.mxu0
      %v2469 = vadd.f32 %v2383, %v2468
      %v2470 = vpop.f32.mrf.mxu0
      %2471 = vmatprep.mubr.f32.mxu0 0.0
      %2472 = vmatmul.mubr.f32.gmra.mxu0 %v2392
      %v2473 = vpop.f32.mrf.mxu0
      %v2474 = vadd.f32 %v2383, %v2473
      %v2475 = vpop.f32.mrf.mxu0
      %2476 = vmatprep.mubr.f32.mxu0 0.0
      %2477 = vmatmul.mubr.f32.gmra.mxu0 %v2395
      %v2478 = vpop.f32.mrf.mxu0
      %v2479 = vadd.f32 %v2383, %v2478
      %v2480 = vpop.f32.mrf.mxu0
      %2481 = vdwg.mxu0
      %v2482 = vadd.f32 %v556, %v2464
      %v2483 = vadd.f32 %v557, %v2469
      %v2484 = vadd.f32 %v558, %v2474
      %v2485 = vadd.f32 %v559, %v2479
      %s2486 = scalar_lea.vmem %s474, 3
      %v2487 = vld [vmem:[%s2486] sm:$0x1]
      %s2488 = scalar_lea.vmem %s474, 4
      %v2489 = vld [vmem:[%s2488] sm:$0x1]
      %v2490 = vsel %vm486, %v2482, 0.0
      %2491 = vadd.xlane.f32.xlu0 %v2490
      %v2492 = vpop.xlane.xlu0 %2491
      %v2493 = vsel %vm486, %v2483, 0.0
      %2494 = vadd.xlane.f32.xlu0 %v2493
      %v2495 = vpop.xlane.xlu0 %2494
      %v2496 = vsel %vm486, %v2484, 0.0
      %2497 = vadd.xlane.f32.xlu0 %v2496
      %v2498 = vpop.xlane.xlu0 %2497
      %v2499 = vsel %vm486, %v2485, 0.0
      %2500 = vadd.xlane.f32.xlu0 %v2499
      %v2501 = vpop.xlane.xlu0 %2500
      %v2502 = vmul.f32 %v2492, %v499
      %v2503 = vmul.f32 %v2495, %v499
      %v2504 = vmul.f32 %v2498, %v499
      %v2505 = vmul.f32 %v2501, %v499
      %v2506 = vsub.f32 %v2482, %v2502
      %v2507 = vsub.f32 %v2483, %v2503
      %v2508 = vsub.f32 %v2484, %v2504
      %v2509 = vsub.f32 %v2485, %v2505
      %v2510 = vmul.f32 %v2506, %v2506
      %v2511 = vmul.f32 %v2507, %v2507
      %v2512 = vmul.f32 %v2508, %v2508
      %v2513 = vmul.f32 %v2509, %v2509
      %v2514 = vsel %vm486, %v2510, 0.0
      %2515 = vadd.xlane.f32.xlu0 %v2514
      %v2516 = vpop.xlane.xlu0 %2515
      %v2517 = vsel %vm486, %v2511, 0.0
      %2518 = vadd.xlane.f32.xlu0 %v2517
      %v2519 = vpop.xlane.xlu0 %2518
      %v2520 = vsel %vm486, %v2512, 0.0
      %2521 = vadd.xlane.f32.xlu0 %v2520
      %v2522 = vpop.xlane.xlu0 %2521
      %v2523 = vsel %vm486, %v2513, 0.0
      %2524 = vadd.xlane.f32.xlu0 %v2523
      %v2525 = vpop.xlane.xlu0 %2524
      %v2526 = vmul.f32 %v2516, %v499
      %v2527 = vmul.f32 %v2519, %v499
      %v2528 = vmul.f32 %v2522, %v499
      %v2529 = vmul.f32 %v2525, %v499
      %v2530 = vadd.f32 %v2526, 1e-12
      %v2531 = vadd.f32 %v2527, 1e-12
      %v2532 = vadd.f32 %v2528, 1e-12
      %v2533 = vadd.f32 %v2529, 1e-12
      %v2534 = vrsqrt.pop %v2530
      %v2535 = vrsqrt.pop %v2531
      %v2536 = vrsqrt.pop %v2532
      %v2537 = vrsqrt.pop %v2533
      %v2538 = vmul.f32 %v2506, %v2534
      %v2539 = vmul.f32 %v2507, %v2535
      %v2540 = vmul.f32 %v2508, %v2536
      %v2541 = vmul.f32 %v2509, %v2537
      %v2543 = vlaneseq
      %v2544 = vshrl.u32 %v2543, 7
      %v2545 = vsub.s32 0, %v2544
      %v2546 = vrot.slane %v2487, %v2545
      %v2548 = vmul.f32 %v2538, %v2546
      %v2549 = vmul.f32 %v2539, %v2546
      %v2550 = vmul.f32 %v2540, %v2546
      %v2551 = vmul.f32 %v2541, %v2546
      %v2553 = vlaneseq
      %v2554 = vshrl.u32 %v2553, 7
      %v2555 = vsub.s32 0, %v2554
      %v2556 = vrot.slane %v2489, %v2555
      %v2558 = vadd.f32 %v2548, %v2556
      %v2559 = vadd.f32 %v2549, %v2556
      %v2560 = vadd.f32 %v2550, %v2556
      %v2561 = vadd.f32 %v2551, %v2556
      %v2562 = vld [vmem:[%s461] sm:$0xff]
      %v2563 = vld [vmem:[%s461 + $0x8] sm:$0xff]
      %v2564 = vld [vmem:[%s461 + $0x10] sm:$0xff]
      %v2565 = vld [vmem:[%s461 + $0x18] sm:$0xff]
      %v2566 = vld [vmem:[%s470] sm:$0x1]
      %v2568 = vlaneseq
      %v2569 = vshrl.u32 %v2568, 7
      %v2570 = vsub.s32 0, %v2569
      %v2571 = vrot.slane %v2566, %v2570
      %v2574 = vsel %vm486, %v2558, 0
      %v2577 = vsel %vm486, %v2559, 0
      %v2580 = vsel %vm486, %v2560, 0
      %v2583 = vsel %vm486, %v2561, 0
      %2585 = vmatprep.subr.mxu0 0.0
      %2586 = vmatpush1.msra.mxu0 0.0
      %2587 = vmatprep.subr.mxu0 0.0
      %2588 = vmatpush1.msra.mxu0 0.0
      %2589 = vmatprep.subr.mxu0 0.0
      %2590 = vmatpush1.msra.mxu0 0.0
      %2591 = vmatprep.subr.mxu0 0.0
      %2592 = vmatpush1.msra.mxu0 0.0
      %2593 = vmatprep.subr.mxu0 0.0
      %2594 = vmatpush1.msra.mxu0 0.0
      %2595 = vmatprep.subr.mxu0 0.0
      %2596 = vmatpush1.msra.mxu0 0.0
      %2597 = vmatprep.subr.mxu0 0.0
      %2598 = vmatpush1.msra.mxu0 0.0
      %2599 = vmatprep.subr.mxu0 0.0
      %2600 = vmatpush1.msra.mxu0 0.0
      %2601 = vmatprep.subr.mxu0 0.0
      %2602 = vmatpush1.msra.mxu0 0.0
      %2603 = vmatprep.subr.mxu0 0.0
      %2604 = vmatpush1.msra.mxu0 0.0
      %2605 = vmatprep.subr.mxu0 0.0
      %2606 = vmatpush1.msra.mxu0 0.0
      %2607 = vmatprep.subr.mxu0 0.0
      %2608 = vmatpush1.msra.mxu0 0.0
      %2609 = vmatprep.subr.mxu0 0.0
      %2610 = vmatpush1.msra.mxu0 %v2565
      %2611 = vmatprep.subr.mxu0 0.0
      %2612 = vmatpush1.msra.mxu0 %v2564
      %2613 = vmatprep.subr.mxu0 0.0
      %2614 = vmatpush1.msra.mxu0 %v2563
      %2615 = vmatprep.subr.mxu0 0.0
      %2616 = vmatpush1.msra.mxu0 %v2562
      %2617 = vmatprep.subr.mxu0 0.0
      %2618 = vmatpush2.msra.mxu0 0.0
      %2619 = vmatprep.subr.mxu0 0.0
      %2620 = vmatpush2.msra.mxu0 0.0
      %2621 = vmatprep.subr.mxu0 0.0
      %2622 = vmatpush2.msra.mxu0 0.0
      %2623 = vmatprep.subr.mxu0 0.0
      %2624 = vmatpush2.msra.mxu0 0.0
      %2625 = vmatprep.subr.mxu0 0.0
      %2626 = vmatpush2.msra.mxu0 0.0
      %2627 = vmatprep.subr.mxu0 0.0
      %2628 = vmatpush2.msra.mxu0 0.0
      %2629 = vmatprep.subr.mxu0 0.0
      %2630 = vmatpush2.msra.mxu0 0.0
      %2631 = vmatprep.subr.mxu0 0.0
      %2632 = vmatpush2.msra.mxu0 0.0
      %2633 = vmatprep.subr.mxu0 0.0
      %2634 = vmatpush2.msra.mxu0 0.0
      %2635 = vmatprep.subr.mxu0 0.0
      %2636 = vmatpush2.msra.mxu0 0.0
      %2637 = vmatprep.subr.mxu0 0.0
      %2638 = vmatpush2.msra.mxu0 0.0
      %2639 = vmatprep.subr.mxu0 0.0
      %2640 = vmatpush2.msra.mxu0 0.0
      %2641 = vmatprep.subr.mxu0 0.0
      %2642 = vmatpush2.msra.mxu0 0.0
      %2643 = vmatprep.subr.mxu0 0.0
      %2644 = vmatpush2.msra.mxu0 0.0
      %2645 = vmatprep.subr.mxu0 0.0
      %2646 = vmatpush2.msra.mxu0 0.0
      %2647 = vmatprep.subr.mxu0 0.0
      %2648 = vmatpush2.msra.mxu0 0.0
      %2649 = vmatprep.mubr.f32.mxu0 0.0
      %2650 = vmatmul.mubr.f32.gmra.mxu0 %v2574
      %v2651 = vpop.f32.mrf.mxu0
      %v2652 = vadd.f32 %v2571, %v2651
      %v2653 = vpop.f32.mrf.mxu0
      %2654 = vmatprep.mubr.f32.mxu0 0.0
      %2655 = vmatmul.mubr.f32.gmra.mxu0 %v2577
      %v2656 = vpop.f32.mrf.mxu0
      %v2657 = vadd.f32 %v2571, %v2656
      %v2658 = vpop.f32.mrf.mxu0
      %2659 = vmatprep.mubr.f32.mxu0 0.0
      %2660 = vmatmul.mubr.f32.gmra.mxu0 %v2580
      %v2661 = vpop.f32.mrf.mxu0
      %v2662 = vadd.f32 %v2571, %v2661
      %v2663 = vpop.f32.mrf.mxu0
      %2664 = vmatprep.mubr.f32.mxu0 0.0
      %2665 = vmatmul.mubr.f32.gmra.mxu0 %v2583
      %v2666 = vpop.f32.mrf.mxu0
      %v2667 = vadd.f32 %v2571, %v2666
      %v2668 = vpop.f32.mrf.mxu0
      %2669 = vdwg.mxu0
      %v2670 = vmul.f32 %v2652, %v2652
      %v2671 = vmul.f32 %v2657, %v2657
      %v2672 = vmul.f32 %v2662, %v2662
      %v2673 = vmul.f32 %v2667, %v2667
      %v2674 = vmul.f32 %v2652, %v2670
      %v2675 = vmul.f32 %v2657, %v2671
      %v2676 = vmul.f32 %v2662, %v2672
      %v2677 = vmul.f32 %v2667, %v2673
      %v2678 = vmul.f32 %v2674, 0.044715
      %v2679 = vmul.f32 %v2675, 0.044715
      %v2680 = vmul.f32 %v2676, 0.044715
      %v2681 = vmul.f32 %v2677, 0.044715
      %v2682 = vadd.f32 %v2652, %v2678
      %v2683 = vadd.f32 %v2657, %v2679
      %v2684 = vadd.f32 %v2662, %v2680
      %v2685 = vadd.f32 %v2667, %v2681
      %v2686 = vmul.f32 %v2682, 0.7978846
      %v2687 = vmul.f32 %v2683, 0.7978846
      %v2688 = vmul.f32 %v2684, 0.7978846
      %v2689 = vmul.f32 %v2685, 0.7978846
      %v2690 = vtanh.pop %v2686
      %v2691 = vtanh.pop %v2687
      %v2692 = vtanh.pop %v2688
      %v2693 = vtanh.pop %v2689
      %v2694 = vadd.f32 %v2690, 1.0
      %v2695 = vadd.f32 %v2691, 1.0
      %v2696 = vadd.f32 %v2692, 1.0
      %v2697 = vadd.f32 %v2693, 1.0
      %v2698 = vmul.f32 %v2694, 0.5
      %v2699 = vmul.f32 %v2695, 0.5
      %v2700 = vmul.f32 %v2696, 0.5
      %v2701 = vmul.f32 %v2697, 0.5
      %v2702 = vmul.f32 %v2652, %v2698
      %v2703 = vmul.f32 %v2657, %v2699
      %v2704 = vmul.f32 %v2662, %v2700
      %v2705 = vmul.f32 %v2667, %v2701
      %v2706 = vld [vmem:[%s466] sm:$0xff]
      %v2707 = vld [vmem:[%s466 + $0x8] sm:$0xff]
      %v2708 = vld [vmem:[%s466 + $0x10] sm:$0xff]
      %v2709 = vld [vmem:[%s466 + $0x18] sm:$0xff]
      %v2710 = vld [vmem:[%s466 + $0x20] sm:$0xff]
      %v2711 = vld [vmem:[%s466 + $0x28] sm:$0xff]
      %v2712 = vld [vmem:[%s466 + $0x30] sm:$0xff]
      %v2713 = vld [vmem:[%s466 + $0x38] sm:$0xff]
      %s2714 = scalar_lea.vmem %s474, 5
      %v2715 = vld [vmem:[%s2714] sm:$0x1]
      %v2717 = vlaneseq
      %v2718 = vshrl.u32 %v2717, 7
      %v2719 = vsub.s32 0, %v2718
      %v2720 = vrot.slane %v2715, %v2719
      %vm2722 = vcmask 523264
      %v2724 = vsel %vm2722, %v2702, 0
      %v2727 = vsel %vm2722, %v2703, 0
      %v2730 = vsel %vm2722, %v2704, 0
      %v2733 = vsel %vm2722, %v2705, 0
      %2735 = vmatprep.subr.mxu0 0.0
      %2736 = vmatpush1.msra.mxu0 0.0
      %2737 = vmatprep.subr.mxu0 0.0
      %2738 = vmatpush1.msra.mxu0 0.0
      %2739 = vmatprep.subr.mxu0 0.0
      %2740 = vmatpush1.msra.mxu0 0.0
      %2741 = vmatprep.subr.mxu0 0.0
      %2742 = vmatpush1.msra.mxu0 0.0
      %2743 = vmatprep.subr.mxu0 0.0
      %2744 = vmatpush1.msra.mxu0 0.0
      %2745 = vmatprep.subr.mxu0 0.0
      %2746 = vmatpush1.msra.mxu0 0.0
      %2747 = vmatprep.subr.mxu0 0.0
      %2748 = vmatpush1.msra.mxu0 0.0
      %2749 = vmatprep.subr.mxu0 0.0
      %2750 = vmatpush1.msra.mxu0 0.0
      %2751 = vmatprep.subr.mxu0 0.0
      %2752 = vmatpush1.msra.mxu0 %v2713
      %2753 = vmatprep.subr.mxu0 0.0
      %2754 = vmatpush1.msra.mxu0 %v2712
      %2755 = vmatprep.subr.mxu0 0.0
      %2756 = vmatpush1.msra.mxu0 %v2711
      %2757 = vmatprep.subr.mxu0 0.0
      %2758 = vmatpush1.msra.mxu0 %v2710
      %2759 = vmatprep.subr.mxu0 0.0
      %2760 = vmatpush1.msra.mxu0 %v2709
      %2761 = vmatprep.subr.mxu0 0.0
      %2762 = vmatpush1.msra.mxu0 %v2708
      %2763 = vmatprep.subr.mxu0 0.0
      %2764 = vmatpush1.msra.mxu0 %v2707
      %2765 = vmatprep.subr.mxu0 0.0
      %2766 = vmatpush1.msra.mxu0 %v2706
      %2767 = vmatprep.subr.mxu0 0.0
      %2768 = vmatpush2.msra.mxu0 0.0
      %2769 = vmatprep.subr.mxu0 0.0
      %2770 = vmatpush2.msra.mxu0 0.0
      %2771 = vmatprep.subr.mxu0 0.0
      %2772 = vmatpush2.msra.mxu0 0.0
      %2773 = vmatprep.subr.mxu0 0.0
      %2774 = vmatpush2.msra.mxu0 0.0
      %2775 = vmatprep.subr.mxu0 0.0
      %2776 = vmatpush2.msra.mxu0 0.0
      %2777 = vmatprep.subr.mxu0 0.0
      %2778 = vmatpush2.msra.mxu0 0.0
      %2779 = vmatprep.subr.mxu0 0.0
      %2780 = vmatpush2.msra.mxu0 0.0
      %2781 = vmatprep.subr.mxu0 0.0
      %2782 = vmatpush2.msra.mxu0 0.0
      %2783 = vmatprep.subr.mxu0 0.0
      %2784 = vmatpush2.msra.mxu0 0.0
      %2785 = vmatprep.subr.mxu0 0.0
      %2786 = vmatpush2.msra.mxu0 0.0
      %2787 = vmatprep.subr.mxu0 0.0
      %2788 = vmatpush2.msra.mxu0 0.0
      %2789 = vmatprep.subr.mxu0 0.0
      %2790 = vmatpush2.msra.mxu0 0.0
      %2791 = vmatprep.subr.mxu0 0.0
      %2792 = vmatpush2.msra.mxu0 0.0
      %2793 = vmatprep.subr.mxu0 0.0
      %2794 = vmatpush2.msra.mxu0 0.0
      %2795 = vmatprep.subr.mxu0 0.0
      %2796 = vmatpush2.msra.mxu0 0.0
      %2797 = vmatprep.subr.mxu0 0.0
      %2798 = vmatpush2.msra.mxu0 0.0
      %2799 = vmatprep.mubr.f32.mxu0 0.0
      %2800 = vmatmul.mubr.f32.gmra.mxu0 %v2724
      %v2801 = vpop.f32.mrf.mxu0
      %v2802 = vadd.f32 %v2720, %v2801
      %v2803 = vpop.f32.mrf.mxu0
      %2804 = vmatprep.mubr.f32.mxu0 0.0
      %2805 = vmatmul.mubr.f32.gmra.mxu0 %v2727
      %v2806 = vpop.f32.mrf.mxu0
      %v2807 = vadd.f32 %v2720, %v2806
      %v2808 = vpop.f32.mrf.mxu0
      %2809 = vmatprep.mubr.f32.mxu0 0.0
      %2810 = vmatmul.mubr.f32.gmra.mxu0 %v2730
      %v2811 = vpop.f32.mrf.mxu0
      %v2812 = vadd.f32 %v2720, %v2811
      %v2813 = vpop.f32.mrf.mxu0
      %2814 = vmatprep.mubr.f32.mxu0 0.0
      %2815 = vmatmul.mubr.f32.gmra.mxu0 %v2733
      %v2816 = vpop.f32.mrf.mxu0
      %v2817 = vadd.f32 %v2720, %v2816
      %v2818 = vpop.f32.mrf.mxu0
      %2819 = vdwg.mxu0
      %v2820 = vadd.f32 %v2558, %v2802
      %v2821 = vadd.f32 %v2559, %v2807
      %v2822 = vadd.f32 %v2560, %v2812
      %v2823 = vadd.f32 %v2561, %v2817
      %s2824 = scalar_lea.vmem %s474, 6
      %v2825 = vld [vmem:[%s2824] sm:$0x1]
      %s2826 = scalar_lea.vmem %s474, 7
      %v2827 = vld [vmem:[%s2826] sm:$0x1]
      %v2828 = vsel %vm486, %v2820, 0.0
      %2829 = vadd.xlane.f32.xlu0 %v2828
      %v2830 = vpop.xlane.xlu0 %2829
      %v2831 = vsel %vm486, %v2821, 0.0
      %2832 = vadd.xlane.f32.xlu0 %v2831
      %v2833 = vpop.xlane.xlu0 %2832
      %v2834 = vsel %vm486, %v2822, 0.0
      %2835 = vadd.xlane.f32.xlu0 %v2834
      %v2836 = vpop.xlane.xlu0 %2835
      %v2837 = vsel %vm486, %v2823, 0.0
      %2838 = vadd.xlane.f32.xlu0 %v2837
      %v2839 = vpop.xlane.xlu0 %2838
      %v2840 = vmul.f32 %v2830, %v499
      %v2841 = vmul.f32 %v2833, %v499
      %v2842 = vmul.f32 %v2836, %v499
      %v2843 = vmul.f32 %v2839, %v499
      %v2844 = vsub.f32 %v2820, %v2840
      %v2845 = vsub.f32 %v2821, %v2841
      %v2846 = vsub.f32 %v2822, %v2842
      %v2847 = vsub.f32 %v2823, %v2843
      %v2848 = vmul.f32 %v2844, %v2844
      %v2849 = vmul.f32 %v2845, %v2845
      %v2850 = vmul.f32 %v2846, %v2846
      %v2851 = vmul.f32 %v2847, %v2847
      %v2852 = vsel %vm486, %v2848, 0.0
      %2853 = vadd.xlane.f32.xlu0 %v2852
      %v2854 = vpop.xlane.xlu0 %2853
      %v2855 = vsel %vm486, %v2849, 0.0
      %2856 = vadd.xlane.f32.xlu0 %v2855
      %v2857 = vpop.xlane.xlu0 %2856
      %v2858 = vsel %vm486, %v2850, 0.0
      %2859 = vadd.xlane.f32.xlu0 %v2858
      %v2860 = vpop.xlane.xlu0 %2859
      %v2861 = vsel %vm486, %v2851, 0.0
      %2862 = vadd.xlane.f32.xlu0 %v2861
      %v2863 = vpop.xlane.xlu0 %2862
      %v2864 = vmul.f32 %v2854, %v499
      %v2865 = vmul.f32 %v2857, %v499
      %v2866 = vmul.f32 %v2860, %v499
      %v2867 = vmul.f32 %v2863, %v499
      %v2868 = vadd.f32 %v2864, 1e-12
      %v2869 = vadd.f32 %v2865, 1e-12
      %v2870 = vadd.f32 %v2866, 1e-12
      %v2871 = vadd.f32 %v2867, 1e-12
      %v2872 = vrsqrt.pop %v2868
      %v2873 = vrsqrt.pop %v2869
      %v2874 = vrsqrt.pop %v2870
      %v2875 = vrsqrt.pop %v2871
      %v2876 = vmul.f32 %v2844, %v2872
      %v2877 = vmul.f32 %v2845, %v2873
      %v2878 = vmul.f32 %v2846, %v2874
      %v2879 = vmul.f32 %v2847, %v2875
      %v2881 = vlaneseq
      %v2882 = vshrl.u32 %v2881, 7
      %v2883 = vsub.s32 0, %v2882
      %v2884 = vrot.slane %v2825, %v2883
      %v2886 = vmul.f32 %v2876, %v2884
      %v2887 = vmul.f32 %v2877, %v2884
      %v2888 = vmul.f32 %v2878, %v2884
      %v2889 = vmul.f32 %v2879, %v2884
      %v2891 = vlaneseq
      %v2892 = vshrl.u32 %v2891, 7
      %v2893 = vsub.s32 0, %v2892
      %v2894 = vrot.slane %v2827, %v2893
      %v2896 = vadd.f32 %v2886, %v2894
      %v2897 = vadd.f32 %v2887, %v2894
      %v2898 = vadd.f32 %v2888, %v2894
      %v2899 = vadd.f32 %v2889, %v2894
      %s2900 = scalar_lea.vmem %s447, 32
      %v2901 = vld [vmem:[%s2900] sm:$0xff]
      %v2902 = vld [vmem:[%s2900 + $0x8] sm:$0xff]
      %v2903 = vld [vmem:[%s2900 + $0x10] sm:$0xff]
      %v2904 = vld [vmem:[%s2900 + $0x18] sm:$0xff]
      %s2905 = scalar_lea.vmem %s451, 1
      %v2906 = vld [vmem:[%s2905] sm:$0x1]
      %v2908 = vlaneseq
      %v2909 = vshrl.u32 %v2908, 7
      %v2910 = vsub.s32 0, %v2909
      %v2911 = vrot.slane %v2906, %v2910
      %v2914 = vsel %vm486, %v2896, 0
      %v2917 = vsel %vm486, %v2897, 0
      %v2920 = vsel %vm486, %v2898, 0
      %v2923 = vsel %vm486, %v2899, 0
      %2925 = vmatprep.subr.mxu0 0.0
      %2926 = vmatpush1.msra.mxu0 0.0
      %2927 = vmatprep.subr.mxu0 0.0
      %2928 = vmatpush1.msra.mxu0 0.0
      %2929 = vmatprep.subr.mxu0 0.0
      %2930 = vmatpush1.msra.mxu0 0.0
      %2931 = vmatprep.subr.mxu0 0.0
      %2932 = vmatpush1.msra.mxu0 0.0
      %2933 = vmatprep.subr.mxu0 0.0
      %2934 = vmatpush1.msra.mxu0 0.0
      %2935 = vmatprep.subr.mxu0 0.0
      %2936 = vmatpush1.msra.mxu0 0.0
      %2937 = vmatprep.subr.mxu0 0.0
      %2938 = vmatpush1.msra.mxu0 0.0
      %2939 = vmatprep.subr.mxu0 0.0
      %2940 = vmatpush1.msra.mxu0 0.0
      %2941 = vmatprep.subr.mxu0 0.0
      %2942 = vmatpush1.msra.mxu0 0.0
      %2943 = vmatprep.subr.mxu0 0.0
      %2944 = vmatpush1.msra.mxu0 0.0
      %2945 = vmatprep.subr.mxu0 0.0
      %2946 = vmatpush1.msra.mxu0 0.0
      %2947 = vmatprep.subr.mxu0 0.0
      %2948 = vmatpush1.msra.mxu0 0.0
      %2949 = vmatprep.subr.mxu0 0.0
      %2950 = vmatpush1.msra.mxu0 %v2904
      %2951 = vmatprep.subr.mxu0 0.0
      %2952 = vmatpush1.msra.mxu0 %v2903
      %2953 = vmatprep.subr.mxu0 0.0
      %2954 = vmatpush1.msra.mxu0 %v2902
      %2955 = vmatprep.subr.mxu0 0.0
      %2956 = vmatpush1.msra.mxu0 %v2901
      %2957 = vmatprep.subr.mxu0 0.0
      %2958 = vmatpush2.msra.mxu0 0.0
      %2959 = vmatprep.subr.mxu0 0.0
      %2960 = vmatpush2.msra.mxu0 0.0
      %2961 = vmatprep.subr.mxu0 0.0
      %2962 = vmatpush2.msra.mxu0 0.0
      %2963 = vmatprep.subr.mxu0 0.0
      %2964 = vmatpush2.msra.mxu0 0.0
      %2965 = vmatprep.subr.mxu0 0.0
      %2966 = vmatpush2.msra.mxu0 0.0
      %2967 = vmatprep.subr.mxu0 0.0
      %2968 = vmatpush2.msra.mxu0 0.0
      %2969 = vmatprep.subr.mxu0 0.0
      %2970 = vmatpush2.msra.mxu0 0.0
      %2971 = vmatprep.subr.mxu0 0.0
      %2972 = vmatpush2.msra.mxu0 0.0
      %2973 = vmatprep.subr.mxu0 0.0
      %2974 = vmatpush2.msra.mxu0 0.0
      %2975 = vmatprep.subr.mxu0 0.0
      %2976 = vmatpush2.msra.mxu0 0.0
      %2977 = vmatprep.subr.mxu0 0.0
      %2978 = vmatpush2.msra.mxu0 0.0
      %2979 = vmatprep.subr.mxu0 0.0
      %2980 = vmatpush2.msra.mxu0 0.0
      %2981 = vmatprep.subr.mxu0 0.0
      %2982 = vmatpush2.msra.mxu0 0.0
      %2983 = vmatprep.subr.mxu0 0.0
      %2984 = vmatpush2.msra.mxu0 0.0
      %2985 = vmatprep.subr.mxu0 0.0
      %2986 = vmatpush2.msra.mxu0 0.0
      %2987 = vmatprep.subr.mxu0 0.0
      %2988 = vmatpush2.msra.mxu0 0.0
      %2989 = vmatprep.mubr.f32.mxu0 0.0
      %2990 = vmatmul.mubr.f32.gmra.mxu0 %v2914
      %v2991 = vpop.f32.mrf.mxu0
      %v2992 = vadd.f32 %v2911, %v2991
      %v2993 = vpop.f32.mrf.mxu0
      %2994 = vmatprep.mubr.f32.mxu0 0.0
      %2995 = vmatmul.mubr.f32.gmra.mxu0 %v2917
      %v2996 = vpop.f32.mrf.mxu0
      %v2997 = vadd.f32 %v2911, %v2996
      %v2998 = vpop.f32.mrf.mxu0
      %2999 = vmatprep.mubr.f32.mxu0 0.0
      %3000 = vmatmul.mubr.f32.gmra.mxu0 %v2920
      %v3001 = vpop.f32.mrf.mxu0
      %v3002 = vadd.f32 %v2911, %v3001
      %v3003 = vpop.f32.mrf.mxu0
      %3004 = vmatprep.mubr.f32.mxu0 0.0
      %3005 = vmatmul.mubr.f32.gmra.mxu0 %v2923
      %v3006 = vpop.f32.mrf.mxu0
      %v3007 = vadd.f32 %v2911, %v3006
      %v3008 = vpop.f32.mrf.mxu0
      %3009 = vdwg.mxu0
      %3012 = vrot.lane.b32.xlu0 %v2992, 96
      %v3013 = vpop.permute.xlu0 %3012
      %3014 = vrot.lane.b32.xlu0 %v2997, 96
      %v3015 = vpop.permute.xlu0 %3014
      %v3016 = vsel %vm676, %v2992, 0
      %v3018 = vsel %vm676, %v2997, 0
      %v3020 = vsel %vm676, %v3013, 0
      %v3022 = vsel %vm676, %v3015, 0
      %3024 = vmatprep.subr.mxu0 0.0
      %3025 = vmatpush1.xpose.msra.mxu0 0.0
      %3026 = vmatprep.subr.mxu0 0.0
      %3027 = vmatpush1.xpose.msra.mxu0 0.0
      %3028 = vmatprep.subr.mxu0 0.0
      %3029 = vmatpush1.xpose.msra.mxu0 0.0
      %3030 = vmatprep.subr.mxu0 0.0
      %3031 = vmatpush1.xpose.msra.mxu0 0.0
      %3032 = vmatprep.subr.mxu0 0.0
      %3033 = vmatpush1.xpose.msra.mxu0 0.0
      %3034 = vmatprep.subr.mxu0 0.0
      %3035 = vmatpush1.xpose.msra.mxu0 0.0
      %3036 = vmatprep.subr.mxu0 0.0
      %3037 = vmatpush1.xpose.msra.mxu0 0.0
      %3038 = vmatprep.subr.mxu0 0.0
      %3039 = vmatpush1.xpose.msra.mxu0 0.0
      %3040 = vmatprep.subr.mxu0 0.0
      %3041 = vmatpush1.xpose.msra.mxu0 0.0
      %3042 = vmatprep.subr.mxu0 0.0
      %3043 = vmatpush1.xpose.msra.mxu0 0.0
      %3044 = vmatprep.subr.mxu0 0.0
      %3045 = vmatpush1.xpose.msra.mxu0 0.0
      %3046 = vmatprep.subr.mxu0 0.0
      %3047 = vmatpush1.xpose.msra.mxu0 0.0
      %3048 = vmatprep.subr.mxu0 0.0
      %3049 = vmatpush1.xpose.msra.mxu0 0.0
      %3050 = vmatprep.subr.mxu0 0.0
      %3051 = vmatpush1.xpose.msra.mxu0 0.0
      %3052 = vmatprep.subr.mxu0 0.0
      %3053 = vmatpush1.xpose.msra.mxu0 %v3022
      %3054 = vmatprep.subr.mxu0 0.0
      %3055 = vmatpush1.xpose.msra.mxu0 %v3020
      %3056 = vmatprep.subr.mxu0 0.0
      %3057 = vmatpush2.xpose.msra.mxu0 0.0
      %3058 = vmatprep.subr.mxu0 0.0
      %3059 = vmatpush2.xpose.msra.mxu0 0.0
      %3060 = vmatprep.subr.mxu0 0.0
      %3061 = vmatpush2.xpose.msra.mxu0 0.0
      %3062 = vmatprep.subr.mxu0 0.0
      %3063 = vmatpush2.xpose.msra.mxu0 0.0
      %3064 = vmatprep.subr.mxu0 0.0
      %3065 = vmatpush2.xpose.msra.mxu0 0.0
      %3066 = vmatprep.subr.mxu0 0.0
      %3067 = vmatpush2.xpose.msra.mxu0 0.0
      %3068 = vmatprep.subr.mxu0 0.0
      %3069 = vmatpush2.xpose.msra.mxu0 0.0
      %3070 = vmatprep.subr.mxu0 0.0
      %3071 = vmatpush2.xpose.msra.mxu0 0.0
      %3072 = vmatprep.subr.mxu0 0.0
      %3073 = vmatpush2.xpose.msra.mxu0 0.0
      %3074 = vmatprep.subr.mxu0 0.0
      %3075 = vmatpush2.xpose.msra.mxu0 0.0
      %3076 = vmatprep.subr.mxu0 0.0
      %3077 = vmatpush2.xpose.msra.mxu0 0.0
      %3078 = vmatprep.subr.mxu0 0.0
      %3079 = vmatpush2.xpose.msra.mxu0 0.0
      %3080 = vmatprep.subr.mxu0 0.0
      %3081 = vmatpush2.xpose.msra.mxu0 0.0
      %3082 = vmatprep.subr.mxu0 0.0
      %3083 = vmatpush2.xpose.msra.mxu0 0.0
      %3084 = vmatprep.subr.mxu0 0.0
      %3085 = vmatpush2.xpose.msra.mxu0 0.0
      %3086 = vmatprep.subr.mxu0 0.0
      %3087 = vmatpush2.xpose.msra.mxu0 0.0
      %3088 = vmatprep.mubr.f32.mxu0 0.0
      %3089 = vmatmul.mubr.f32.gmra.mxu0 %v3016
      %v3090 = vpop.f32.mrf.mxu0
      %v3091 = vadd.f32 0.0, %v3090
      %v3092 = vpop.f32.mrf.mxu0
      %3093 = vmatprep.mubr.f32.mxu0 0.0
      %3094 = vmatmul.mubr.f32.gmra.mxu0 %v3018
      %v3095 = vpop.f32.mrf.mxu0
      %v3096 = vadd.f32 0.0, %v3095
      %v3097 = vpop.f32.mrf.mxu0
      %3098 = vdwg.mxu0
      %3101 = vrot.lane.b32.xlu0 %v3002, 96
      %v3102 = vpop.permute.xlu0 %3101
      %3103 = vrot.lane.b32.xlu0 %v3007, 96
      %v3104 = vpop.permute.xlu0 %3103
      %v3105 = vsel %vm676, %v3002, 0
      %v3107 = vsel %vm676, %v3007, 0
      %v3109 = vsel %vm676, %v3102, 0
      %v3111 = vsel %vm676, %v3104, 0
      %3113 = vmatprep.subr.mxu0 0.0
      %3114 = vmatpush1.xpose.msra.mxu0 0.0
      %3115 = vmatprep.subr.mxu0 0.0
      %3116 = vmatpush1.xpose.msra.mxu0 0.0
      %3117 = vmatprep.subr.mxu0 0.0
      %3118 = vmatpush1.xpose.msra.mxu0 0.0
      %3119 = vmatprep.subr.mxu0 0.0
      %3120 = vmatpush1.xpose.msra.mxu0 0.0
      %3121 = vmatprep.subr.mxu0 0.0
      %3122 = vmatpush1.xpose.msra.mxu0 0.0
      %3123 = vmatprep.subr.mxu0 0.0
      %3124 = vmatpush1.xpose.msra.mxu0 0.0
      %3125 = vmatprep.subr.mxu0 0.0
      %3126 = vmatpush1.xpose.msra.mxu0 0.0
      %3127 = vmatprep.subr.mxu0 0.0
      %3128 = vmatpush1.xpose.msra.mxu0 0.0
      %3129 = vmatprep.subr.mxu0 0.0
      %3130 = vmatpush1.xpose.msra.mxu0 0.0
      %3131 = vmatprep.subr.mxu0 0.0
      %3132 = vmatpush1.xpose.msra.mxu0 0.0
      %3133 = vmatprep.subr.mxu0 0.0
      %3134 = vmatpush1.xpose.msra.mxu0 0.0
      %3135 = vmatprep.subr.mxu0 0.0
      %3136 = vmatpush1.xpose.msra.mxu0 0.0
      %3137 = vmatprep.subr.mxu0 0.0
      %3138 = vmatpush1.xpose.msra.mxu0 0.0
      %3139 = vmatprep.subr.mxu0 0.0
      %3140 = vmatpush1.xpose.msra.mxu0 0.0
      %3141 = vmatprep.subr.mxu0 0.0
      %3142 = vmatpush1.xpose.msra.mxu0 %v3111
      %3143 = vmatprep.subr.mxu0 0.0
      %3144 = vmatpush1.xpose.msra.mxu0 %v3109
      %3145 = vmatprep.subr.mxu0 0.0
      %3146 = vmatpush2.xpose.msra.mxu0 0.0
      %3147 = vmatprep.subr.mxu0 0.0
      %3148 = vmatpush2.xpose.msra.mxu0 0.0
      %3149 = vmatprep.subr.mxu0 0.0
      %3150 = vmatpush2.xpose.msra.mxu0 0.0
      %3151 = vmatprep.subr.mxu0 0.0
      %3152 = vmatpush2.xpose.msra.mxu0 0.0
      %3153 = vmatprep.subr.mxu0 0.0
      %3154 = vmatpush2.xpose.msra.mxu0 0.0
      %3155 = vmatprep.subr.mxu0 0.0
      %3156 = vmatpush2.xpose.msra.mxu0 0.0
      %3157 = vmatprep.subr.mxu0 0.0
      %3158 = vmatpush2.xpose.msra.mxu0 0.0
      %3159 = vmatprep.subr.mxu0 0.0
      %3160 = vmatpush2.xpose.msra.mxu0 0.0
      %3161 = vmatprep.subr.mxu0 0.0
      %3162 = vmatpush2.xpose.msra.mxu0 0.0
      %3163 = vmatprep.subr.mxu0 0.0
      %3164 = vmatpush2.xpose.msra.mxu0 0.0
      %3165 = vmatprep.subr.mxu0 0.0
      %3166 = vmatpush2.xpose.msra.mxu0 0.0
      %3167 = vmatprep.subr.mxu0 0.0
      %3168 = vmatpush2.xpose.msra.mxu0 0.0
      %3169 = vmatprep.subr.mxu0 0.0
      %3170 = vmatpush2.xpose.msra.mxu0 0.0
      %3171 = vmatprep.subr.mxu0 0.0
      %3172 = vmatpush2.xpose.msra.mxu0 0.0
      %3173 = vmatprep.subr.mxu0 0.0
      %3174 = vmatpush2.xpose.msra.mxu0 0.0
      %3175 = vmatprep.subr.mxu0 0.0
      %3176 = vmatpush2.xpose.msra.mxu0 0.0
      %3177 = vmatprep.mubr.f32.mxu0 0.0
      %3178 = vmatmul.mubr.f32.gmra.mxu0 %v3105
      %v3179 = vpop.f32.mrf.mxu0
      %v3180 = vadd.f32 0.0, %v3179
      %v3181 = vpop.f32.mrf.mxu0
      %3182 = vmatprep.mubr.f32.mxu0 0.0
      %3183 = vmatmul.mubr.f32.gmra.mxu0 %v3107
      %v3184 = vpop.f32.mrf.mxu0
      %v3185 = vadd.f32 0.0, %v3184
      %v3186 = vpop.f32.mrf.mxu0
      %3187 = vdwg.mxu0
      %v3188 = vmul.f32 %v3091, 0.35355338
      %v3189 = vmul.f32 %v3096, 0.35355338
      %v3190 = vmul.f32 %v3180, 0.35355338
      %v3191 = vmul.f32 %v3185, 0.35355338
      %v3192 = vadd.f32 %v3188, %v858
      %v3193 = vadd.f32 %v3189, %v858
      %v3194 = vadd.f32 %v3190, %v862
      %v3195 = vadd.f32 %v3191, %v862
      %v3196 = vsel %vm869, %v3192, -inf
      %3197 = vmax.xlane.f32.xlu0 %v3196
      %v3198 = vpop.xlane.xlu0 %3197
      %v3199 = vsel %vm869, %v3193, -inf
      %3200 = vmax.xlane.f32.xlu0 %v3199
      %v3201 = vpop.xlane.xlu0 %3200
      %v3202 = vsel %vm869, %v3194, -inf
      %3203 = vmax.xlane.f32.xlu0 %v3202
      %v3204 = vpop.xlane.xlu0 %3203
      %v3205 = vsel %vm869, %v3195, -inf
      %3206 = vmax.xlane.f32.xlu0 %v3205
      %v3207 = vpop.xlane.xlu0 %3206
      %v3208 = vsub.f32 %v3192, %v3198
      %v3209 = vsub.f32 %v3193, %v3201
      %v3210 = vsub.f32 %v3194, %v3204
      %v3211 = vsub.f32 %v3195, %v3207
      %v3212 = vmul.f32 %v3208, 1.442695
      %v3213 = vpow.pop %v3212
      %v3214 = vmul.f32 %v3209, 1.442695
      %v3215 = vpow.pop %v3214
      %v3216 = vmul.f32 %v3210, 1.442695
      %v3217 = vpow.pop %v3216
      %v3218 = vmul.f32 %v3211, 1.442695
      %v3219 = vpow.pop %v3218
      %v3220 = vsel %vm869, %v3213, 0.0
      %3221 = vadd.xlane.f32.xlu0 %v3220
      %v3222 = vpop.xlane.xlu0 %3221
      %v3223 = vsel %vm869, %v3215, 0.0
      %3224 = vadd.xlane.f32.xlu0 %v3223
      %v3225 = vpop.xlane.xlu0 %3224
      %v3226 = vsel %vm869, %v3217, 0.0
      %3227 = vadd.xlane.f32.xlu0 %v3226
      %v3228 = vpop.xlane.xlu0 %3227
      %v3229 = vsel %vm869, %v3219, 0.0
      %3230 = vadd.xlane.f32.xlu0 %v3229
      %v3231 = vpop.xlane.xlu0 %3230
      %v3232 = vrcp.pop %v3222
      %v3233 = vrcp.pop %v3225
      %v3234 = vrcp.pop %v3228
      %v3235 = vrcp.pop %v3231
      %v3236 = vmul.f32 %v3213, %v3232
      %v3237 = vmul.f32 %v3215, %v3233
      %v3238 = vmul.f32 %v3217, %v3234
      %v3239 = vmul.f32 %v3219, %v3235
      %3240 = vrot.lane.b32.xlu0 %v2992, 64
      %v3241 = vpop.permute.xlu0 %3240
      %3242 = vrot.lane.b32.xlu0 %v2997, 64
      %v3243 = vpop.permute.xlu0 %3242
      %v3247 = vsel %vm869, %v3236, 0
      %v3250 = vsel %vm869, %v3237, 0
      %3252 = vmatprep.subr.mxu0 0.0
      %3253 = vmatpush1.msra.mxu0 0.0
      %3254 = vmatprep.subr.mxu0 0.0
      %3255 = vmatpush1.msra.mxu0 0.0
      %3256 = vmatprep.subr.mxu0 0.0
      %3257 = vmatpush1.msra.mxu0 0.0
      %3258 = vmatprep.subr.mxu0 0.0
      %3259 = vmatpush1.msra.mxu0 0.0
      %3260 = vmatprep.subr.mxu0 0.0
      %3261 = vmatpush1.msra.mxu0 0.0
      %3262 = vmatprep.subr.mxu0 0.0
      %3263 = vmatpush1.msra.mxu0 0.0
      %3264 = vmatprep.subr.mxu0 0.0
      %3265 = vmatpush1.msra.mxu0 0.0
      %3266 = vmatprep.subr.mxu0 0.0
      %3267 = vmatpush1.msra.mxu0 0.0
      %3268 = vmatprep.subr.mxu0 0.0
      %3269 = vmatpush1.msra.mxu0 0.0
      %3270 = vmatprep.subr.mxu0 0.0
      %3271 = vmatpush1.msra.mxu0 0.0
      %3272 = vmatprep.subr.mxu0 0.0
      %3273 = vmatpush1.msra.mxu0 0.0
      %3274 = vmatprep.subr.mxu0 0.0
      %3275 = vmatpush1.msra.mxu0 0.0
      %3276 = vmatprep.subr.mxu0 0.0
      %3277 = vmatpush1.msra.mxu0 0.0
      %3278 = vmatprep.subr.mxu0 0.0
      %3279 = vmatpush1.msra.mxu0 0.0
      %3280 = vmatprep.subr.mxu0 0.0
      %3281 = vmatpush1.msra.mxu0 %v3243
      %3282 = vmatprep.subr.mxu0 0.0
      %3283 = vmatpush1.msra.mxu0 %v3241
      %3284 = vmatprep.subr.mxu0 0.0
      %3285 = vmatpush2.msra.mxu0 0.0
      %3286 = vmatprep.subr.mxu0 0.0
      %3287 = vmatpush2.msra.mxu0 0.0
      %3288 = vmatprep.subr.mxu0 0.0
      %3289 = vmatpush2.msra.mxu0 0.0
      %3290 = vmatprep.subr.mxu0 0.0
      %3291 = vmatpush2.msra.mxu0 0.0
      %3292 = vmatprep.subr.mxu0 0.0
      %3293 = vmatpush2.msra.mxu0 0.0
      %3294 = vmatprep.subr.mxu0 0.0
      %3295 = vmatpush2.msra.mxu0 0.0
      %3296 = vmatprep.subr.mxu0 0.0
      %3297 = vmatpush2.msra.mxu0 0.0
      %3298 = vmatprep.subr.mxu0 0.0
      %3299 = vmatpush2.msra.mxu0 0.0
      %3300 = vmatprep.subr.mxu0 0.0
      %3301 = vmatpush2.msra.mxu0 0.0
      %3302 = vmatprep.subr.mxu0 0.0
      %3303 = vmatpush2.msra.mxu0 0.0
      %3304 = vmatprep.subr.mxu0 0.0
      %3305 = vmatpush2.msra.mxu0 0.0
      %3306 = vmatprep.subr.mxu0 0.0
      %3307 = vmatpush2.msra.mxu0 0.0
      %3308 = vmatprep.subr.mxu0 0.0
      %3309 = vmatpush2.msra.mxu0 0.0
      %3310 = vmatprep.subr.mxu0 0.0
      %3311 = vmatpush2.msra.mxu0 0.0
      %3312 = vmatprep.subr.mxu0 0.0
      %3313 = vmatpush2.msra.mxu0 0.0
      %3314 = vmatprep.subr.mxu0 0.0
      %3315 = vmatpush2.msra.mxu0 0.0
      %3316 = vmatprep.mubr.f32.mxu0 0.0
      %3317 = vmatmul.mubr.f32.gmra.mxu0 %v3247
      %v3318 = vpop.f32.mrf.mxu0
      %v3319 = vadd.f32 0.0, %v3318
      %v3320 = vpop.f32.mrf.mxu0
      %3321 = vmatprep.mubr.f32.mxu0 0.0
      %3322 = vmatmul.mubr.f32.gmra.mxu0 %v3250
      %v3323 = vpop.f32.mrf.mxu0
      %v3324 = vadd.f32 0.0, %v3323
      %v3325 = vpop.f32.mrf.mxu0
      %3326 = vdwg.mxu0
      %3327 = vrot.lane.b32.xlu0 %v3002, 64
      %v3328 = vpop.permute.xlu0 %3327
      %3329 = vrot.lane.b32.xlu0 %v3007, 64
      %v3330 = vpop.permute.xlu0 %3329
      %v3334 = vsel %vm869, %v3238, 0
      %v3337 = vsel %vm869, %v3239, 0
      %3339 = vmatprep.subr.mxu0 0.0
      %3340 = vmatpush1.msra.mxu0 0.0
      %3341 = vmatprep.subr.mxu0 0.0
      %3342 = vmatpush1.msra.mxu0 0.0
      %3343 = vmatprep.subr.mxu0 0.0
      %3344 = vmatpush1.msra.mxu0 0.0
      %3345 = vmatprep.subr.mxu0 0.0
      %3346 = vmatpush1.msra.mxu0 0.0
      %3347 = vmatprep.subr.mxu0 0.0
      %3348 = vmatpush1.msra.mxu0 0.0
      %3349 = vmatprep.subr.mxu0 0.0
      %3350 = vmatpush1.msra.mxu0 0.0
      %3351 = vmatprep.subr.mxu0 0.0
      %3352 = vmatpush1.msra.mxu0 0.0
      %3353 = vmatprep.subr.mxu0 0.0
      %3354 = vmatpush1.msra.mxu0 0.0
      %3355 = vmatprep.subr.mxu0 0.0
      %3356 = vmatpush1.msra.mxu0 0.0
      %3357 = vmatprep.subr.mxu0 0.0
      %3358 = vmatpush1.msra.mxu0 0.0
      %3359 = vmatprep.subr.mxu0 0.0
      %3360 = vmatpush1.msra.mxu0 0.0
      %3361 = vmatprep.subr.mxu0 0.0
      %3362 = vmatpush1.msra.mxu0 0.0
      %3363 = vmatprep.subr.mxu0 0.0
      %3364 = vmatpush1.msra.mxu0 0.0
      %3365 = vmatprep.subr.mxu0 0.0
      %3366 = vmatpush1.msra.mxu0 0.0
      %3367 = vmatprep.subr.mxu0 0.0
      %3368 = vmatpush1.msra.mxu0 %v3330
      %3369 = vmatprep.subr.mxu0 0.0
      %3370 = vmatpush1.msra.mxu0 %v3328
      %3371 = vmatprep.subr.mxu0 0.0
      %3372 = vmatpush2.msra.mxu0 0.0
      %3373 = vmatprep.subr.mxu0 0.0
      %3374 = vmatpush2.msra.mxu0 0.0
      %3375 = vmatprep.subr.mxu0 0.0
      %3376 = vmatpush2.msra.mxu0 0.0
      %3377 = vmatprep.subr.mxu0 0.0
      %3378 = vmatpush2.msra.mxu0 0.0
      %3379 = vmatprep.subr.mxu0 0.0
      %3380 = vmatpush2.msra.mxu0 0.0
      %3381 = vmatprep.subr.mxu0 0.0
      %3382 = vmatpush2.msra.mxu0 0.0
      %3383 = vmatprep.subr.mxu0 0.0
      %3384 = vmatpush2.msra.mxu0 0.0
      %3385 = vmatprep.subr.mxu0 0.0
      %3386 = vmatpush2.msra.mxu0 0.0
      %3387 = vmatprep.subr.mxu0 0.0
      %3388 = vmatpush2.msra.mxu0 0.0
      %3389 = vmatprep.subr.mxu0 0.0
      %3390 = vmatpush2.msra.mxu0 0.0
      %3391 = vmatprep.subr.mxu0 0.0
      %3392 = vmatpush2.msra.mxu0 0.0
      %3393 = vmatprep.subr.mxu0 0.0
      %3394 = vmatpush2.msra.mxu0 0.0
      %3395 = vmatprep.subr.mxu0 0.0
      %3396 = vmatpush2.msra.mxu0 0.0
      %3397 = vmatprep.subr.mxu0 0.0
      %3398 = vmatpush2.msra.mxu0 0.0
      %3399 = vmatprep.subr.mxu0 0.0
      %3400 = vmatpush2.msra.mxu0 0.0
      %3401 = vmatprep.subr.mxu0 0.0
      %3402 = vmatpush2.msra.mxu0 0.0
      %3403 = vmatprep.mubr.f32.mxu0 0.0
      %3404 = vmatmul.mubr.f32.gmra.mxu0 %v3334
      %v3405 = vpop.f32.mrf.mxu0
      %v3406 = vadd.f32 0.0, %v3405
      %v3407 = vpop.f32.mrf.mxu0
      %3408 = vmatprep.mubr.f32.mxu0 0.0
      %3409 = vmatmul.mubr.f32.gmra.mxu0 %v3337
      %v3410 = vpop.f32.mrf.mxu0
      %v3411 = vadd.f32 0.0, %v3410
      %v3412 = vpop.f32.mrf.mxu0
      %3413 = vdwg.mxu0
      %3414 = vrot.lane.b32.xlu0 %v2992, 120
      %v3415 = vpop.permute.xlu0 %3414
      %3416 = vrot.lane.b32.xlu0 %v2997, 120
      %v3417 = vpop.permute.xlu0 %3416
      %3418 = vrot.lane.b32.xlu0 %v2992, 88
      %v3419 = vpop.permute.xlu0 %3418
      %3420 = vrot.lane.b32.xlu0 %v2997, 88
      %v3421 = vpop.permute.xlu0 %3420
      %v3422 = vsel %vm676, %v3415, 0
      %v3424 = vsel %vm676, %v3417, 0
      %v3426 = vsel %vm676, %v3419, 0
      %v3428 = vsel %vm676, %v3421, 0
      %3430 = vmatprep.subr.mxu0 0.0
      %3431 = vmatpush1.xpose.msra.mxu0 0.0
      %3432 = vmatprep.subr.mxu0 0.0
      %3433 = vmatpush1.xpose.msra.mxu0 0.0
      %3434 = vmatprep.subr.mxu0 0.0
      %3435 = vmatpush1.xpose.msra.mxu0 0.0
      %3436 = vmatprep.subr.mxu0 0.0
      %3437 = vmatpush1.xpose.msra.mxu0 0.0
      %3438 = vmatprep.subr.mxu0 0.0
      %3439 = vmatpush1.xpose.msra.mxu0 0.0
      %3440 = vmatprep.subr.mxu0 0.0
      %3441 = vmatpush1.xpose.msra.mxu0 0.0
      %3442 = vmatprep.subr.mxu0 0.0
      %3443 = vmatpush1.xpose.msra.mxu0 0.0
      %3444 = vmatprep.subr.mxu0 0.0
      %3445 = vmatpush1.xpose.msra.mxu0 0.0
      %3446 = vmatprep.subr.mxu0 0.0
      %3447 = vmatpush1.xpose.msra.mxu0 0.0
      %3448 = vmatprep.subr.mxu0 0.0
      %3449 = vmatpush1.xpose.msra.mxu0 0.0
      %3450 = vmatprep.subr.mxu0 0.0
      %3451 = vmatpush1.xpose.msra.mxu0 0.0
      %3452 = vmatprep.subr.mxu0 0.0
      %3453 = vmatpush1.xpose.msra.mxu0 0.0
      %3454 = vmatprep.subr.mxu0 0.0
      %3455 = vmatpush1.xpose.msra.mxu0 0.0
      %3456 = vmatprep.subr.mxu0 0.0
      %3457 = vmatpush1.xpose.msra.mxu0 0.0
      %3458 = vmatprep.subr.mxu0 0.0
      %3459 = vmatpush1.xpose.msra.mxu0 %v3428
      %3460 = vmatprep.subr.mxu0 0.0
      %3461 = vmatpush1.xpose.msra.mxu0 %v3426
      %3462 = vmatprep.subr.mxu0 0.0
      %3463 = vmatpush2.xpose.msra.mxu0 0.0
      %3464 = vmatprep.subr.mxu0 0.0
      %3465 = vmatpush2.xpose.msra.mxu0 0.0
      %3466 = vmatprep.subr.mxu0 0.0
      %3467 = vmatpush2.xpose.msra.mxu0 0.0
      %3468 = vmatprep.subr.mxu0 0.0
      %3469 = vmatpush2.xpose.msra.mxu0 0.0
      %3470 = vmatprep.subr.mxu0 0.0
      %3471 = vmatpush2.xpose.msra.mxu0 0.0
      %3472 = vmatprep.subr.mxu0 0.0
      %3473 = vmatpush2.xpose.msra.mxu0 0.0
      %3474 = vmatprep.subr.mxu0 0.0
      %3475 = vmatpush2.xpose.msra.mxu0 0.0
      %3476 = vmatprep.subr.mxu0 0.0
      %3477 = vmatpush2.xpose.msra.mxu0 0.0
      %3478 = vmatprep.subr.mxu0 0.0
      %3479 = vmatpush2.xpose.msra.mxu0 0.0
      %3480 = vmatprep.subr.mxu0 0.0
      %3481 = vmatpush2.xpose.msra.mxu0 0.0
      %3482 = vmatprep.subr.mxu0 0.0
      %3483 = vmatpush2.xpose.msra.mxu0 0.0
      %3484 = vmatprep.subr.mxu0 0.0
      %3485 = vmatpush2.xpose.msra.mxu0 0.0
      %3486 = vmatprep.subr.mxu0 0.0
      %3487 = vmatpush2.xpose.msra.mxu0 0.0
      %3488 = vmatprep.subr.mxu0 0.0
      %3489 = vmatpush2.xpose.msra.mxu0 0.0
      %3490 = vmatprep.subr.mxu0 0.0
      %3491 = vmatpush2.xpose.msra.mxu0 0.0
      %3492 = vmatprep.subr.mxu0 0.0
      %3493 = vmatpush2.xpose.msra.mxu0 0.0
      %3494 = vmatprep.mubr.f32.mxu0 0.0
      %3495 = vmatmul.mubr.f32.gmra.mxu0 %v3422
      %v3496 = vpop.f32.mrf.mxu0
      %v3497 = vadd.f32 0.0, %v3496
      %v3498 = vpop.f32.mrf.mxu0
      %3499 = vmatprep.mubr.f32.mxu0 0.0
      %3500 = vmatmul.mubr.f32.gmra.mxu0 %v3424
      %v3501 = vpop.f32.mrf.mxu0
      %v3502 = vadd.f32 0.0, %v3501
      %v3503 = vpop.f32.mrf.mxu0
      %3504 = vdwg.mxu0
      %3505 = vrot.lane.b32.xlu0 %v3002, 120
      %v3506 = vpop.permute.xlu0 %3505
      %3507 = vrot.lane.b32.xlu0 %v3007, 120
      %v3508 = vpop.permute.xlu0 %3507
      %3509 = vrot.lane.b32.xlu0 %v3002, 88
      %v3510 = vpop.permute.xlu0 %3509
      %3511 = vrot.lane.b32.xlu0 %v3007, 88
      %v3512 = vpop.permute.xlu0 %3511
      %v3513 = vsel %vm676, %v3506, 0
      %v3515 = vsel %vm676, %v3508, 0
      %v3517 = vsel %vm676, %v3510, 0
      %v3519 = vsel %vm676, %v3512, 0
      %3521 = vmatprep.subr.mxu0 0.0
      %3522 = vmatpush1.xpose.msra.mxu0 0.0
      %3523 = vmatprep.subr.mxu0 0.0
      %3524 = vmatpush1.xpose.msra.mxu0 0.0
      %3525 = vmatprep.subr.mxu0 0.0
      %3526 = vmatpush1.xpose.msra.mxu0 0.0
      %3527 = vmatprep.subr.mxu0 0.0
      %3528 = vmatpush1.xpose.msra.mxu0 0.0
      %3529 = vmatprep.subr.mxu0 0.0
      %3530 = vmatpush1.xpose.msra.mxu0 0.0
      %3531 = vmatprep.subr.mxu0 0.0
      %3532 = vmatpush1.xpose.msra.mxu0 0.0
      %3533 = vmatprep.subr.mxu0 0.0
      %3534 = vmatpush1.xpose.msra.mxu0 0.0
      %3535 = vmatprep.subr.mxu0 0.0
      %3536 = vmatpush1.xpose.msra.mxu0 0.0
      %3537 = vmatprep.subr.mxu0 0.0
      %3538 = vmatpush1.xpose.msra.mxu0 0.0
      %3539 = vmatprep.subr.mxu0 0.0
      %3540 = vmatpush1.xpose.msra.mxu0 0.0
      %3541 = vmatprep.subr.mxu0 0.0
      %3542 = vmatpush1.xpose.msra.mxu0 0.0
      %3543 = vmatprep.subr.mxu0 0.0
      %3544 = vmatpush1.xpose.msra.mxu0 0.0
      %3545 = vmatprep.subr.mxu0 0.0
      %3546 = vmatpush1.xpose.msra.mxu0 0.0
      %3547 = vmatprep.subr.mxu0 0.0
      %3548 = vmatpush1.xpose.msra.mxu0 0.0
      %3549 = vmatprep.subr.mxu0 0.0
      %3550 = vmatpush1.xpose.msra.mxu0 %v3519
      %3551 = vmatprep.subr.mxu0 0.0
      %3552 = vmatpush1.xpose.msra.mxu0 %v3517
      %3553 = vmatprep.subr.mxu0 0.0
      %3554 = vmatpush2.xpose.msra.mxu0 0.0
      %3555 = vmatprep.subr.mxu0 0.0
      %3556 = vmatpush2.xpose.msra.mxu0 0.0
      %3557 = vmatprep.subr.mxu0 0.0
      %3558 = vmatpush2.xpose.msra.mxu0 0.0
      %3559 = vmatprep.subr.mxu0 0.0
      %3560 = vmatpush2.xpose.msra.mxu0 0.0
      %3561 = vmatprep.subr.mxu0 0.0
      %3562 = vmatpush2.xpose.msra.mxu0 0.0
      %3563 = vmatprep.subr.mxu0 0.0
      %3564 = vmatpush2.xpose.msra.mxu0 0.0
      %3565 = vmatprep.subr.mxu0 0.0
      %3566 = vmatpush2.xpose.msra.mxu0 0.0
      %3567 = vmatprep.subr.mxu0 0.0
      %3568 = vmatpush2.xpose.msra.mxu0 0.0
      %3569 = vmatprep.subr.mxu0 0.0
      %3570 = vmatpush2.xpose.msra.mxu0 0.0
      %3571 = vmatprep.subr.mxu0 0.0
      %3572 = vmatpush2.xpose.msra.mxu0 0.0
      %3573 = vmatprep.subr.mxu0 0.0
      %3574 = vmatpush2.xpose.msra.mxu0 0.0
      %3575 = vmatprep.subr.mxu0 0.0
      %3576 = vmatpush2.xpose.msra.mxu0 0.0
      %3577 = vmatprep.subr.mxu0 0.0
      %3578 = vmatpush2.xpose.msra.mxu0 0.0
      %3579 = vmatprep.subr.mxu0 0.0
      %3580 = vmatpush2.xpose.msra.mxu0 0.0
      %3581 = vmatprep.subr.mxu0 0.0
      %3582 = vmatpush2.xpose.msra.mxu0 0.0
      %3583 = vmatprep.subr.mxu0 0.0
      %3584 = vmatpush2.xpose.msra.mxu0 0.0
      %3585 = vmatprep.mubr.f32.mxu0 0.0
      %3586 = vmatmul.mubr.f32.gmra.mxu0 %v3513
      %v3587 = vpop.f32.mrf.mxu0
      %v3588 = vadd.f32 0.0, %v3587
      %v3589 = vpop.f32.mrf.mxu0
      %3590 = vmatprep.mubr.f32.mxu0 0.0
      %3591 = vmatmul.mubr.f32.gmra.mxu0 %v3515
      %v3592 = vpop.f32.mrf.mxu0
      %v3593 = vadd.f32 0.0, %v3592
      %v3594 = vpop.f32.mrf.mxu0
      %3595 = vdwg.mxu0
      %v3596 = vmul.f32 %v3497, 0.35355338
      %v3597 = vmul.f32 %v3502, 0.35355338
      %v3598 = vmul.f32 %v3588, 0.35355338
      %v3599 = vmul.f32 %v3593, 0.35355338
      %v3600 = vadd.f32 %v3596, %v858
      %v3601 = vadd.f32 %v3597, %v858
      %v3602 = vadd.f32 %v3598, %v862
      %v3603 = vadd.f32 %v3599, %v862
      %v3604 = vsel %vm869, %v3600, -inf
      %3605 = vmax.xlane.f32.xlu0 %v3604
      %v3606 = vpop.xlane.xlu0 %3605
      %v3607 = vsel %vm869, %v3601, -inf
      %3608 = vmax.xlane.f32.xlu0 %v3607
      %v3609 = vpop.xlane.xlu0 %3608
      %v3610 = vsel %vm869, %v3602, -inf
      %3611 = vmax.xlane.f32.xlu0 %v3610
      %v3612 = vpop.xlane.xlu0 %3611
      %v3613 = vsel %vm869, %v3603, -inf
      %3614 = vmax.xlane.f32.xlu0 %v3613
      %v3615 = vpop.xlane.xlu0 %3614
      %v3616 = vsub.f32 %v3600, %v3606
      %v3617 = vsub.f32 %v3601, %v3609
      %v3618 = vsub.f32 %v3602, %v3612
      %v3619 = vsub.f32 %v3603, %v3615
      %v3620 = vmul.f32 %v3616, 1.442695
      %v3621 = vpow.pop %v3620
      %v3622 = vmul.f32 %v3617, 1.442695
      %v3623 = vpow.pop %v3622
      %v3624 = vmul.f32 %v3618, 1.442695
      %v3625 = vpow.pop %v3624
      %v3626 = vmul.f32 %v3619, 1.442695
      %v3627 = vpow.pop %v3626
      %v3628 = vsel %vm869, %v3621, 0.0
      %3629 = vadd.xlane.f32.xlu0 %v3628
      %v3630 = vpop.xlane.xlu0 %3629
      %v3631 = vsel %vm869, %v3623, 0.0
      %3632 = vadd.xlane.f32.xlu0 %v3631
      %v3633 = vpop.xlane.xlu0 %3632
      %v3634 = vsel %vm869, %v3625, 0.0
      %3635 = vadd.xlane.f32.xlu0 %v3634
      %v3636 = vpop.xlane.xlu0 %3635
      %v3637 = vsel %vm869, %v3627, 0.0
      %3638 = vadd.xlane.f32.xlu0 %v3637
      %v3639 = vpop.xlane.xlu0 %3638
      %v3640 = vrcp.pop %v3630
      %v3641 = vrcp.pop %v3633
      %v3642 = vrcp.pop %v3636
      %v3643 = vrcp.pop %v3639
      %v3644 = vmul.f32 %v3621, %v3640
      %v3645 = vmul.f32 %v3623, %v3641
      %v3646 = vmul.f32 %v3625, %v3642
      %v3647 = vmul.f32 %v3627, %v3643
      %3648 = vrot.lane.b32.xlu0 %v2992, 56
      %v3649 = vpop.permute.xlu0 %3648
      %3650 = vrot.lane.b32.xlu0 %v2997, 56
      %v3651 = vpop.permute.xlu0 %3650
      %v3655 = vsel %vm869, %v3644, 0
      %v3658 = vsel %vm869, %v3645, 0
      %3660 = vmatprep.subr.mxu0 0.0
      %3661 = vmatpush1.msra.mxu0 0.0
      %3662 = vmatprep.subr.mxu0 0.0
      %3663 = vmatpush1.msra.mxu0 0.0
      %3664 = vmatprep.subr.mxu0 0.0
      %3665 = vmatpush1.msra.mxu0 0.0
      %3666 = vmatprep.subr.mxu0 0.0
      %3667 = vmatpush1.msra.mxu0 0.0
      %3668 = vmatprep.subr.mxu0 0.0
      %3669 = vmatpush1.msra.mxu0 0.0
      %3670 = vmatprep.subr.mxu0 0.0
      %3671 = vmatpush1.msra.mxu0 0.0
      %3672 = vmatprep.subr.mxu0 0.0
      %3673 = vmatpush1.msra.mxu0 0.0
      %3674 = vmatprep.subr.mxu0 0.0
      %3675 = vmatpush1.msra.mxu0 0.0
      %3676 = vmatprep.subr.mxu0 0.0
      %3677 = vmatpush1.msra.mxu0 0.0
      %3678 = vmatprep.subr.mxu0 0.0
      %3679 = vmatpush1.msra.mxu0 0.0
      %3680 = vmatprep.subr.mxu0 0.0
      %3681 = vmatpush1.msra.mxu0 0.0
      %3682 = vmatprep.subr.mxu0 0.0
      %3683 = vmatpush1.msra.mxu0 0.0
      %3684 = vmatprep.subr.mxu0 0.0
      %3685 = vmatpush1.msra.mxu0 0.0
      %3686 = vmatprep.subr.mxu0 0.0
      %3687 = vmatpush1.msra.mxu0 0.0
      %3688 = vmatprep.subr.mxu0 0.0
      %3689 = vmatpush1.msra.mxu0 %v3651
      %3690 = vmatprep.subr.mxu0 0.0
      %3691 = vmatpush1.msra.mxu0 %v3649
      %3692 = vmatprep.subr.mxu0 0.0
      %3693 = vmatpush2.msra.mxu0 0.0
      %3694 = vmatprep.subr.mxu0 0.0
      %3695 = vmatpush2.msra.mxu0 0.0
      %3696 = vmatprep.subr.mxu0 0.0
      %3697 = vmatpush2.msra.mxu0 0.0
      %3698 = vmatprep.subr.mxu0 0.0
      %3699 = vmatpush2.msra.mxu0 0.0
      %3700 = vmatprep.subr.mxu0 0.0
      %3701 = vmatpush2.msra.mxu0 0.0
      %3702 = vmatprep.subr.mxu0 0.0
      %3703 = vmatpush2.msra.mxu0 0.0
      %3704 = vmatprep.subr.mxu0 0.0
      %3705 = vmatpush2.msra.mxu0 0.0
      %3706 = vmatprep.subr.mxu0 0.0
      %3707 = vmatpush2.msra.mxu0 0.0
      %3708 = vmatprep.subr.mxu0 0.0
      %3709 = vmatpush2.msra.mxu0 0.0
      %3710 = vmatprep.subr.mxu0 0.0
      %3711 = vmatpush2.msra.mxu0 0.0
      %3712 = vmatprep.subr.mxu0 0.0
      %3713 = vmatpush2.msra.mxu0 0.0
      %3714 = vmatprep.subr.mxu0 0.0
      %3715 = vmatpush2.msra.mxu0 0.0
      %3716 = vmatprep.subr.mxu0 0.0
      %3717 = vmatpush2.msra.mxu0 0.0
      %3718 = vmatprep.subr.mxu0 0.0
      %3719 = vmatpush2.msra.mxu0 0.0
      %3720 = vmatprep.subr.mxu0 0.0
      %3721 = vmatpush2.msra.mxu0 0.0
      %3722 = vmatprep.subr.mxu0 0.0
      %3723 = vmatpush2.msra.mxu0 0.0
      %3724 = vmatprep.mubr.f32.mxu0 0.0
      %3725 = vmatmul.mubr.f32.gmra.mxu0 %v3655
      %v3726 = vpop.f32.mrf.mxu0
      %v3727 = vadd.f32 0.0, %v3726
      %v3728 = vpop.f32.mrf.mxu0
      %3729 = vmatprep.mubr.f32.mxu0 0.0
      %3730 = vmatmul.mubr.f32.gmra.mxu0 %v3658
      %v3731 = vpop.f32.mrf.mxu0
      %v3732 = vadd.f32 0.0, %v3731
      %v3733 = vpop.f32.mrf.mxu0
      %3734 = vdwg.mxu0
      %3735 = vrot.lane.b32.xlu0 %v3002, 56
      %v3736 = vpop.permute.xlu0 %3735
      %3737 = vrot.lane.b32.xlu0 %v3007, 56
      %v3738 = vpop.permute.xlu0 %3737
      %v3742 = vsel %vm869, %v3646, 0
      %v3745 = vsel %vm869, %v3647, 0
      %3747 = vmatprep.subr.mxu0 0.0
      %3748 = vmatpush1.msra.mxu0 0.0
      %3749 = vmatprep.subr.mxu0 0.0
      %3750 = vmatpush1.msra.mxu0 0.0
      %3751 = vmatprep.subr.mxu0 0.0
      %3752 = vmatpush1.msra.mxu0 0.0
      %3753 = vmatprep.subr.mxu0 0.0
      %3754 = vmatpush1.msra.mxu0 0.0
      %3755 = vmatprep.subr.mxu0 0.0
      %3756 = vmatpush1.msra.mxu0 0.0
      %3757 = vmatprep.subr.mxu0 0.0
      %3758 = vmatpush1.msra.mxu0 0.0
      %3759 = vmatprep.subr.mxu0 0.0
      %3760 = vmatpush1.msra.mxu0 0.0
      %3761 = vmatprep.subr.mxu0 0.0
      %3762 = vmatpush1.msra.mxu0 0.0
      %3763 = vmatprep.subr.mxu0 0.0
      %3764 = vmatpush1.msra.mxu0 0.0
      %3765 = vmatprep.subr.mxu0 0.0
      %3766 = vmatpush1.msra.mxu0 0.0
      %3767 = vmatprep.subr.mxu0 0.0
      %3768 = vmatpush1.msra.mxu0 0.0
      %3769 = vmatprep.subr.mxu0 0.0
      %3770 = vmatpush1.msra.mxu0 0.0
      %3771 = vmatprep.subr.mxu0 0.0
      %3772 = vmatpush1.msra.mxu0 0.0
      %3773 = vmatprep.subr.mxu0 0.0
      %3774 = vmatpush1.msra.mxu0 0.0
      %3775 = vmatprep.subr.mxu0 0.0
      %3776 = vmatpush1.msra.mxu0 %v3738
      %3777 = vmatprep.subr.mxu0 0.0
      %3778 = vmatpush1.msra.mxu0 %v3736
      %3779 = vmatprep.subr.mxu0 0.0
      %3780 = vmatpush2.msra.mxu0 0.0
      %3781 = vmatprep.subr.mxu0 0.0
      %3782 = vmatpush2.msra.mxu0 0.0
      %3783 = vmatprep.subr.mxu0 0.0
      %3784 = vmatpush2.msra.mxu0 0.0
      %3785 = vmatprep.subr.mxu0 0.0
      %3786 = vmatpush2.msra.mxu0 0.0
      %3787 = vmatprep.subr.mxu0 0.0
      %3788 = vmatpush2.msra.mxu0 0.0
      %3789 = vmatprep.subr.mxu0 0.0
      %3790 = vmatpush2.msra.mxu0 0.0
      %3791 = vmatprep.subr.mxu0 0.0
      %3792 = vmatpush2.msra.mxu0 0.0
      %3793 = vmatprep.subr.mxu0 0.0
      %3794 = vmatpush2.msra.mxu0 0.0
      %3795 = vmatprep.subr.mxu0 0.0
      %3796 = vmatpush2.msra.mxu0 0.0
      %3797 = vmatprep.subr.mxu0 0.0
      %3798 = vmatpush2.msra.mxu0 0.0
      %3799 = vmatprep.subr.mxu0 0.0
      %3800 = vmatpush2.msra.mxu0 0.0
      %3801 = vmatprep.subr.mxu0 0.0
      %3802 = vmatpush2.msra.mxu0 0.0
      %3803 = vmatprep.subr.mxu0 0.0
      %3804 = vmatpush2.msra.mxu0 0.0
      %3805 = vmatprep.subr.mxu0 0.0
      %3806 = vmatpush2.msra.mxu0 0.0
      %3807 = vmatprep.subr.mxu0 0.0
      %3808 = vmatpush2.msra.mxu0 0.0
      %3809 = vmatprep.subr.mxu0 0.0
      %3810 = vmatpush2.msra.mxu0 0.0
      %3811 = vmatprep.mubr.f32.mxu0 0.0
      %3812 = vmatmul.mubr.f32.gmra.mxu0 %v3742
      %v3813 = vpop.f32.mrf.mxu0
      %v3814 = vadd.f32 0.0, %v3813
      %v3815 = vpop.f32.mrf.mxu0
      %3816 = vmatprep.mubr.f32.mxu0 0.0
      %3817 = vmatmul.mubr.f32.gmra.mxu0 %v3745
      %v3818 = vpop.f32.mrf.mxu0
      %v3819 = vadd.f32 0.0, %v3818
      %v3820 = vpop.f32.mrf.mxu0
      %3821 = vdwg.mxu0
      %3822 = vrot.lane.b32.xlu0 %v2992, 112
      %v3823 = vpop.permute.xlu0 %3822
      %3824 = vrot.lane.b32.xlu0 %v2997, 112
      %v3825 = vpop.permute.xlu0 %3824
      %3826 = vrot.lane.b32.xlu0 %v2992, 80
      %v3827 = vpop.permute.xlu0 %3826
      %3828 = vrot.lane.b32.xlu0 %v2997, 80
      %v3829 = vpop.permute.xlu0 %3828
      %v3830 = vsel %vm676, %v3823, 0
      %v3832 = vsel %vm676, %v3825, 0
      %v3834 = vsel %vm676, %v3827, 0
      %v3836 = vsel %vm676, %v3829, 0
      %3838 = vmatprep.subr.mxu0 0.0
      %3839 = vmatpush1.xpose.msra.mxu0 0.0
      %3840 = vmatprep.subr.mxu0 0.0
      %3841 = vmatpush1.xpose.msra.mxu0 0.0
      %3842 = vmatprep.subr.mxu0 0.0
      %3843 = vmatpush1.xpose.msra.mxu0 0.0
      %3844 = vmatprep.subr.mxu0 0.0
      %3845 = vmatpush1.xpose.msra.mxu0 0.0
      %3846 = vmatprep.subr.mxu0 0.0
      %3847 = vmatpush1.xpose.msra.mxu0 0.0
      %3848 = vmatprep.subr.mxu0 0.0
      %3849 = vmatpush1.xpose.msra.mxu0 0.0
      %3850 = vmatprep.subr.mxu0 0.0
      %3851 = vmatpush1.xpose.msra.mxu0 0.0
      %3852 = vmatprep.subr.mxu0 0.0
      %3853 = vmatpush1.xpose.msra.mxu0 0.0
      %3854 = vmatprep.subr.mxu0 0.0
      %3855 = vmatpush1.xpose.msra.mxu0 0.0
      %3856 = vmatprep.subr.mxu0 0.0
      %3857 = vmatpush1.xpose.msra.mxu0 0.0
      %3858 = vmatprep.subr.mxu0 0.0
      %3859 = vmatpush1.xpose.msra.mxu0 0.0
      %3860 = vmatprep.subr.mxu0 0.0
      %3861 = vmatpush1.xpose.msra.mxu0 0.0
      %3862 = vmatprep.subr.mxu0 0.0
      %3863 = vmatpush1.xpose.msra.mxu0 0.0
      %3864 = vmatprep.subr.mxu0 0.0
      %3865 = vmatpush1.xpose.msra.mxu0 0.0
      %3866 = vmatprep.subr.mxu0 0.0
      %3867 = vmatpush1.xpose.msra.mxu0 %v3836
      %3868 = vmatprep.subr.mxu0 0.0
      %3869 = vmatpush1.xpose.msra.mxu0 %v3834
      %3870 = vmatprep.subr.mxu0 0.0
      %3871 = vmatpush2.xpose.msra.mxu0 0.0
      %3872 = vmatprep.subr.mxu0 0.0
      %3873 = vmatpush2.xpose.msra.mxu0 0.0
      %3874 = vmatprep.subr.mxu0 0.0
      %3875 = vmatpush2.xpose.msra.mxu0 0.0
      %3876 = vmatprep.subr.mxu0 0.0
      %3877 = vmatpush2.xpose.msra.mxu0 0.0
      %3878 = vmatprep.subr.mxu0 0.0
      %3879 = vmatpush2.xpose.msra.mxu0 0.0
      %3880 = vmatprep.subr.mxu0 0.0
      %3881 = vmatpush2.xpose.msra.mxu0 0.0
      %3882 = vmatprep.subr.mxu0 0.0
      %3883 = vmatpush2.xpose.msra.mxu0 0.0
      %3884 = vmatprep.subr.mxu0 0.0
      %3885 = vmatpush2.xpose.msra.mxu0 0.0
      %3886 = vmatprep.subr.mxu0 0.0
      %3887 = vmatpush2.xpose.msra.mxu0 0.0
      %3888 = vmatprep.subr.mxu0 0.0
      %3889 = vmatpush2.xpose.msra.mxu0 0.0
      %3890 = vmatprep.subr.mxu0 0.0
      %3891 = vmatpush2.xpose.msra.mxu0 0.0
      %3892 = vmatprep.subr.mxu0 0.0
      %3893 = vmatpush2.xpose.msra.mxu0 0.0
      %3894 = vmatprep.subr.mxu0 0.0
      %3895 = vmatpush2.xpose.msra.mxu0 0.0
      %3896 = vmatprep.subr.mxu0 0.0
      %3897 = vmatpush2.xpose.msra.mxu0 0.0
      %3898 = vmatprep.subr.mxu0 0.0
      %3899 = vmatpush2.xpose.msra.mxu0 0.0
      %3900 = vmatprep.subr.mxu0 0.0
      %3901 = vmatpush2.xpose.msra.mxu0 0.0
      %3902 = vmatprep.mubr.f32.mxu0 0.0
      %3903 = vmatmul.mubr.f32.gmra.mxu0 %v3830
      %v3904 = vpop.f32.mrf.mxu0
      %v3905 = vadd.f32 0.0, %v3904
      %v3906 = vpop.f32.mrf.mxu0
      %3907 = vmatprep.mubr.f32.mxu0 0.0
      %3908 = vmatmul.mubr.f32.gmra.mxu0 %v3832
      %v3909 = vpop.f32.mrf.mxu0
      %v3910 = vadd.f32 0.0, %v3909
      %v3911 = vpop.f32.mrf.mxu0
      %3912 = vdwg.mxu0
      %3913 = vrot.lane.b32.xlu0 %v3002, 112
      %v3914 = vpop.permute.xlu0 %3913
      %3915 = vrot.lane.b32.xlu0 %v3007, 112
      %v3916 = vpop.permute.xlu0 %3915
      %3917 = vrot.lane.b32.xlu0 %v3002, 80
      %v3918 = vpop.permute.xlu0 %3917
      %3919 = vrot.lane.b32.xlu0 %v3007, 80
      %v3920 = vpop.permute.xlu0 %3919
      %v3921 = vsel %vm676, %v3914, 0
      %v3923 = vsel %vm676, %v3916, 0
      %v3925 = vsel %vm676, %v3918, 0
      %v3927 = vsel %vm676, %v3920, 0
      %3929 = vmatprep.subr.mxu0 0.0
      %3930 = vmatpush1.xpose.msra.mxu0 0.0
      %3931 = vmatprep.subr.mxu0 0.0
      %3932 = vmatpush1.xpose.msra.mxu0 0.0
      %3933 = vmatprep.subr.mxu0 0.0
      %3934 = vmatpush1.xpose.msra.mxu0 0.0
      %3935 = vmatprep.subr.mxu0 0.0
      %3936 = vmatpush1.xpose.msra.mxu0 0.0
      %3937 = vmatprep.subr.mxu0 0.0
      %3938 = vmatpush1.xpose.msra.mxu0 0.0
      %3939 = vmatprep.subr.mxu0 0.0
      %3940 = vmatpush1.xpose.msra.mxu0 0.0
      %3941 = vmatprep.subr.mxu0 0.0
      %3942 = vmatpush1.xpose.msra.mxu0 0.0
      %3943 = vmatprep.subr.mxu0 0.0
      %3944 = vmatpush1.xpose.msra.mxu0 0.0
      %3945 = vmatprep.subr.mxu0 0.0
      %3946 = vmatpush1.xpose.msra.mxu0 0.0
      %3947 = vmatprep.subr.mxu0 0.0
      %3948 = vmatpush1.xpose.msra.mxu0 0.0
      %3949 = vmatprep.subr.mxu0 0.0
      %3950 = vmatpush1.xpose.msra.mxu0 0.0
      %3951 = vmatprep.subr.mxu0 0.0
      %3952 = vmatpush1.xpose.msra.mxu0 0.0
      %3953 = vmatprep.subr.mxu0 0.0
      %3954 = vmatpush1.xpose.msra.mxu0 0.0
      %3955 = vmatprep.subr.mxu0 0.0
      %3956 = vmatpush1.xpose.msra.mxu0 0.0
      %3957 = vmatprep.subr.mxu0 0.0
      %3958 = vmatpush1.xpose.msra.mxu0 %v3927
      %3959 = vmatprep.subr.mxu0 0.0
      %3960 = vmatpush1.xpose.msra.mxu0 %v3925
      %3961 = vmatprep.subr.mxu0 0.0
      %3962 = vmatpush2.xpose.msra.mxu0 0.0
      %3963 = vmatprep.subr.mxu0 0.0
      %3964 = vmatpush2.xpose.msra.mxu0 0.0
      %3965 = vmatprep.subr.mxu0 0.0
      %3966 = vmatpush2.xpose.msra.mxu0 0.0
      %3967 = vmatprep.subr.mxu0 0.0
      %3968 = vmatpush2.xpose.msra.mxu0 0.0
      %3969 = vmatprep.subr.mxu0 0.0
      %3970 = vmatpush2.xpose.msra.mxu0 0.0
      %3971 = vmatprep.subr.mxu0 0.0
      %3972 = vmatpush2.xpose.msra.mxu0 0.0
      %3973 = vmatprep.subr.mxu0 0.0
      %3974 = vmatpush2.xpose.msra.mxu0 0.0
      %3975 = vmatprep.subr.mxu0 0.0
      %3976 = vmatpush2.xpose.msra.mxu0 0.0
      %3977 = vmatprep.subr.mxu0 0.0
      %3978 = vmatpush2.xpose.msra.mxu0 0.0
      %3979 = vmatprep.subr.mxu0 0.0
      %3980 = vmatpush2.xpose.msra.mxu0 0.0
      %3981 = vmatprep.subr.mxu0 0.0
      %3982 = vmatpush2.xpose.msra.mxu0 0.0
      %3983 = vmatprep.subr.mxu0 0.0
      %3984 = vmatpush2.xpose.msra.mxu0 0.0
      %3985 = vmatprep.subr.mxu0 0.0
      %3986 = vmatpush2.xpose.msra.mxu0 0.0
      %3987 = vmatprep.subr.mxu0 0.0
      %3988 = vmatpush2.xpose.msra.mxu0 0.0
      %3989 = vmatprep.subr.mxu0 0.0
      %3990 = vmatpush2.xpose.msra.mxu0 0.0
      %3991 = vmatprep.subr.mxu0 0.0
      %3992 = vmatpush2.xpose.msra.mxu0 0.0
      %3993 = vmatprep.mubr.f32.mxu0 0.0
      %3994 = vmatmul.mubr.f32.gmra.mxu0 %v3921
      %v3995 = vpop.f32.mrf.mxu0
      %v3996 = vadd.f32 0.0, %v3995
      %v3997 = vpop.f32.mrf.mxu0
      %3998 = vmatprep.mubr.f32.mxu0 0.0
      %3999 = vmatmul.mubr.f32.gmra.mxu0 %v3923
      %v4000 = vpop.f32.mrf.mxu0
      %v4001 = vadd.f32 0.0, %v4000
      %v4002 = vpop.f32.mrf.mxu0
      %4003 = vdwg.mxu0
      %v4004 = vmul.f32 %v3905, 0.35355338
      %v4005 = vmul.f32 %v3910, 0.35355338
      %v4006 = vmul.f32 %v3996, 0.35355338
      %v4007 = vmul.f32 %v4001, 0.35355338
      %v4008 = vadd.f32 %v4004, %v858
      %v4009 = vadd.f32 %v4005, %v858
      %v4010 = vadd.f32 %v4006, %v862
      %v4011 = vadd.f32 %v4007, %v862
      %v4012 = vsel %vm869, %v4008, -inf
      %4013 = vmax.xlane.f32.xlu0 %v4012
      %v4014 = vpop.xlane.xlu0 %4013
      %v4015 = vsel %vm869, %v4009, -inf
      %4016 = vmax.xlane.f32.xlu0 %v4015
      %v4017 = vpop.xlane.xlu0 %4016
      %v4018 = vsel %vm869, %v4010, -inf
      %4019 = vmax.xlane.f32.xlu0 %v4018
      %v4020 = vpop.xlane.xlu0 %4019
      %v4021 = vsel %vm869, %v4011, -inf
      %4022 = vmax.xlane.f32.xlu0 %v4021
      %v4023 = vpop.xlane.xlu0 %4022
      %v4024 = vsub.f32 %v4008, %v4014
      %v4025 = vsub.f32 %v4009, %v4017
      %v4026 = vsub.f32 %v4010, %v4020
      %v4027 = vsub.f32 %v4011, %v4023
      %v4028 = vmul.f32 %v4024, 1.442695
      %v4029 = vpow.pop %v4028
      %v4030 = vmul.f32 %v4025, 1.442695
      %v4031 = vpow.pop %v4030
      %v4032 = vmul.f32 %v4026, 1.442695
      %v4033 = vpow.pop %v4032
      %v4034 = vmul.f32 %v4027, 1.442695
      %v4035 = vpow.pop %v4034
      %v4036 = vsel %vm869, %v4029, 0.0
      %4037 = vadd.xlane.f32.xlu0 %v4036
      %v4038 = vpop.xlane.xlu0 %4037
      %v4039 = vsel %vm869, %v4031, 0.0
      %4040 = vadd.xlane.f32.xlu0 %v4039
      %v4041 = vpop.xlane.xlu0 %4040
      %v4042 = vsel %vm869, %v4033, 0.0
      %4043 = vadd.xlane.f32.xlu0 %v4042
      %v4044 = vpop.xlane.xlu0 %4043
      %v4045 = vsel %vm869, %v4035, 0.0
      %4046 = vadd.xlane.f32.xlu0 %v4045
      %v4047 = vpop.xlane.xlu0 %4046
      %v4048 = vrcp.pop %v4038
      %v4049 = vrcp.pop %v4041
      %v4050 = vrcp.pop %v4044
      %v4051 = vrcp.pop %v4047
      %v4052 = vmul.f32 %v4029, %v4048
      %v4053 = vmul.f32 %v4031, %v4049
      %v4054 = vmul.f32 %v4033, %v4050
      %v4055 = vmul.f32 %v4035, %v4051
      %4056 = vrot.lane.b32.xlu0 %v2992, 48
      %v4057 = vpop.permute.xlu0 %4056
      %4058 = vrot.lane.b32.xlu0 %v2997, 48
      %v4059 = vpop.permute.xlu0 %4058
      %v4063 = vsel %vm869, %v4052, 0
      %v4066 = vsel %vm869, %v4053, 0
      %4068 = vmatprep.subr.mxu0 0.0
      %4069 = vmatpush1.msra.mxu0 0.0
      %4070 = vmatprep.subr.mxu0 0.0
      %4071 = vmatpush1.msra.mxu0 0.0
      %4072 = vmatprep.subr.mxu0 0.0
      %4073 = vmatpush1.msra.mxu0 0.0
      %4074 = vmatprep.subr.mxu0 0.0
      %4075 = vmatpush1.msra.mxu0 0.0
      %4076 = vmatprep.subr.mxu0 0.0
      %4077 = vmatpush1.msra.mxu0 0.0
      %4078 = vmatprep.subr.mxu0 0.0
      %4079 = vmatpush1.msra.mxu0 0.0
      %4080 = vmatprep.subr.mxu0 0.0
      %4081 = vmatpush1.msra.mxu0 0.0
      %4082 = vmatprep.subr.mxu0 0.0
      %4083 = vmatpush1.msra.mxu0 0.0
      %4084 = vmatprep.subr.mxu0 0.0
      %4085 = vmatpush1.msra.mxu0 0.0
      %4086 = vmatprep.subr.mxu0 0.0
      %4087 = vmatpush1.msra.mxu0 0.0
      %4088 = vmatprep.subr.mxu0 0.0
      %4089 = vmatpush1.msra.mxu0 0.0
      %4090 = vmatprep.subr.mxu0 0.0
      %4091 = vmatpush1.msra.mxu0 0.0
      %4092 = vmatprep.subr.mxu0 0.0
      %4093 = vmatpush1.msra.mxu0 0.0
      %4094 = vmatprep.subr.mxu0 0.0
      %4095 = vmatpush1.msra.mxu0 0.0
      %4096 = vmatprep.subr.mxu0 0.0
      %4097 = vmatpush1.msra.mxu0 %v4059
      %4098 = vmatprep.subr.mxu0 0.0
      %4099 = vmatpush1.msra.mxu0 %v4057
      %4100 = vmatprep.subr.mxu0 0.0
      %4101 = vmatpush2.msra.mxu0 0.0
      %4102 = vmatprep.subr.mxu0 0.0
      %4103 = vmatpush2.msra.mxu0 0.0
      %4104 = vmatprep.subr.mxu0 0.0
      %4105 = vmatpush2.msra.mxu0 0.0
      %4106 = vmatprep.subr.mxu0 0.0
      %4107 = vmatpush2.msra.mxu0 0.0
      %4108 = vmatprep.subr.mxu0 0.0
      %4109 = vmatpush2.msra.mxu0 0.0
      %4110 = vmatprep.subr.mxu0 0.0
      %4111 = vmatpush2.msra.mxu0 0.0
      %4112 = vmatprep.subr.mxu0 0.0
      %4113 = vmatpush2.msra.mxu0 0.0
      %4114 = vmatprep.subr.mxu0 0.0
      %4115 = vmatpush2.msra.mxu0 0.0
      %4116 = vmatprep.subr.mxu0 0.0
      %4117 = vmatpush2.msra.mxu0 0.0
      %4118 = vmatprep.subr.mxu0 0.0
      %4119 = vmatpush2.msra.mxu0 0.0
      %4120 = vmatprep.subr.mxu0 0.0
      %4121 = vmatpush2.msra.mxu0 0.0
      %4122 = vmatprep.subr.mxu0 0.0
      %4123 = vmatpush2.msra.mxu0 0.0
      %4124 = vmatprep.subr.mxu0 0.0
      %4125 = vmatpush2.msra.mxu0 0.0
      %4126 = vmatprep.subr.mxu0 0.0
      %4127 = vmatpush2.msra.mxu0 0.0
      %4128 = vmatprep.subr.mxu0 0.0
      %4129 = vmatpush2.msra.mxu0 0.0
      %4130 = vmatprep.subr.mxu0 0.0
      %4131 = vmatpush2.msra.mxu0 0.0
      %4132 = vmatprep.mubr.f32.mxu0 0.0
      %4133 = vmatmul.mubr.f32.gmra.mxu0 %v4063
      %v4134 = vpop.f32.mrf.mxu0
      %v4135 = vadd.f32 0.0, %v4134
      %v4136 = vpop.f32.mrf.mxu0
      %4137 = vmatprep.mubr.f32.mxu0 0.0
      %4138 = vmatmul.mubr.f32.gmra.mxu0 %v4066
      %v4139 = vpop.f32.mrf.mxu0
      %v4140 = vadd.f32 0.0, %v4139
      %v4141 = vpop.f32.mrf.mxu0
      %4142 = vdwg.mxu0
      %4143 = vrot.lane.b32.xlu0 %v3002, 48
      %v4144 = vpop.permute.xlu0 %4143
      %4145 = vrot.lane.b32.xlu0 %v3007, 48
      %v4146 = vpop.permute.xlu0 %4145
      %v4150 = vsel %vm869, %v4054, 0
      %v4153 = vsel %vm869, %v4055, 0
      %4155 = vmatprep.subr.mxu0 0.0
      %4156 = vmatpush1.msra.mxu0 0.0
      %4157 = vmatprep.subr.mxu0 0.0
      %4158 = vmatpush1.msra.mxu0 0.0
      %4159 = vmatprep.subr.mxu0 0.0
      %4160 = vmatpush1.msra.mxu0 0.0
      %4161 = vmatprep.subr.mxu0 0.0
      %4162 = vmatpush1.msra.mxu0 0.0
      %4163 = vmatprep.subr.mxu0 0.0
      %4164 = vmatpush1.msra.mxu0 0.0
      %4165 = vmatprep.subr.mxu0 0.0
      %4166 = vmatpush1.msra.mxu0 0.0
      %4167 = vmatprep.subr.mxu0 0.0
      %4168 = vmatpush1.msra.mxu0 0.0
      %4169 = vmatprep.subr.mxu0 0.0
      %4170 = vmatpush1.msra.mxu0 0.0
      %4171 = vmatprep.subr.mxu0 0.0
      %4172 = vmatpush1.msra.mxu0 0.0
      %4173 = vmatprep.subr.mxu0 0.0
      %4174 = vmatpush1.msra.mxu0 0.0
      %4175 = vmatprep.subr.mxu0 0.0
      %4176 = vmatpush1.msra.mxu0 0.0
      %4177 = vmatprep.subr.mxu0 0.0
      %4178 = vmatpush1.msra.mxu0 0.0
      %4179 = vmatprep.subr.mxu0 0.0
      %4180 = vmatpush1.msra.mxu0 0.0
      %4181 = vmatprep.subr.mxu0 0.0
      %4182 = vmatpush1.msra.mxu0 0.0
      %4183 = vmatprep.subr.mxu0 0.0
      %4184 = vmatpush1.msra.mxu0 %v4146
      %4185 = vmatprep.subr.mxu0 0.0
      %4186 = vmatpush1.msra.mxu0 %v4144
      %4187 = vmatprep.subr.mxu0 0.0
      %4188 = vmatpush2.msra.mxu0 0.0
      %4189 = vmatprep.subr.mxu0 0.0
      %4190 = vmatpush2.msra.mxu0 0.0
      %4191 = vmatprep.subr.mxu0 0.0
      %4192 = vmatpush2.msra.mxu0 0.0
      %4193 = vmatprep.subr.mxu0 0.0
      %4194 = vmatpush2.msra.mxu0 0.0
      %4195 = vmatprep.subr.mxu0 0.0
      %4196 = vmatpush2.msra.mxu0 0.0
      %4197 = vmatprep.subr.mxu0 0.0
      %4198 = vmatpush2.msra.mxu0 0.0
      %4199 = vmatprep.subr.mxu0 0.0
      %4200 = vmatpush2.msra.mxu0 0.0
      %4201 = vmatprep.subr.mxu0 0.0
      %4202 = vmatpush2.msra.mxu0 0.0
      %4203 = vmatprep.subr.mxu0 0.0
      %4204 = vmatpush2.msra.mxu0 0.0
      %4205 = vmatprep.subr.mxu0 0.0
      %4206 = vmatpush2.msra.mxu0 0.0
      %4207 = vmatprep.subr.mxu0 0.0
      %4208 = vmatpush2.msra.mxu0 0.0
      %4209 = vmatprep.subr.mxu0 0.0
      %4210 = vmatpush2.msra.mxu0 0.0
      %4211 = vmatprep.subr.mxu0 0.0
      %4212 = vmatpush2.msra.mxu0 0.0
      %4213 = vmatprep.subr.mxu0 0.0
      %4214 = vmatpush2.msra.mxu0 0.0
      %4215 = vmatprep.subr.mxu0 0.0
      %4216 = vmatpush2.msra.mxu0 0.0
      %4217 = vmatprep.subr.mxu0 0.0
      %4218 = vmatpush2.msra.mxu0 0.0
      %4219 = vmatprep.mubr.f32.mxu0 0.0
      %4220 = vmatmul.mubr.f32.gmra.mxu0 %v4150
      %v4221 = vpop.f32.mrf.mxu0
      %v4222 = vadd.f32 0.0, %v4221
      %v4223 = vpop.f32.mrf.mxu0
      %4224 = vmatprep.mubr.f32.mxu0 0.0
      %4225 = vmatmul.mubr.f32.gmra.mxu0 %v4153
      %v4226 = vpop.f32.mrf.mxu0
      %v4227 = vadd.f32 0.0, %v4226
      %v4228 = vpop.f32.mrf.mxu0
      %4229 = vdwg.mxu0
      %4230 = vrot.lane.b32.xlu0 %v2992, 104
      %v4231 = vpop.permute.xlu0 %4230
      %4232 = vrot.lane.b32.xlu0 %v2997, 104
      %v4233 = vpop.permute.xlu0 %4232
      %4234 = vrot.lane.b32.xlu0 %v2992, 72
      %v4235 = vpop.permute.xlu0 %4234
      %4236 = vrot.lane.b32.xlu0 %v2997, 72
      %v4237 = vpop.permute.xlu0 %4236
      %v4238 = vsel %vm676, %v4231, 0
      %v4240 = vsel %vm676, %v4233, 0
      %v4242 = vsel %vm676, %v4235, 0
      %v4244 = vsel %vm676, %v4237, 0
      %4246 = vmatprep.subr.mxu0 0.0
      %4247 = vmatpush1.xpose.msra.mxu0 0.0
      %4248 = vmatprep.subr.mxu0 0.0
      %4249 = vmatpush1.xpose.msra.mxu0 0.0
      %4250 = vmatprep.subr.mxu0 0.0
      %4251 = vmatpush1.xpose.msra.mxu0 0.0
      %4252 = vmatprep.subr.mxu0 0.0
      %4253 = vmatpush1.xpose.msra.mxu0 0.0
      %4254 = vmatprep.subr.mxu0 0.0
      %4255 = vmatpush1.xpose.msra.mxu0 0.0
      %4256 = vmatprep.subr.mxu0 0.0
      %4257 = vmatpush1.xpose.msra.mxu0 0.0
      %4258 = vmatprep.subr.mxu0 0.0
      %4259 = vmatpush1.xpose.msra.mxu0 0.0
      %4260 = vmatprep.subr.mxu0 0.0
      %4261 = vmatpush1.xpose.msra.mxu0 0.0
      %4262 = vmatprep.subr.mxu0 0.0
      %4263 = vmatpush1.xpose.msra.mxu0 0.0
      %4264 = vmatprep.subr.mxu0 0.0
      %4265 = vmatpush1.xpose.msra.mxu0 0.0
      %4266 = vmatprep.subr.mxu0 0.0
      %4267 = vmatpush1.xpose.msra.mxu0 0.0
      %4268 = vmatprep.subr.mxu0 0.0
      %4269 = vmatpush1.xpose.msra.mxu0 0.0
      %4270 = vmatprep.subr.mxu0 0.0
      %4271 = vmatpush1.xpose.msra.mxu0 0.0
      %4272 = vmatprep.subr.mxu0 0.0
      %4273 = vmatpush1.xpose.msra.mxu0 0.0
      %4274 = vmatprep.subr.mxu0 0.0
      %4275 = vmatpush1.xpose.msra.mxu0 %v4244
      %4276 = vmatprep.subr.mxu0 0.0
      %4277 = vmatpush1.xpose.msra.mxu0 %v4242
      %4278 = vmatprep.subr.mxu0 0.0
      %4279 = vmatpush2.xpose.msra.mxu0 0.0
      %4280 = vmatprep.subr.mxu0 0.0
      %4281 = vmatpush2.xpose.msra.mxu0 0.0
      %4282 = vmatprep.subr.mxu0 0.0
      %4283 = vmatpush2.xpose.msra.mxu0 0.0
      %4284 = vmatprep.subr.mxu0 0.0
      %4285 = vmatpush2.xpose.msra.mxu0 0.0
      %4286 = vmatprep.subr.mxu0 0.0
      %4287 = vmatpush2.xpose.msra.mxu0 0.0
      %4288 = vmatprep.subr.mxu0 0.0
      %4289 = vmatpush2.xpose.msra.mxu0 0.0
      %4290 = vmatprep.subr.mxu0 0.0
      %4291 = vmatpush2.xpose.msra.mxu0 0.0
      %4292 = vmatprep.subr.mxu0 0.0
      %4293 = vmatpush2.xpose.msra.mxu0 0.0
      %4294 = vmatprep.subr.mxu0 0.0
      %4295 = vmatpush2.xpose.msra.mxu0 0.0
      %4296 = vmatprep.subr.mxu0 0.0
      %4297 = vmatpush2.xpose.msra.mxu0 0.0
      %4298 = vmatprep.subr.mxu0 0.0
      %4299 = vmatpush2.xpose.msra.mxu0 0.0
      %4300 = vmatprep.subr.mxu0 0.0
      %4301 = vmatpush2.xpose.msra.mxu0 0.0
      %4302 = vmatprep.subr.mxu0 0.0
      %4303 = vmatpush2.xpose.msra.mxu0 0.0
      %4304 = vmatprep.subr.mxu0 0.0
      %4305 = vmatpush2.xpose.msra.mxu0 0.0
      %4306 = vmatprep.subr.mxu0 0.0
      %4307 = vmatpush2.xpose.msra.mxu0 0.0
      %4308 = vmatprep.subr.mxu0 0.0
      %4309 = vmatpush2.xpose.msra.mxu0 0.0
      %4310 = vmatprep.mubr.f32.mxu0 0.0
      %4311 = vmatmul.mubr.f32.gmra.mxu0 %v4238
      %v4312 = vpop.f32.mrf.mxu0
      %v4313 = vadd.f32 0.0, %v4312
      %v4314 = vpop.f32.mrf.mxu0
      %4315 = vmatprep.mubr.f32.mxu0 0.0
      %4316 = vmatmul.mubr.f32.gmra.mxu0 %v4240
      %v4317 = vpop.f32.mrf.mxu0
      %v4318 = vadd.f32 0.0, %v4317
      %v4319 = vpop.f32.mrf.mxu0
      %4320 = vdwg.mxu0
      %4321 = vrot.lane.b32.xlu0 %v3002, 104
      %v4322 = vpop.permute.xlu0 %4321
      %4323 = vrot.lane.b32.xlu0 %v3007, 104
      %v4324 = vpop.permute.xlu0 %4323
      %4325 = vrot.lane.b32.xlu0 %v3002, 72
      %v4326 = vpop.permute.xlu0 %4325
      %4327 = vrot.lane.b32.xlu0 %v3007, 72
      %v4328 = vpop.permute.xlu0 %4327
      %v4329 = vsel %vm676, %v4322, 0
      %v4331 = vsel %vm676, %v4324, 0
      %v4333 = vsel %vm676, %v4326, 0
      %v4335 = vsel %vm676, %v4328, 0
      %4337 = vmatprep.subr.mxu0 0.0
      %4338 = vmatpush1.xpose.msra.mxu0 0.0
      %4339 = vmatprep.subr.mxu0 0.0
      %4340 = vmatpush1.xpose.msra.mxu0 0.0
      %4341 = vmatprep.subr.mxu0 0.0
      %4342 = vmatpush1.xpose.msra.mxu0 0.0
      %4343 = vmatprep.subr.mxu0 0.0
      %4344 = vmatpush1.xpose.msra.mxu0 0.0
      %4345 = vmatprep.subr.mxu0 0.0
      %4346 = vmatpush1.xpose.msra.mxu0 0.0
      %4347 = vmatprep.subr.mxu0 0.0
      %4348 = vmatpush1.xpose.msra.mxu0 0.0
      %4349 = vmatprep.subr.mxu0 0.0
      %4350 = vmatpush1.xpose.msra.mxu0 0.0
      %4351 = vmatprep.subr.mxu0 0.0
      %4352 = vmatpush1.xpose.msra.mxu0 0.0
      %4353 = vmatprep.subr.mxu0 0.0
      %4354 = vmatpush1.xpose.msra.mxu0 0.0
      %4355 = vmatprep.subr.mxu0 0.0
      %4356 = vmatpush1.xpose.msra.mxu0 0.0
      %4357 = vmatprep.subr.mxu0 0.0
      %4358 = vmatpush1.xpose.msra.mxu0 0.0
      %4359 = vmatprep.subr.mxu0 0.0
      %4360 = vmatpush1.xpose.msra.mxu0 0.0
      %4361 = vmatprep.subr.mxu0 0.0
      %4362 = vmatpush1.xpose.msra.mxu0 0.0
      %4363 = vmatprep.subr.mxu0 0.0
      %4364 = vmatpush1.xpose.msra.mxu0 0.0
      %4365 = vmatprep.subr.mxu0 0.0
      %4366 = vmatpush1.xpose.msra.mxu0 %v4335
      %4367 = vmatprep.subr.mxu0 0.0
      %4368 = vmatpush1.xpose.msra.mxu0 %v4333
      %4369 = vmatprep.subr.mxu0 0.0
      %4370 = vmatpush2.xpose.msra.mxu0 0.0
      %4371 = vmatprep.subr.mxu0 0.0
      %4372 = vmatpush2.xpose.msra.mxu0 0.0
      %4373 = vmatprep.subr.mxu0 0.0
      %4374 = vmatpush2.xpose.msra.mxu0 0.0
      %4375 = vmatprep.subr.mxu0 0.0
      %4376 = vmatpush2.xpose.msra.mxu0 0.0
      %4377 = vmatprep.subr.mxu0 0.0
      %4378 = vmatpush2.xpose.msra.mxu0 0.0
      %4379 = vmatprep.subr.mxu0 0.0
      %4380 = vmatpush2.xpose.msra.mxu0 0.0
      %4381 = vmatprep.subr.mxu0 0.0
      %4382 = vmatpush2.xpose.msra.mxu0 0.0
      %4383 = vmatprep.subr.mxu0 0.0
      %4384 = vmatpush2.xpose.msra.mxu0 0.0
      %4385 = vmatprep.subr.mxu0 0.0
      %4386 = vmatpush2.xpose.msra.mxu0 0.0
      %4387 = vmatprep.subr.mxu0 0.0
      %4388 = vmatpush2.xpose.msra.mxu0 0.0
      %4389 = vmatprep.subr.mxu0 0.0
      %4390 = vmatpush2.xpose.msra.mxu0 0.0
      %4391 = vmatprep.subr.mxu0 0.0
      %4392 = vmatpush2.xpose.msra.mxu0 0.0
      %4393 = vmatprep.subr.mxu0 0.0
      %4394 = vmatpush2.xpose.msra.mxu0 0.0
      %4395 = vmatprep.subr.mxu0 0.0
      %4396 = vmatpush2.xpose.msra.mxu0 0.0
      %4397 = vmatprep.subr.mxu0 0.0
      %4398 = vmatpush2.xpose.msra.mxu0 0.0
      %4399 = vmatprep.subr.mxu0 0.0
      %4400 = vmatpush2.xpose.msra.mxu0 0.0
      %4401 = vmatprep.mubr.f32.mxu0 0.0
      %4402 = vmatmul.mubr.f32.gmra.mxu0 %v4329
      %v4403 = vpop.f32.mrf.mxu0
      %v4404 = vadd.f32 0.0, %v4403
      %v4405 = vpop.f32.mrf.mxu0
      %4406 = vmatprep.mubr.f32.mxu0 0.0
      %4407 = vmatmul.mubr.f32.gmra.mxu0 %v4331
      %v4408 = vpop.f32.mrf.mxu0
      %v4409 = vadd.f32 0.0, %v4408
      %v4410 = vpop.f32.mrf.mxu0
      %4411 = vdwg.mxu0
      %v4412 = vmul.f32 %v4313, 0.35355338
      %v4413 = vmul.f32 %v4318, 0.35355338
      %v4414 = vmul.f32 %v4404, 0.35355338
      %v4415 = vmul.f32 %v4409, 0.35355338
      %v4416 = vadd.f32 %v4412, %v858
      %v4417 = vadd.f32 %v4413, %v858
      %v4418 = vadd.f32 %v4414, %v862
      %v4419 = vadd.f32 %v4415, %v862
      %v4420 = vsel %vm869, %v4416, -inf
      %4421 = vmax.xlane.f32.xlu0 %v4420
      %v4422 = vpop.xlane.xlu0 %4421
      %v4423 = vsel %vm869, %v4417, -inf
      %4424 = vmax.xlane.f32.xlu0 %v4423
      %v4425 = vpop.xlane.xlu0 %4424
      %v4426 = vsel %vm869, %v4418, -inf
      %4427 = vmax.xlane.f32.xlu0 %v4426
      %v4428 = vpop.xlane.xlu0 %4427
      %v4429 = vsel %vm869, %v4419, -inf
      %4430 = vmax.xlane.f32.xlu0 %v4429
      %v4431 = vpop.xlane.xlu0 %4430
      %v4432 = vsub.f32 %v4416, %v4422
      %v4433 = vsub.f32 %v4417, %v4425
      %v4434 = vsub.f32 %v4418, %v4428
      %v4435 = vsub.f32 %v4419, %v4431
      %v4436 = vmul.f32 %v4432, 1.442695
      %v4437 = vpow.pop %v4436
      %v4438 = vmul.f32 %v4433, 1.442695
      %v4439 = vpow.pop %v4438
      %v4440 = vmul.f32 %v4434, 1.442695
      %v4441 = vpow.pop %v4440
      %v4442 = vmul.f32 %v4435, 1.442695
      %v4443 = vpow.pop %v4442
      %v4444 = vsel %vm869, %v4437, 0.0
      %4445 = vadd.xlane.f32.xlu0 %v4444
      %v4446 = vpop.xlane.xlu0 %4445
      %v4447 = vsel %vm869, %v4439, 0.0
      %4448 = vadd.xlane.f32.xlu0 %v4447
      %v4449 = vpop.xlane.xlu0 %4448
      %v4450 = vsel %vm869, %v4441, 0.0
      %4451 = vadd.xlane.f32.xlu0 %v4450
      %v4452 = vpop.xlane.xlu0 %4451
      %v4453 = vsel %vm869, %v4443, 0.0
      %4454 = vadd.xlane.f32.xlu0 %v4453
      %v4455 = vpop.xlane.xlu0 %4454
      %v4456 = vrcp.pop %v4446
      %v4457 = vrcp.pop %v4449
      %v4458 = vrcp.pop %v4452
      %v4459 = vrcp.pop %v4455
      %v4460 = vmul.f32 %v4437, %v4456
      %v4461 = vmul.f32 %v4439, %v4457
      %v4462 = vmul.f32 %v4441, %v4458
      %v4463 = vmul.f32 %v4443, %v4459
      %4464 = vrot.lane.b32.xlu0 %v2992, 40
      %v4465 = vpop.permute.xlu0 %4464
      %4466 = vrot.lane.b32.xlu0 %v2997, 40
      %v4467 = vpop.permute.xlu0 %4466
      %v4471 = vsel %vm869, %v4460, 0
      %v4474 = vsel %vm869, %v4461, 0
      %4476 = vmatprep.subr.mxu0 0.0
      %4477 = vmatpush1.msra.mxu0 0.0
      %4478 = vmatprep.subr.mxu0 0.0
      %4479 = vmatpush1.msra.mxu0 0.0
      %4480 = vmatprep.subr.mxu0 0.0
      %4481 = vmatpush1.msra.mxu0 0.0
      %4482 = vmatprep.subr.mxu0 0.0
      %4483 = vmatpush1.msra.mxu0 0.0
      %4484 = vmatprep.subr.mxu0 0.0
      %4485 = vmatpush1.msra.mxu0 0.0
      %4486 = vmatprep.subr.mxu0 0.0
      %4487 = vmatpush1.msra.mxu0 0.0
      %4488 = vmatprep.subr.mxu0 0.0
      %4489 = vmatpush1.msra.mxu0 0.0
      %4490 = vmatprep.subr.mxu0 0.0
      %4491 = vmatpush1.msra.mxu0 0.0
      %4492 = vmatprep.subr.mxu0 0.0
      %4493 = vmatpush1.msra.mxu0 0.0
      %4494 = vmatprep.subr.mxu0 0.0
      %4495 = vmatpush1.msra.mxu0 0.0
      %4496 = vmatprep.subr.mxu0 0.0
      %4497 = vmatpush1.msra.mxu0 0.0
      %4498 = vmatprep.subr.mxu0 0.0
      %4499 = vmatpush1.msra.mxu0 0.0
      %4500 = vmatprep.subr.mxu0 0.0
      %4501 = vmatpush1.msra.mxu0 0.0
      %4502 = vmatprep.subr.mxu0 0.0
      %4503 = vmatpush1.msra.mxu0 0.0
      %4504 = vmatprep.subr.mxu0 0.0
      %4505 = vmatpush1.msra.mxu0 %v4467
      %4506 = vmatprep.subr.mxu0 0.0
      %4507 = vmatpush1.msra.mxu0 %v4465
      %4508 = vmatprep.subr.mxu0 0.0
      %4509 = vmatpush2.msra.mxu0 0.0
      %4510 = vmatprep.subr.mxu0 0.0
      %4511 = vmatpush2.msra.mxu0 0.0
      %4512 = vmatprep.subr.mxu0 0.0
      %4513 = vmatpush2.msra.mxu0 0.0
      %4514 = vmatprep.subr.mxu0 0.0
      %4515 = vmatpush2.msra.mxu0 0.0
      %4516 = vmatprep.subr.mxu0 0.0
      %4517 = vmatpush2.msra.mxu0 0.0
      %4518 = vmatprep.subr.mxu0 0.0
      %4519 = vmatpush2.msra.mxu0 0.0
      %4520 = vmatprep.subr.mxu0 0.0
      %4521 = vmatpush2.msra.mxu0 0.0
      %4522 = vmatprep.subr.mxu0 0.0
      %4523 = vmatpush2.msra.mxu0 0.0
      %4524 = vmatprep.subr.mxu0 0.0
      %4525 = vmatpush2.msra.mxu0 0.0
      %4526 = vmatprep.subr.mxu0 0.0
      %4527 = vmatpush2.msra.mxu0 0.0
      %4528 = vmatprep.subr.mxu0 0.0
      %4529 = vmatpush2.msra.mxu0 0.0
      %4530 = vmatprep.subr.mxu0 0.0
      %4531 = vmatpush2.msra.mxu0 0.0
      %4532 = vmatprep.subr.mxu0 0.0
      %4533 = vmatpush2.msra.mxu0 0.0
      %4534 = vmatprep.subr.mxu0 0.0
      %4535 = vmatpush2.msra.mxu0 0.0
      %4536 = vmatprep.subr.mxu0 0.0
      %4537 = vmatpush2.msra.mxu0 0.0
      %4538 = vmatprep.subr.mxu0 0.0
      %4539 = vmatpush2.msra.mxu0 0.0
      %4540 = vmatprep.mubr.f32.mxu0 0.0
      %4541 = vmatmul.mubr.f32.gmra.mxu0 %v4471
      %v4542 = vpop.f32.mrf.mxu0
      %v4543 = vadd.f32 0.0, %v4542
      %v4544 = vpop.f32.mrf.mxu0
      %4545 = vmatprep.mubr.f32.mxu0 0.0
      %4546 = vmatmul.mubr.f32.gmra.mxu0 %v4474
      %v4547 = vpop.f32.mrf.mxu0
      %v4548 = vadd.f32 0.0, %v4547
      %v4549 = vpop.f32.mrf.mxu0
      %4550 = vdwg.mxu0
      %4551 = vrot.lane.b32.xlu0 %v3002, 40
      %v4552 = vpop.permute.xlu0 %4551
      %4553 = vrot.lane.b32.xlu0 %v3007, 40
      %v4554 = vpop.permute.xlu0 %4553
      %v4558 = vsel %vm869, %v4462, 0
      %v4561 = vsel %vm869, %v4463, 0
      %4563 = vmatprep.subr.mxu0 0.0
      %4564 = vmatpush1.msra.mxu0 0.0
      %4565 = vmatprep.subr.mxu0 0.0
      %4566 = vmatpush1.msra.mxu0 0.0
      %4567 = vmatprep.subr.mxu0 0.0
      %4568 = vmatpush1.msra.mxu0 0.0
      %4569 = vmatprep.subr.mxu0 0.0
      %4570 = vmatpush1.msra.mxu0 0.0
      %4571 = vmatprep.subr.mxu0 0.0
      %4572 = vmatpush1.msra.mxu0 0.0
      %4573 = vmatprep.subr.mxu0 0.0
      %4574 = vmatpush1.msra.mxu0 0.0
      %4575 = vmatprep.subr.mxu0 0.0
      %4576 = vmatpush1.msra.mxu0 0.0
      %4577 = vmatprep.subr.mxu0 0.0
      %4578 = vmatpush1.msra.mxu0 0.0
      %4579 = vmatprep.subr.mxu0 0.0
      %4580 = vmatpush1.msra.mxu0 0.0
      %4581 = vmatprep.subr.mxu0 0.0
      %4582 = vmatpush1.msra.mxu0 0.0
      %4583 = vmatprep.subr.mxu0 0.0
      %4584 = vmatpush1.msra.mxu0 0.0
      %4585 = vmatprep.subr.mxu0 0.0
      %4586 = vmatpush1.msra.mxu0 0.0
      %4587 = vmatprep.subr.mxu0 0.0
      %4588 = vmatpush1.msra.mxu0 0.0
      %4589 = vmatprep.subr.mxu0 0.0
      %4590 = vmatpush1.msra.mxu0 0.0
      %4591 = vmatprep.subr.mxu0 0.0
      %4592 = vmatpush1.msra.mxu0 %v4554
      %4593 = vmatprep.subr.mxu0 0.0
      %4594 = vmatpush1.msra.mxu0 %v4552
      %4595 = vmatprep.subr.mxu0 0.0
      %4596 = vmatpush2.msra.mxu0 0.0
      %4597 = vmatprep.subr.mxu0 0.0
      %4598 = vmatpush2.msra.mxu0 0.0
      %4599 = vmatprep.subr.mxu0 0.0
      %4600 = vmatpush2.msra.mxu0 0.0
      %4601 = vmatprep.subr.mxu0 0.0
      %4602 = vmatpush2.msra.mxu0 0.0
      %4603 = vmatprep.subr.mxu0 0.0
      %4604 = vmatpush2.msra.mxu0 0.0
      %4605 = vmatprep.subr.mxu0 0.0
      %4606 = vmatpush2.msra.mxu0 0.0
      %4607 = vmatprep.subr.mxu0 0.0
      %4608 = vmatpush2.msra.mxu0 0.0
      %4609 = vmatprep.subr.mxu0 0.0
      %4610 = vmatpush2.msra.mxu0 0.0
      %4611 = vmatprep.subr.mxu0 0.0
      %4612 = vmatpush2.msra.mxu0 0.0
      %4613 = vmatprep.subr.mxu0 0.0
      %4614 = vmatpush2.msra.mxu0 0.0
      %4615 = vmatprep.subr.mxu0 0.0
      %4616 = vmatpush2.msra.mxu0 0.0
      %4617 = vmatprep.subr.mxu0 0.0
      %4618 = vmatpush2.msra.mxu0 0.0
      %4619 = vmatprep.subr.mxu0 0.0
      %4620 = vmatpush2.msra.mxu0 0.0
      %4621 = vmatprep.subr.mxu0 0.0
      %4622 = vmatpush2.msra.mxu0 0.0
      %4623 = vmatprep.subr.mxu0 0.0
      %4624 = vmatpush2.msra.mxu0 0.0
      %4625 = vmatprep.subr.mxu0 0.0
      %4626 = vmatpush2.msra.mxu0 0.0
      %4627 = vmatprep.mubr.f32.mxu0 0.0
      %4628 = vmatmul.mubr.f32.gmra.mxu0 %v4558
      %v4629 = vpop.f32.mrf.mxu0
      %v4630 = vadd.f32 0.0, %v4629
      %v4631 = vpop.f32.mrf.mxu0
      %4632 = vmatprep.mubr.f32.mxu0 0.0
      %4633 = vmatmul.mubr.f32.gmra.mxu0 %v4561
      %v4634 = vpop.f32.mrf.mxu0
      %v4635 = vadd.f32 0.0, %v4634
      %v4636 = vpop.f32.mrf.mxu0
      %4637 = vdwg.mxu0
      %4642 = vrot.lane.b32.xlu0 %v3727, 8
      %v4643 = vpop.permute.xlu0 %4642
      %4644 = vrot.lane.b32.xlu0 %v3732, 8
      %v4645 = vpop.permute.xlu0 %4644
      %4646 = vrot.lane.b32.xlu0 %v3814, 8
      %v4647 = vpop.permute.xlu0 %4646
      %4648 = vrot.lane.b32.xlu0 %v3819, 8
      %v4649 = vpop.permute.xlu0 %4648
      %4658 = vrot.lane.b32.xlu0 %v4135, 16
      %v4659 = vpop.permute.xlu0 %4658
      %4660 = vrot.lane.b32.xlu0 %v4140, 16
      %v4661 = vpop.permute.xlu0 %4660
      %4662 = vrot.lane.b32.xlu0 %v4222, 16
      %v4663 = vpop.permute.xlu0 %4662
      %4664 = vrot.lane.b32.xlu0 %v4227, 16
      %v4665 = vpop.permute.xlu0 %4664
      %4674 = vrot.lane.b32.xlu0 %v4543, 24
      %v4675 = vpop.permute.xlu0 %4674
      %4676 = vrot.lane.b32.xlu0 %v4548, 24
      %v4677 = vpop.permute.xlu0 %4676
      %4678 = vrot.lane.b32.xlu0 %v4630, 24
      %v4679 = vpop.permute.xlu0 %4678
      %4680 = vrot.lane.b32.xlu0 %v4635, 24
      %v4681 = vpop.permute.xlu0 %4680
      %v4686 = vsel %vm676, %v3319, %v4643
      %v4687 = vsel %vm676, %v3324, %v4645
      %v4688 = vsel %vm676, %v3406, %v4647
      %v4689 = vsel %vm676, %v3411, %v4649
      %v4690 = vsel %vm869, %v4686, %v4659
      %v4691 = vsel %vm869, %v4687, %v4661
      %v4692 = vsel %vm869, %v4688, %v4663
      %v4693 = vsel %vm869, %v4689, %v4665
      %v4694 = vsel %vm2368, %v4690, %v4675
      %v4695 = vsel %vm2368, %v4691, %v4677
      %v4696 = vsel %vm2368, %v4692, %v4679
      %v4697 = vsel %vm2368, %v4693, %v4681
      %s4698 = scalar_lea.vmem %s456, 32
      %v4699 = vld [vmem:[%s4698] sm:$0xff]
      %v4700 = vld [vmem:[%s4698 + $0x8] sm:$0xff]
      %v4701 = vld [vmem:[%s4698 + $0x10] sm:$0xff]
      %v4702 = vld [vmem:[%s4698 + $0x18] sm:$0xff]
      %s4703 = scalar_lea.vmem %s474, 8
      %v4704 = vld [vmem:[%s4703] sm:$0x1]
      %v4706 = vlaneseq
      %v4707 = vshrl.u32 %v4706, 7
      %v4708 = vsub.s32 0, %v4707
      %v4709 = vrot.slane %v4704, %v4708
      %v4712 = vsel %vm486, %v4694, 0
      %v4715 = vsel %vm486, %v4695, 0
      %v4718 = vsel %vm486, %v4696, 0
      %v4721 = vsel %vm486, %v4697, 0
      %4723 = vmatprep.subr.mxu0 0.0
      %4724 = vmatpush1.msra.mxu0 0.0
      %4725 = vmatprep.subr.mxu0 0.0
      %4726 = vmatpush1.msra.mxu0 0.0
      %4727 = vmatprep.subr.mxu0 0.0
      %4728 = vmatpush1.msra.mxu0 0.0
      %4729 = vmatprep.subr.mxu0 0.0
      %4730 = vmatpush1.msra.mxu0 0.0
      %4731 = vmatprep.subr.mxu0 0.0
      %4732 = vmatpush1.msra.mxu0 0.0
      %4733 = vmatprep.subr.mxu0 0.0
      %4734 = vmatpush1.msra.mxu0 0.0
      %4735 = vmatprep.subr.mxu0 0.0
      %4736 = vmatpush1.msra.mxu0 0.0
      %4737 = vmatprep.subr.mxu0 0.0
      %4738 = vmatpush1.msra.mxu0 0.0
      %4739 = vmatprep.subr.mxu0 0.0
      %4740 = vmatpush1.msra.mxu0 0.0
      %4741 = vmatprep.subr.mxu0 0.0
      %4742 = vmatpush1.msra.mxu0 0.0
      %4743 = vmatprep.subr.mxu0 0.0
      %4744 = vmatpush1.msra.mxu0 0.0
      %4745 = vmatprep.subr.mxu0 0.0
      %4746 = vmatpush1.msra.mxu0 0.0
      %4747 = vmatprep.subr.mxu0 0.0
      %4748 = vmatpush1.msra.mxu0 %v4702
      %4749 = vmatprep.subr.mxu0 0.0
      %4750 = vmatpush1.msra.mxu0 %v4701
      %4751 = vmatprep.subr.mxu0 0.0
      %4752 = vmatpush1.msra.mxu0 %v4700
      %4753 = vmatprep.subr.mxu0 0.0
      %4754 = vmatpush1.msra.mxu0 %v4699
      %4755 = vmatprep.subr.mxu0 0.0
      %4756 = vmatpush2.msra.mxu0 0.0
      %4757 = vmatprep.subr.mxu0 0.0
      %4758 = vmatpush2.msra.mxu0 0.0
      %4759 = vmatprep.subr.mxu0 0.0
      %4760 = vmatpush2.msra.mxu0 0.0
      %4761 = vmatprep.subr.mxu0 0.0
      %4762 = vmatpush2.msra.mxu0 0.0
      %4763 = vmatprep.subr.mxu0 0.0
      %4764 = vmatpush2.msra.mxu0 0.0
      %4765 = vmatprep.subr.mxu0 0.0
      %4766 = vmatpush2.msra.mxu0 0.0
      %4767 = vmatprep.subr.mxu0 0.0
      %4768 = vmatpush2.msra.mxu0 0.0
      %4769 = vmatprep.subr.mxu0 0.0
      %4770 = vmatpush2.msra.mxu0 0.0
      %4771 = vmatprep.subr.mxu0 0.0
      %4772 = vmatpush2.msra.mxu0 0.0
      %4773 = vmatprep.subr.mxu0 0.0
      %4774 = vmatpush2.msra.mxu0 0.0
      %4775 = vmatprep.subr.mxu0 0.0
      %4776 = vmatpush2.msra.mxu0 0.0
      %4777 = vmatprep.subr.mxu0 0.0
      %4778 = vmatpush2.msra.mxu0 0.0
      %4779 = vmatprep.subr.mxu0 0.0
      %4780 = vmatpush2.msra.mxu0 0.0
      %4781 = vmatprep.subr.mxu0 0.0
      %4782 = vmatpush2.msra.mxu0 0.0
      %4783 = vmatprep.subr.mxu0 0.0
      %4784 = vmatpush2.msra.mxu0 0.0
      %4785 = vmatprep.subr.mxu0 0.0
      %4786 = vmatpush2.msra.mxu0 0.0
      %4787 = vmatprep.mubr.f32.mxu0 0.0
      %4788 = vmatmul.mubr.f32.gmra.mxu0 %v4712
      %v4789 = vpop.f32.mrf.mxu0
      %v4790 = vadd.f32 %v4709, %v4789
      %v4791 = vpop.f32.mrf.mxu0
      %4792 = vmatprep.mubr.f32.mxu0 0.0
      %4793 = vmatmul.mubr.f32.gmra.mxu0 %v4715
      %v4794 = vpop.f32.mrf.mxu0
      %v4795 = vadd.f32 %v4709, %v4794
      %v4796 = vpop.f32.mrf.mxu0
      %4797 = vmatprep.mubr.f32.mxu0 0.0
      %4798 = vmatmul.mubr.f32.gmra.mxu0 %v4718
      %v4799 = vpop.f32.mrf.mxu0
      %v4800 = vadd.f32 %v4709, %v4799
      %v4801 = vpop.f32.mrf.mxu0
      %4802 = vmatprep.mubr.f32.mxu0 0.0
      %4803 = vmatmul.mubr.f32.gmra.mxu0 %v4721
      %v4804 = vpop.f32.mrf.mxu0
      %v4805 = vadd.f32 %v4709, %v4804
      %v4806 = vpop.f32.mrf.mxu0
      %4807 = vdwg.mxu0
      %v4808 = vadd.f32 %v2896, %v4790
      %v4809 = vadd.f32 %v2897, %v4795
      %v4810 = vadd.f32 %v2898, %v4800
      %v4811 = vadd.f32 %v2899, %v4805
      %s4812 = scalar_lea.vmem %s474, 9
      %v4813 = vld [vmem:[%s4812] sm:$0x1]
      %s4814 = scalar_lea.vmem %s474, 10
      %v4815 = vld [vmem:[%s4814] sm:$0x1]
      %v4816 = vsel %vm486, %v4808, 0.0
      %4817 = vadd.xlane.f32.xlu0 %v4816
      %v4818 = vpop.xlane.xlu0 %4817
      %v4819 = vsel %vm486, %v4809, 0.0
      %4820 = vadd.xlane.f32.xlu0 %v4819
      %v4821 = vpop.xlane.xlu0 %4820
      %v4822 = vsel %vm486, %v4810, 0.0
      %4823 = vadd.xlane.f32.xlu0 %v4822
      %v4824 = vpop.xlane.xlu0 %4823
      %v4825 = vsel %vm486, %v4811, 0.0
      %4826 = vadd.xlane.f32.xlu0 %v4825
      %v4827 = vpop.xlane.xlu0 %4826
      %v4828 = vmul.f32 %v4818, %v499
      %v4829 = vmul.f32 %v4821, %v499
      %v4830 = vmul.f32 %v4824, %v499
      %v4831 = vmul.f32 %v4827, %v499
      %v4832 = vsub.f32 %v4808, %v4828
      %v4833 = vsub.f32 %v4809, %v4829
      %v4834 = vsub.f32 %v4810, %v4830
      %v4835 = vsub.f32 %v4811, %v4831
      %v4836 = vmul.f32 %v4832, %v4832
      %v4837 = vmul.f32 %v4833, %v4833
      %v4838 = vmul.f32 %v4834, %v4834
      %v4839 = vmul.f32 %v4835, %v4835
      %v4840 = vsel %vm486, %v4836, 0.0
      %4841 = vadd.xlane.f32.xlu0 %v4840
      %v4842 = vpop.xlane.xlu0 %4841
      %v4843 = vsel %vm486, %v4837, 0.0
      %4844 = vadd.xlane.f32.xlu0 %v4843
      %v4845 = vpop.xlane.xlu0 %4844
      %v4846 = vsel %vm486, %v4838, 0.0
      %4847 = vadd.xlane.f32.xlu0 %v4846
      %v4848 = vpop.xlane.xlu0 %4847
      %v4849 = vsel %vm486, %v4839, 0.0
      %4850 = vadd.xlane.f32.xlu0 %v4849
      %v4851 = vpop.xlane.xlu0 %4850
      %v4852 = vmul.f32 %v4842, %v499
      %v4853 = vmul.f32 %v4845, %v499
      %v4854 = vmul.f32 %v4848, %v499
      %v4855 = vmul.f32 %v4851, %v499
      %v4856 = vadd.f32 %v4852, 1e-12
      %v4857 = vadd.f32 %v4853, 1e-12
      %v4858 = vadd.f32 %v4854, 1e-12
      %v4859 = vadd.f32 %v4855, 1e-12
      %v4860 = vrsqrt.pop %v4856
      %v4861 = vrsqrt.pop %v4857
      %v4862 = vrsqrt.pop %v4858
      %v4863 = vrsqrt.pop %v4859
      %v4864 = vmul.f32 %v4832, %v4860
      %v4865 = vmul.f32 %v4833, %v4861
      %v4866 = vmul.f32 %v4834, %v4862
      %v4867 = vmul.f32 %v4835, %v4863
      %v4869 = vlaneseq
      %v4870 = vshrl.u32 %v4869, 7
      %v4871 = vsub.s32 0, %v4870
      %v4872 = vrot.slane %v4813, %v4871
      %v4874 = vmul.f32 %v4864, %v4872
      %v4875 = vmul.f32 %v4865, %v4872
      %v4876 = vmul.f32 %v4866, %v4872
      %v4877 = vmul.f32 %v4867, %v4872
      %v4879 = vlaneseq
      %v4880 = vshrl.u32 %v4879, 7
      %v4881 = vsub.s32 0, %v4880
      %v4882 = vrot.slane %v4815, %v4881
      %v4884 = vadd.f32 %v4874, %v4882
      %v4885 = vadd.f32 %v4875, %v4882
      %v4886 = vadd.f32 %v4876, %v4882
      %v4887 = vadd.f32 %v4877, %v4882
      %s4888 = scalar_lea.vmem %s461, 32
      %v4889 = vld [vmem:[%s4888] sm:$0xff]
      %v4890 = vld [vmem:[%s4888 + $0x8] sm:$0xff]
      %v4891 = vld [vmem:[%s4888 + $0x10] sm:$0xff]
      %v4892 = vld [vmem:[%s4888 + $0x18] sm:$0xff]
      %s4893 = scalar_lea.vmem %s470, 1
      %v4894 = vld [vmem:[%s4893] sm:$0x1]
      %v4896 = vlaneseq
      %v4897 = vshrl.u32 %v4896, 7
      %v4898 = vsub.s32 0, %v4897
      %v4899 = vrot.slane %v4894, %v4898
      %v4902 = vsel %vm486, %v4884, 0
      %v4905 = vsel %vm486, %v4885, 0
      %v4908 = vsel %vm486, %v4886, 0
      %v4911 = vsel %vm486, %v4887, 0
      %4913 = vmatprep.subr.mxu0 0.0
      %4914 = vmatpush1.msra.mxu0 0.0
      %4915 = vmatprep.subr.mxu0 0.0
      %4916 = vmatpush1.msra.mxu0 0.0
      %4917 = vmatprep.subr.mxu0 0.0
      %4918 = vmatpush1.msra.mxu0 0.0
      %4919 = vmatprep.subr.mxu0 0.0
      %4920 = vmatpush1.msra.mxu0 0.0
      %4921 = vmatprep.subr.mxu0 0.0
      %4922 = vmatpush1.msra.mxu0 0.0
      %4923 = vmatprep.subr.mxu0 0.0
      %4924 = vmatpush1.msra.mxu0 0.0
      %4925 = vmatprep.subr.mxu0 0.0
      %4926 = vmatpush1.msra.mxu0 0.0
      %4927 = vmatprep.subr.mxu0 0.0
      %4928 = vmatpush1.msra.mxu0 0.0
      %4929 = vmatprep.subr.mxu0 0.0
      %4930 = vmatpush1.msra.mxu0 0.0
      %4931 = vmatprep.subr.mxu0 0.0
      %4932 = vmatpush1.msra.mxu0 0.0
      %4933 = vmatprep.subr.mxu0 0.0
      %4934 = vmatpush1.msra.mxu0 0.0
      %4935 = vmatprep.subr.mxu0 0.0
      %4936 = vmatpush1.msra.mxu0 0.0
      %4937 = vmatprep.subr.mxu0 0.0
      %4938 = vmatpush1.msra.mxu0 %v4892
      %4939 = vmatprep.subr.mxu0 0.0
      %4940 = vmatpush1.msra.mxu0 %v4891
      %4941 = vmatprep.subr.mxu0 0.0
      %4942 = vmatpush1.msra.mxu0 %v4890
      %4943 = vmatprep.subr.mxu0 0.0
      %4944 = vmatpush1.msra.mxu0 %v4889
      %4945 = vmatprep.subr.mxu0 0.0
      %4946 = vmatpush2.msra.mxu0 0.0
      %4947 = vmatprep.subr.mxu0 0.0
      %4948 = vmatpush2.msra.mxu0 0.0
      %4949 = vmatprep.subr.mxu0 0.0
      %4950 = vmatpush2.msra.mxu0 0.0
      %4951 = vmatprep.subr.mxu0 0.0
      %4952 = vmatpush2.msra.mxu0 0.0
      %4953 = vmatprep.subr.mxu0 0.0
      %4954 = vmatpush2.msra.mxu0 0.0
      %4955 = vmatprep.subr.mxu0 0.0
      %4956 = vmatpush2.msra.mxu0 0.0
      %4957 = vmatprep.subr.mxu0 0.0
      %4958 = vmatpush2.msra.mxu0 0.0
      %4959 = vmatprep.subr.mxu0 0.0
      %4960 = vmatpush2.msra.mxu0 0.0
      %4961 = vmatprep.subr.mxu0 0.0
      %4962 = vmatpush2.msra.mxu0 0.0
      %4963 = vmatprep.subr.mxu0 0.0
      %4964 = vmatpush2.msra.mxu0 0.0
      %4965 = vmatprep.subr.mxu0 0.0
      %4966 = vmatpush2.msra.mxu0 0.0
      %4967 = vmatprep.subr.mxu0 0.0
      %4968 = vmatpush2.msra.mxu0 0.0
      %4969 = vmatprep.subr.mxu0 0.0
      %4970 = vmatpush2.msra.mxu0 0.0
      %4971 = vmatprep.subr.mxu0 0.0
      %4972 = vmatpush2.msra.mxu0 0.0
      %4973 = vmatprep.subr.mxu0 0.0
      %4974 = vmatpush2.msra.mxu0 0.0
      %4975 = vmatprep.subr.mxu0 0.0
      %4976 = vmatpush2.msra.mxu0 0.0
      %4977 = vmatprep.mubr.f32.mxu0 0.0
      %4978 = vmatmul.mubr.f32.gmra.mxu0 %v4902
      %v4979 = vpop.f32.mrf.mxu0
      %v4980 = vadd.f32 %v4899, %v4979
      %v4981 = vpop.f32.mrf.mxu0
      %4982 = vmatprep.mubr.f32.mxu0 0.0
      %4983 = vmatmul.mubr.f32.gmra.mxu0 %v4905
      %v4984 = vpop.f32.mrf.mxu0
      %v4985 = vadd.f32 %v4899, %v4984
      %v4986 = vpop.f32.mrf.mxu0
      %4987 = vmatprep.mubr.f32.mxu0 0.0
      %4988 = vmatmul.mubr.f32.gmra.mxu0 %v4908
      %v4989 = vpop.f32.mrf.mxu0
      %v4990 = vadd.f32 %v4899, %v4989
      %v4991 = vpop.f32.mrf.mxu0
      %4992 = vmatprep.mubr.f32.mxu0 0.0
      %4993 = vmatmul.mubr.f32.gmra.mxu0 %v4911
      %v4994 = vpop.f32.mrf.mxu0
      %v4995 = vadd.f32 %v4899, %v4994
      %v4996 = vpop.f32.mrf.mxu0
      %4997 = vdwg.mxu0
      %v4998 = vmul.f32 %v4980, %v4980
      %v4999 = vmul.f32 %v4985, %v4985
      %v5000 = vmul.f32 %v4990, %v4990
      %v5001 = vmul.f32 %v4995, %v4995
      %v5002 = vmul.f32 %v4980, %v4998
      %v5003 = vmul.f32 %v4985, %v4999
      %v5004 = vmul.f32 %v4990, %v5000
      %v5005 = vmul.f32 %v4995, %v5001
      %v5006 = vmul.f32 %v5002, 0.044715
      %v5007 = vmul.f32 %v5003, 0.044715
      %v5008 = vmul.f32 %v5004, 0.044715
      %v5009 = vmul.f32 %v5005, 0.044715
      %v5010 = vadd.f32 %v4980, %v5006
      %v5011 = vadd.f32 %v4985, %v5007
      %v5012 = vadd.f32 %v4990, %v5008
      %v5013 = vadd.f32 %v4995, %v5009
      %v5014 = vmul.f32 %v5010, 0.7978846
      %v5015 = vmul.f32 %v5011, 0.7978846
      %v5016 = vmul.f32 %v5012, 0.7978846
      %v5017 = vmul.f32 %v5013, 0.7978846
      %v5018 = vtanh.pop %v5014
      %v5019 = vtanh.pop %v5015
      %v5020 = vtanh.pop %v5016
      %v5021 = vtanh.pop %v5017
      %v5022 = vadd.f32 %v5018, 1.0
      %v5023 = vadd.f32 %v5019, 1.0
      %v5024 = vadd.f32 %v5020, 1.0
      %v5025 = vadd.f32 %v5021, 1.0
      %v5026 = vmul.f32 %v5022, 0.5
      %v5027 = vmul.f32 %v5023, 0.5
      %v5028 = vmul.f32 %v5024, 0.5
      %v5029 = vmul.f32 %v5025, 0.5
      %v5030 = vmul.f32 %v4980, %v5026
      %v5031 = vmul.f32 %v4985, %v5027
      %v5032 = vmul.f32 %v4990, %v5028
      %v5033 = vmul.f32 %v4995, %v5029
      %s5034 = scalar_lea.vmem %s466, 64
      %v5035 = vld [vmem:[%s5034] sm:$0xff]
      %v5036 = vld [vmem:[%s5034 + $0x8] sm:$0xff]
      %v5037 = vld [vmem:[%s5034 + $0x10] sm:$0xff]
      %v5038 = vld [vmem:[%s5034 + $0x18] sm:$0xff]
      %v5039 = vld [vmem:[%s5034 + $0x20] sm:$0xff]
      %v5040 = vld [vmem:[%s5034 + $0x28] sm:$0xff]
      %v5041 = vld [vmem:[%s5034 + $0x30] sm:$0xff]
      %v5042 = vld [vmem:[%s5034 + $0x38] sm:$0xff]
      %s5043 = scalar_lea.vmem %s474, 11
      %v5044 = vld [vmem:[%s5043] sm:$0x1]
      %v5046 = vlaneseq
      %v5047 = vshrl.u32 %v5046, 7
      %v5048 = vsub.s32 0, %v5047
      %v5049 = vrot.slane %v5044, %v5048
      %v5052 = vsel %vm2722, %v5030, 0
      %v5055 = vsel %vm2722, %v5031, 0
      %v5058 = vsel %vm2722, %v5032, 0
      %v5061 = vsel %vm2722, %v5033, 0
      %5063 = vmatprep.subr.mxu0 0.0
      %5064 = vmatpush1.msra.mxu0 0.0
      %5065 = vmatprep.subr.mxu0 0.0
      %5066 = vmatpush1.msra.mxu0 0.0
      %5067 = vmatprep.subr.mxu0 0.0
      %5068 = vmatpush1.msra.mxu0 0.0
      %5069 = vmatprep.subr.mxu0 0.0
      %5070 = vmatpush1.msra.mxu0 0.0
      %5071 = vmatprep.subr.mxu0 0.0
      %5072 = vmatpush1.msra.mxu0 0.0
      %5073 = vmatprep.subr.mxu0 0.0
      %5074 = vmatpush1.msra.mxu0 0.0
      %5075 = vmatprep.subr.mxu0 0.0
      %5076 = vmatpush1.msra.mxu0 0.0
      %5077 = vmatprep.subr.mxu0 0.0
      %5078 = vmatpush1.msra.mxu0 0.0
      %5079 = vmatprep.subr.mxu0 0.0
      %5080 = vmatpush1.msra.mxu0 %v5042
      %5081 = vmatprep.subr.mxu0 0.0
      %5082 = vmatpush1.msra.mxu0 %v5041
      %5083 = vmatprep.subr.mxu0 0.0
      %5084 = vmatpush1.msra.mxu0 %v5040
      %5085 = vmatprep.subr.mxu0 0.0
      %5086 = vmatpush1.msra.mxu0 %v5039
      %5087 = vmatprep.subr.mxu0 0.0
      %5088 = vmatpush1.msra.mxu0 %v5038
      %5089 = vmatprep.subr.mxu0 0.0
      %5090 = vmatpush1.msra.mxu0 %v5037
      %5091 = vmatprep.subr.mxu0 0.0
      %5092 = vmatpush1.msra.mxu0 %v5036
      %5093 = vmatprep.subr.mxu0 0.0
      %5094 = vmatpush1.msra.mxu0 %v5035
      %5095 = vmatprep.subr.mxu0 0.0
      %5096 = vmatpush2.msra.mxu0 0.0
      %5097 = vmatprep.subr.mxu0 0.0
      %5098 = vmatpush2.msra.mxu0 0.0
      %5099 = vmatprep.subr.mxu0 0.0
      %5100 = vmatpush2.msra.mxu0 0.0
      %5101 = vmatprep.subr.mxu0 0.0
      %5102 = vmatpush2.msra.mxu0 0.0
      %5103 = vmatprep.subr.mxu0 0.0
      %5104 = vmatpush2.msra.mxu0 0.0
      %5105 = vmatprep.subr.mxu0 0.0
      %5106 = vmatpush2.msra.mxu0 0.0
      %5107 = vmatprep.subr.mxu0 0.0
      %5108 = vmatpush2.msra.mxu0 0.0
      %5109 = vmatprep.subr.mxu0 0.0
      %5110 = vmatpush2.msra.mxu0 0.0
      %5111 = vmatprep.subr.mxu0 0.0
      %5112 = vmatpush2.msra.mxu0 0.0
      %5113 = vmatprep.subr.mxu0 0.0
      %5114 = vmatpush2.msra.mxu0 0.0
      %5115 = vmatprep.subr.mxu0 0.0
      %5116 = vmatpush2.msra.mxu0 0.0
      %5117 = vmatprep.subr.mxu0 0.0
      %5118 = vmatpush2.msra.mxu0 0.0
      %5119 = vmatprep.subr.mxu0 0.0
      %5120 = vmatpush2.msra.mxu0 0.0
      %5121 = vmatprep.subr.mxu0 0.0
      %5122 = vmatpush2.msra.mxu0 0.0
      %5123 = vmatprep.subr.mxu0 0.0
      %5124 = vmatpush2.msra.mxu0 0.0
      %5125 = vmatprep.subr.mxu0 0.0
      %5126 = vmatpush2.msra.mxu0 0.0
      %5127 = vmatprep.mubr.f32.mxu0 0.0
      %5128 = vmatmul.mubr.f32.gmra.mxu0 %v5052
      %v5129 = vpop.f32.mrf.mxu0
      %v5130 = vadd.f32 %v5049, %v5129
      %v5131 = vpop.f32.mrf.mxu0
      %5132 = vmatprep.mubr.f32.mxu0 0.0
      %5133 = vmatmul.mubr.f32.gmra.mxu0 %v5055
      %v5134 = vpop.f32.mrf.mxu0
      %v5135 = vpop.f32.mrf.mxu0
      %5136 = vmatprep.mubr.f32.mxu0 0.0
      %5137 = vmatmul.mubr.f32.gmra.mxu0 %v5058
      %v5138 = vpop.f32.mrf.mxu0
      %v5139 = vadd.f32 %v5049, %v5138
      %v5140 = vpop.f32.mrf.mxu0
      %5141 = vmatprep.mubr.f32.mxu0 0.0
      %5142 = vmatmul.mubr.f32.gmra.mxu0 %v5061
      %v5143 = vpop.f32.mrf.mxu0
      %v5144 = vpop.f32.mrf.mxu0
      %5145 = vdwg.mxu0
      %v5146 = vadd.f32 %v4884, %v5130
      %v5147 = vadd.f32 %v4886, %v5139
      %s5148 = scalar_lea.vmem %s474, 12
      %v5149 = vld [vmem:[%s5148] sm:$0x1]
      %s5150 = scalar_lea.vmem %s474, 13
      %v5151 = vld [vmem:[%s5150] sm:$0x1]
      %v5152 = vsel %vm486, %v5146, 0.0
      %5153 = vadd.xlane.f32.xlu0 %v5152
      %v5154 = vpop.xlane.xlu0 %5153
      %v5155 = vsel %vm486, %v5147, 0.0
      %5156 = vadd.xlane.f32.xlu0 %v5155
      %v5157 = vpop.xlane.xlu0 %5156
      %v5158 = vmul.f32 %v5154, %v499
      %v5159 = vmul.f32 %v5157, %v499
      %v5160 = vsub.f32 %v5146, %v5158
      %v5161 = vsub.f32 %v5147, %v5159
      %v5162 = vmul.f32 %v5160, %v5160
      %v5163 = vmul.f32 %v5161, %v5161
      %v5164 = vsel %vm486, %v5162, 0.0
      %5165 = vadd.xlane.f32.xlu0 %v5164
      %v5166 = vpop.xlane.xlu0 %5165
      %v5167 = vsel %vm486, %v5163, 0.0
      %5168 = vadd.xlane.f32.xlu0 %v5167
      %v5169 = vpop.xlane.xlu0 %5168
      %v5170 = vmul.f32 %v5166, %v499
      %v5171 = vmul.f32 %v5169, %v499
      %v5172 = vadd.f32 %v5170, 1e-12
      %v5173 = vadd.f32 %v5171, 1e-12
      %v5174 = vrsqrt.pop %v5172
      %v5175 = vrsqrt.pop %v5173
      %v5176 = vmul.f32 %v5160, %v5174
      %v5177 = vmul.f32 %v5161, %v5175
      %v5179 = vlaneseq
      %v5180 = vshrl.u32 %v5179, 7
      %v5181 = vsub.s32 0, %v5180
      %v5182 = vrot.slane %v5149, %v5181
      %v5184 = vmul.f32 %v5176, %v5182
      %v5185 = vmul.f32 %v5177, %v5182
      %v5187 = vlaneseq
      %v5188 = vshrl.u32 %v5187, 7
      %v5189 = vsub.s32 0, %v5188
      %v5190 = vrot.slane %v5151, %v5189
      %v5192 = vadd.f32 %v5184, %v5190
      %v5193 = vadd.f32 %v5185, %v5190
      %v5196 = vrot.slane %v5193, 7
      %vm5197 = vcmask 1041409
      %v5198 = vsel %vm5197, %v5196, %v5192
      %vm5200 = vcmask 254976
      %5201 = vst.msk [vmem:[%s478] sm:$0x3] %vm5200, %v5198
      %p5202 = scmp.lt.s32.totalorder %s20, 1
      %s5203 = scalar_select %p5202, %s20, 1
      %s5204 = smul.addr %s5203, 2
      %s5205 = scalar_lea.vmem %s9, %s5204
      // Predicated region
      $region57: #{dpr_combined_forward.1} parent=55 // pred_check
        %p5206 = pneg %p272
      $region58: #{dpr_combined_forward.1} parent=55 // pred_check_branch
        %5208 = sbr.rel (%p5206) target = $region60
      $region59: #{dpr_combined_forward.1} parent=55 // pred_region
        _
      $region60: #{dpr_combined_forward.1} parent=55 // pred_fallthru
        _
    $region56: #{dpr_combined_forward.1} parent=5 // pred_fallthru
      _
    %p5209 = scmp.le.s32.totalorder 2, %s15
    // Predicated region
    $region61: #{dpr_combined_forward.1} parent=5 // pred_check
      %p5210 = pneg %p5209
    $region62: #{dpr_combined_forward.1} parent=5 // pred_check_branch
      %5212 = sbr.rel (%p5210) target = $region64
    $region63: #{dpr_combined_forward.1} parent=5 // pred_region
      %s5213 = ssub.s32 %s15, 2
      // Predicated region
      $region65: #{dpr_combined_forward.1} parent=63 // pred_check
        %p5214 = pneg %p278
      $region66: #{dpr_combined_forward.1} parent=63 // pred_check_branch
        %5216 = sbr.rel (%p5214) target = $region68
      $region67: #{dpr_combined_forward.1} parent=63 // pred_region
        %p5217 = scmp.lt.s32.totalorder %s21, 1
        %s5218 = scalar_select %p5217, %s21, 1
        %s5219 = smul.addr %s5218, 2
        %s5220 = scalar_lea.vmem %s9, %s5219
      $region68: #{dpr_combined_forward.1} parent=63 // pred_fallthru
        _
    $region64: #{dpr_combined_forward.1} parent=5 // pred_fallthru
      _
  $region6: #{dpr_combined_forward.1} parent=0 // loop_footer
    %s19 = sadd.s32 1, %s15
  $region7: #{dpr_combined_forward.1} parent=0 // loop_footer_branch
    %14 = sbr.rel target = $region3
  $region8: #{dpr_combined_forward.1} parent=0 // loop_exit
    _

</llo_original>
